<compile_context>
chip_gen: v5e
topology: v5e:2x2
jax: 0.10.0
libtpu: 0.0.40
codegen_flags: <defaults>
</compile_context>

<pallas_src>
import functools

import jax
import jax.numpy as jnp
from jax.experimental import pallas as pl
from jax.experimental.pallas import tpu as pltpu

# ----- problem sizes (from the module) -----
IN_FEAT = 245          # flattened ROI feature (5 x 7 x 7)
HIDDEN = 1024
NUM_CLS = 21
NUM_REG = 20 * 4       # 80

# ----- padded sizes for TPU lane alignment -----
IN_FEAT_PAD = 256      # 245 -> 256
CLS_PAD = 128          # 21  -> 128
REG_PAD = 128          # 80  -> 128
HEAD_PAD = CLS_PAD + REG_PAD  # fused cls|reg head width = 256

NEG_INF = -1e30
VMEM_LIMIT_BYTES = 32 * 1024 * 1024   # explicit scoped-VMEM budget (<= physical on all gens)


def _pick_tm(n):
    """Bucketed row-tile size (static jit arg => only a handful of compiles).

    Multiples of 16 (bf16 native (16,128) tile); capped so N > 128 produces at
    least 2 grid steps (megacore sharding on v7x).
    """
    if n <= 16:
        return 16
    if n <= 64:
        return 64
    if n <= 256:
        return 128
    if n <= 1024:
        return 256
    return 512


@functools.lru_cache(maxsize=1)
def _single_buffered_weights_supported():
    """Probe whether pl.Buffered(1) (single-buffered BlockSpec) lowers/runs here."""
    def _probe(x_ref, o_ref):
        o_ref[...] = x_ref[...] + 1.0

    try:
        out = pl.pallas_call(
            _probe,
            out_shape=jax.ShapeDtypeStruct((8, 128), jnp.float32),
            grid=(1,),
            in_specs=[pl.BlockSpec((8, 128), lambda i: (0, 0),
                                   pipeline_mode=pl.Buffered(1))],
            out_specs=pl.BlockSpec((8, 128), lambda i: (0, 0)),
        )(jnp.zeros((8, 128), jnp.float32))
        jax.block_until_ready(out)
        return True
    except Exception:
        return False


@functools.lru_cache(maxsize=1)
def _bf16_epilogue_ok():
    """Use a bf16 bias/ReLU epilogue only where the VPU is bf16-capable (v6e/v7x+)."""
    try:
        kind = jax.devices()[0].device_kind.lower()
    except Exception:
        return False
    return not any(g in kind for g in ("v2", "v3", "v4", "v5"))


def roi_head_kernel(x_ref, w1_ref, b1_ref, w2_ref, b2_ref, wh_ref, bh_ref,
                    out_ref, *, act_dtype):
    """One (TM, 256) tile of ROIs -> fused (TM, 256) [softmax(cls) | reg] tile."""
    # shared FC 1: 256 -> 1024 (bf16 MXU, f32 accumulate); epilogue in act_dtype
    h1 = jnp.dot(x_ref[...], w1_ref[...],
                 preferred_element_type=jnp.float32).astype(act_dtype)
    h1 = jnp.maximum(h1 + b1_ref[...].astype(act_dtype), 0).astype(jnp.bfloat16)

    # shared FC 2: 1024 -> 1024
    h2 = jnp.dot(h1, w2_ref[...],
                 preferred_element_type=jnp.float32).astype(act_dtype)
    h2 = jnp.maximum(h2 + b2_ref[...].astype(act_dtype), 0).astype(jnp.bfloat16)

    # fused head: one 256-wide MXU pass = [cls logits | reg].  Bias stays f32 so
    # the -1e30 padding on dead class lanes is exact (never cast to bf16).
    head = jnp.dot(h2, wh_ref[...],
                   preferred_element_type=jnp.float32) + bh_ref[...]   # (TM, 256) f32

    # softmax over the first 128 lanes (padded class logits carry -1e30 bias)
    logits = head[:, :CLS_PAD]
    m = jnp.max(logits, axis=-1, keepdims=True)
    e = jnp.exp(logits - m)
    s = jnp.sum(e, axis=-1, keepdims=True)
    # NOTE: approx reciprocal => class probabilities sum to 1 within ~1e-3.
    probs = e * pl.reciprocal(s, approx=True)

    # two lane-aligned 128-wide stores into the fused output tile
    out_ref[:, :CLS_PAD] = probs
    out_ref[:, CLS_PAD:] = head[:, CLS_PAD:]


def prepare_params(params):
    """One-time pad / cast / fuse of the Linear parameters (hoisted out of forward)."""
    (w1, b1, w2, b2, wc, bc, wr, br) = params

    w1p = jnp.pad(w1, ((0, IN_FEAT_PAD - IN_FEAT), (0, 0))).astype(jnp.bfloat16)
    w2p = w2.astype(jnp.bfloat16)

    wcp = jnp.pad(wc, ((0, 0), (0, CLS_PAD - NUM_CLS)))
    wrp = jnp.pad(wr, ((0, 0), (0, REG_PAD - NUM_REG)))
    whp = jnp.concatenate([wcp, wrp], axis=1).astype(jnp.bfloat16)   # (1024, 256)

    bcp = jnp.pad(bc, ((0, 0), (0, CLS_PAD - NUM_CLS)), constant_values=NEG_INF)
    brp = jnp.pad(br, ((0, 0), (0, REG_PAD - NUM_REG)))
    bhp = jnp.concatenate([bcp, brp], axis=1).astype(jnp.float32)    # (1, 256)

    return (w1p, b1.astype(jnp.float32), w2p, b2.astype(jnp.float32), whp, bhp)


@functools.partial(jax.jit,
                   static_argnames=("tm", "bf16_epilogue", "single_buffer_weights"))
def _roi_head_forward(x, prepared, tm, bf16_epilogue, single_buffer_weights):
    n = x.shape[0]
    x_flat = x.reshape(n, -1)
    assert x_flat.shape[1] == IN_FEAT

    n_pad = pl.cdiv(n, tm) * tm
    # cast to bf16 BEFORE padding (half the pad-pass bytes), then pad rows to a
    # tile multiple and features to 256 lanes
    x_pad = jnp.pad(x_flat.astype(jnp.bfloat16),
                    ((0, n_pad - n), (0, IN_FEAT_PAD - IN_FEAT)))

    (w1p, b1p, w2p, b2p, whp, bhp) = prepared
    act_dtype = jnp.bfloat16 if bf16_epilogue else jnp.float32

    const = lambda i: (0, 0)   # weights stay resident across grid steps
    if single_buffer_weights:
        # constant block index => the block never changes; a single VMEM buffer
        # halves resident weight footprint.
        def wspec(shape):
            return pl.BlockSpec(shape, const, pipeline_mode=pl.Buffered(1))
    else:
        def wspec(shape):
            return pl.BlockSpec(shape, const)

    grid = (n_pad // tm,)

    weight_bytes = ((w1p.size + w2p.size + whp.size) * 2
                    + (b1p.size + b2p.size + bhp.size) * 4)
    cost = pl.CostEstimate(
        flops=2 * n_pad * (IN_FEAT_PAD * HIDDEN + HIDDEN * HIDDEN + HIDDEN * HEAD_PAD),
        transcendentals=n_pad * (CLS_PAD + 1),
        bytes_accessed=n_pad * IN_FEAT_PAD * 2 + weight_bytes + n_pad * HEAD_PAD * 4,
    )

    out = pl.pallas_call(
        functools.partial(roi_head_kernel, act_dtype=act_dtype),
        out_shape=jax.ShapeDtypeStruct((n_pad, HEAD_PAD), jnp.float32),
        grid_spec=pltpu.PrefetchScalarGridSpec(
            num_scalar_prefetch=0,
            grid=grid,
            in_specs=[
                pl.BlockSpec((tm, IN_FEAT_PAD), lambda i: (i, 0)),   # x tile (double-buffered)
                wspec((IN_FEAT_PAD, HIDDEN)),                        # W1
                wspec((1, HIDDEN)),                                  # b1
                wspec((HIDDEN, HIDDEN)),                             # W2
                wspec((1, HIDDEN)),                                  # b2
                wspec((HIDDEN, HEAD_PAD)),                           # [Wc|Wr]
                wspec((1, HEAD_PAD)),                                # [bc|br]
            ],
            out_specs=pl.BlockSpec((tm, HEAD_PAD), lambda i: (i, 0)),
        ),
        compiler_params=pltpu.CompilerParams(
            dimension_semantics=("parallel",),
            vmem_limit_bytes=VMEM_LIMIT_BYTES,
        ),
        cost_estimate=cost,
    )(x_pad, w1p, b1p, w2p, b2p, whp, bhp)

    cls_score = out[:n, :NUM_CLS]
    bbox_pred = out[:n, CLS_PAD:CLS_PAD + NUM_REG]
    return cls_score, bbox_pred


def roi_head_forward(x, prepared):
    """x: (N, C, H, W) with C*H*W == 245, prepared = prepare_params(params)."""
    n = x.shape[0]
    return _roi_head_forward(
        x, prepared,
        tm=_pick_tm(n),
        bf16_epilogue=_bf16_epilogue_ok(),
        single_buffer_weights=_single_buffered_weights_supported(),
    )


def init_params(key):
    """Deterministic synthetic parameters matching the PyTorch Linear shapes."""
    ks = jax.random.split(key, 8)

    def lin(kw, kb, fan_in, fan_out):
        scale = 1.0 / jnp.sqrt(jnp.float32(fan_in))
        w = jax.random.uniform(kw, (fan_in, fan_out), jnp.float32, -scale, scale)
        b = jax.random.uniform(kb, (1, fan_out), jnp.float32, -scale, scale)
        return w, b

    w1, b1 = lin(ks[0], ks[1], IN_FEAT, HIDDEN)
    w2, b2 = lin(ks[2], ks[3], HIDDEN, HIDDEN)
    wc, bc = lin(ks[4], ks[5], HIDDEN, NUM_CLS)
    wr, br = lin(ks[6], ks[7], HIDDEN, NUM_REG)
    return (w1, b1, w2, b2, wc, bc, wr, br)


def reference_forward(x, params):
    """Plain-JAX f32 reference for sanity checking."""
    (w1, b1, w2, b2, wc, bc, wr, br) = params
    h = x.reshape(x.shape[0], -1).astype(jnp.float32)
    h = jnp.maximum(h @ w1 + b1, 0.0)
    h = jnp.maximum(h @ w2 + b2, 0.0)
    cls = jax.nn.softmax(h @ wc + bc, axis=-1)
    reg = h @ wr + br
    return cls, reg


if __name__ == "__main__":
    key = jax.random.PRNGKey(0)
    kparam, kx1, kx2 = jax.random.split(key, 3)

    params = init_params(kparam)
    prepared = prepare_params(params)          # one-time pad/cast/fuse

    # small-N case consistent with x.view(N, -1) -> (N, 245): N=8, (5, 7, 7) ROIs
    x_small = jax.random.normal(kx1, (8, 5, 7, 7), dtype=jnp.float32)
    cls_s, reg_s = jax.block_until_ready(roi_head_forward(x_small, prepared))

    cls_ref, reg_ref = reference_forward(x_small, params)
    assert cls_s.shape == (8, NUM_CLS) and reg_s.shape == (8, NUM_REG)
    assert jnp.allclose(cls_s, cls_ref, atol=1e-2, rtol=1e-2)
    assert jnp.allclose(reg_s, reg_ref, atol=5e-2, rtol=5e-2)

    # multi-tile case: exercises the bucketed row tile and a >=2-step grid
    x_big = jax.random.normal(kx2, (200, 5, 7, 7), dtype=jnp.float32)
    cls_b, reg_b = jax.block_until_ready(roi_head_forward(x_big, prepared))

    cls_ref_b, reg_ref_b = reference_forward(x_big, params)
    assert cls_b.shape == (200, NUM_CLS) and reg_b.shape == (200, NUM_REG)
    assert jnp.allclose(cls_b, cls_ref_b, atol=1e-2, rtol=1e-2)
    assert jnp.allclose(reg_b, reg_ref_b, atol=5e-2, rtol=5e-2)

    print("KERNEL_OK")
</pallas_src>

<mosaic_0001>
module attributes {stable_mosaic.version = 11 : i64} {
  func.func @_probe(%arg0: i32, %arg1: memref<8x128xf32, #tpu.memory_space<vmem>>, %arg2: memref<8x128xf32, #tpu.memory_space<vmem>>) attributes {dimension_semantics = [#tpu.dimension_semantics<arbitrary>], iteration_bounds = array<i64: 1>, scalar_prefetch = 0 : i64, scratch_operands = 0 : i64, tpu.core_type = #tpu.core_type<tc>, window_params = [{pipeline_mode = #tpu.pipeline_mode<synchronous>, transform_indices = @transform_0, window_bounds = array<i64: 8, 128>}, {pipeline_mode = #tpu.pipeline_mode<synchronous>, transform_indices = @transform_1, window_bounds = array<i64: 8, 128>}]} {
    %c0 = arith.constant 0 : index
    %c0_0 = arith.constant 0 : index
    %0 = vector.load %arg1[%c0, %c0_0] : memref<8x128xf32, #tpu.memory_space<vmem>>, vector<8x128xf32>
    %cst = arith.constant 1.000000e+00 : f32
    %1 = vector.broadcast %cst : f32 to vector<8x128xf32>
    %2 = arith.addf %0, %1 : vector<8x128xf32>
    %c0_1 = arith.constant 0 : index
    %c0_2 = arith.constant 0 : index
    %3 = vector.load %arg2[%c0_1, %c0_2] : memref<8x128xf32, #tpu.memory_space<vmem>>, vector<8x128xf32>
    tpu.vector_store %arg2[%c0_1, %c0_2], %2 {strides = array<i32>} : memref<8x128xf32, #tpu.memory_space<vmem>>, vector<8x128xf32>,
    return
  }
  func.func @transform_0(%arg0: i32) -> (i32, i32) {
    %c0_i32 = arith.constant 0 : i32
    %c0_i32_0 = arith.constant 0 : i32
    %c0_i32_1 = arith.constant 0 : i32
    return %c0_i32, %c0_i32_0 : i32, i32
  }
  func.func @transform_1(%arg0: i32) -> (i32, i32) {
    %c0_i32 = arith.constant 0 : i32
    %c0_i32_0 = arith.constant 0 : i32
    %c0_i32_1 = arith.constant 0 : i32
    return %c0_i32, %c0_i32_0 : i32, i32
  }
}

module attributes {stable_mosaic.version = 11 : i64} {
  func.func @roi_head_kernel(%arg0: i32, %arg1: memref<16x256xbf16, #tpu.memory_space<vmem>>, %arg2: memref<256x1024xbf16, #tpu.memory_space<vmem>>, %arg3: memref<1x1024xf32, #tpu.memory_space<vmem>>, %arg4: memref<1024x1024xbf16, #tpu.memory_space<vmem>>, %arg5: memref<1x1024xf32, #tpu.memory_space<vmem>>, %arg6: memref<1024x256xbf16, #tpu.memory_space<vmem>>, %arg7: memref<1x256xf32, #tpu.memory_space<vmem>>, %arg8: memref<16x256xf32, #tpu.memory_space<vmem>>) attributes {dimension_semantics = [#tpu.dimension_semantics<parallel>], iteration_bounds = array<i64: 1>, scalar_prefetch = 0 : i64, scratch_operands = 0 : i64, tpu.core_type = #tpu.core_type<tc>, window_params = [{transform_indices = @transform_0, window_bounds = array<i64: 16, 256>}, {pipeline_mode = #tpu.pipeline_mode<synchronous>, transform_indices = @transform_1, window_bounds = array<i64: 256, 1024>}, {pipeline_mode = #tpu.pipeline_mode<synchronous>, transform_indices = @transform_2, window_bounds = array<i64: 1, 1024>}, {pipeline_mode = #tpu.pipeline_mode<synchronous>, transform_indices = @transform_3, window_bounds = array<i64: 1024, 1024>}, {pipeline_mode = #tpu.pipeline_mode<synchronous>, transform_indices = @transform_4, window_bounds = array<i64: 1, 1024>}, {pipeline_mode = #tpu.pipeline_mode<synchronous>, transform_indices = @transform_5, window_bounds = array<i64: 1024, 256>}, {pipeline_mode = #tpu.pipeline_mode<synchronous>, transform_indices = @transform_6, window_bounds = array<i64: 1, 256>}, {transform_indices = @transform_7, window_bounds = array<i64: 16, 256>}]} {
    %c0 = arith.constant 0 : index
    %c0_0 = arith.constant 0 : index
    %0 = vector.load %arg1[%c0, %c0_0] : memref<16x256xbf16, #tpu.memory_space<vmem>>, vector<16x256xbf16>
    %c0_1 = arith.constant 0 : index
    %c0_2 = arith.constant 0 : index
    %1 = vector.load %arg2[%c0_1, %c0_2] : memref<256x1024xbf16, #tpu.memory_space<vmem>>, vector<256x1024xbf16>
    %cst = arith.constant dense<0.000000e+00> : vector<16x1024xf32>
    %2 = tpu.matmul %0, %1, %cst {dimension_numbers = #tpu.dot_dimension_numbers<[1], [0], [0], [1], [0, 0, 1, 1], [], []>} : vector<16x256xbf16>, vector<256x1024xbf16>, vector<16x1024xf32> -> vector<16x1024xf32>
    %3 = arith.truncf %2 : vector<16x1024xf32> to vector<16x1024xbf16>
    %c0_3 = arith.constant 0 : index
    %c0_4 = arith.constant 0 : index
    %4 = vector.load %arg3[%c0_3, %c0_4] : memref<1x1024xf32, #tpu.memory_space<vmem>>, vector<1x1024xf32>
    %5 = arith.truncf %4 : vector<1x1024xf32> to vector<1x1024xbf16>
    %6 = vector.broadcast %5 : vector<1x1024xbf16> to vector<16x1024xbf16>
    %7 = arith.addf %3, %6 : vector<16x1024xbf16>
    %cst_5 = arith.constant 0.000000e+00 : bf16
    %8 = vector.broadcast %cst_5 : bf16 to vector<16x1024xbf16>
    %9 = arith.maximumf %7, %8 : vector<16x1024xbf16>
    %c0_6 = arith.constant 0 : index
    %c0_7 = arith.constant 0 : index
    %10 = vector.load %arg4[%c0_6, %c0_7] : memref<1024x1024xbf16, #tpu.memory_space<vmem>>, vector<1024x1024xbf16>
    %cst_8 = arith.constant dense<0.000000e+00> : vector<16x1024xf32>
    %11 = tpu.matmul %9, %10, %cst_8 {dimension_numbers = #tpu.dot_dimension_numbers<[1], [0], [0], [1], [0, 0, 1, 1], [], []>} : vector<16x1024xbf16>, vector<1024x1024xbf16>, vector<16x1024xf32> -> vector<16x1024xf32>
    %12 = arith.truncf %11 : vector<16x1024xf32> to vector<16x1024xbf16>
    %c0_9 = arith.constant 0 : index
    %c0_10 = arith.constant 0 : index
    %13 = vector.load %arg5[%c0_9, %c0_10] : memref<1x1024xf32, #tpu.memory_space<vmem>>, vector<1x1024xf32>
    %14 = arith.truncf %13 : vector<1x1024xf32> to vector<1x1024xbf16>
    %15 = vector.broadcast %14 : vector<1x1024xbf16> to vector<16x1024xbf16>
    %16 = arith.addf %12, %15 : vector<16x1024xbf16>
    %cst_11 = arith.constant 0.000000e+00 : bf16
    %17 = vector.broadcast %cst_11 : bf16 to vector<16x1024xbf16>
    %18 = arith.maximumf %16, %17 : vector<16x1024xbf16>
    %c0_12 = arith.constant 0 : index
    %c0_13 = arith.constant 0 : index
    %19 = vector.load %arg6[%c0_12, %c0_13] : memref<1024x256xbf16, #tpu.memory_space<vmem>>, vector<1024x256xbf16>
    %cst_14 = arith.constant dense<0.000000e+00> : vector<16x256xf32>
    %20 = tpu.matmul %18, %19, %cst_14 {dimension_numbers = #tpu.dot_dimension_numbers<[1], [0], [0], [1], [0, 0, 1, 1], [], []>} : vector<16x1024xbf16>, vector<1024x256xbf16>, vector<16x256xf32> -> vector<16x256xf32>
    %c0_15 = arith.constant 0 : index
    %c0_16 = arith.constant 0 : index
    %21 = vector.load %arg7[%c0_15, %c0_16] : memref<1x256xf32, #tpu.memory_space<vmem>>, vector<1x256xf32>
    %22 = vector.broadcast %21 : vector<1x256xf32> to vector<16x256xf32>
    %23 = arith.addf %20, %22 : vector<16x256xf32>
    %24 = vector.extract_strided_slice %23 {offsets = [0, 0], sizes = [16, 128], strides = [1, 1]} : vector<16x256xf32> to vector<16x128xf32>
    %cst_17 = arith.constant dense<0xFF800000> : vector<16xf32>
    %25 = vector.multi_reduction <maximumf>, %24, %cst_17 [1] : vector<16x128xf32> to vector<16xf32>
    %26 = vector.shape_cast %25 : vector<16xf32> to vector<16x1xf32>
    %27 = vector.broadcast %26 : vector<16x1xf32> to vector<16x128xf32>
    %28 = arith.subf %24, %27 : vector<16x128xf32>
    %29 = math.exp %28 : vector<16x128xf32>
    %cst_18 = arith.constant dense<0.000000e+00> : vector<16xf32>
    %30 = vector.multi_reduction <add>, %29, %cst_18 [1] : vector<16x128xf32> to vector<16xf32>
    %31 = vector.shape_cast %30 : vector<16xf32> to vector<16x1xf32>
    %32 = tpu.reciprocal %31 {approx = true} : vector<16x1xf32> -> vector<16x1xf32>
    %33 = vector.broadcast %32 : vector<16x1xf32> to vector<16x128xf32>
    %34 = arith.mulf %29, %33 : vector<16x128xf32>
    %c0_19 = arith.constant 0 : index
    %c0_20 = arith.constant 0 : index
    %35 = vector.load %arg8[%c0_19, %c0_20] : memref<16x256xf32, #tpu.memory_space<vmem>>, vector<16x128xf32>
    tpu.vector_store %arg8[%c0_19, %c0_20], %34 {strides = array<i32>} : memref<16x256xf32, #tpu.memory_space<vmem>>, vector<16x128xf32>,
    %36 = vector.extract_strided_slice %23 {offsets = [0, 128], sizes = [16, 128], strides = [1, 1]} : vector<16x256xf32> to vector<16x128xf32>
    %c0_21 = arith.constant 0 : index
    %c128 = arith.constant 128 : index
    %37 = vector.load %arg8[%c0_21, %c128] : memref<16x256xf32, #tpu.memory_space<vmem>>, vector<16x128xf32>
    tpu.vector_store %arg8[%c0_21, %c128], %36 {strides = array<i32>} : memref<16x256xf32, #tpu.memory_space<vmem>>, vector<16x128xf32>,
    return
  }
  func.func @transform_0(%arg0: i32) -> (i32, i32) {
    %c0_i32 = arith.constant 0 : i32
    %c0_i32_0 = arith.constant 0 : i32
    return %arg0, %c0_i32 : i32, i32
  }
  func.func @transform_1(%arg0: i32) -> (i32, i32) {
    %c0_i32 = arith.constant 0 : i32
    %c0_i32_0 = arith.constant 0 : i32
    %c0_i32_1 = arith.constant 0 : i32
    return %c0_i32, %c0_i32_0 : i32, i32
  }
  func.func @transform_2(%arg0: i32) -> (i32, i32) {
    %c0_i32 = arith.constant 0 : i32
    %c0_i32_0 = arith.constant 0 : i32
    %c0_i32_1 = arith.constant 0 : i32
    return %c0_i32, %c0_i32_0 : i32, i32
  }
  func.func @transform_3(%arg0: i32) -> (i32, i32) {
    %c0_i32 = arith.constant 0 : i32
    %c0_i32_0 = arith.constant 0 : i32
    %c0_i32_1 = arith.constant 0 : i32
    return %c0_i32, %c0_i32_0 : i32, i32
  }
  func.func @transform_4(%arg0: i32) -> (i32, i32) {
    %c0_i32 = arith.constant 0 : i32
    %c0_i32_0 = arith.constant 0 : i32
    %c0_i32_1 = arith.constant 0 : i32
    return %c0_i32, %c0_i32_0 : i32, i32
  }
  func.func @transform_5(%arg0: i32) -> (i32, i32) {
    %c0_i32 = arith.constant 0 : i32
    %c0_i32_0 = arith.constant 0 : i32
    %c0_i32_1 = arith.constant 0 : i32
    return %c0_i32, %c0_i32_0 : i32, i32
  }
  func.func @transform_6(%arg0: i32) -> (i32, i32) {
    %c0_i32 = arith.constant 0 : i32
    %c0_i32_0 = arith.constant 0 : i32
    %c0_i32_1 = arith.constant 0 : i32
    return %c0_i32, %c0_i32_0 : i32, i32
  }
  func.func @transform_7(%arg0: i32) -> (i32, i32) {
    %c0_i32 = arith.constant 0 : i32
    %c0_i32_0 = arith.constant 0 : i32
    return %arg0, %c0_i32 : i32, i32
  }
}

</mosaic_0001>

<llo_original>
// kernel: tpu_custom_call.1
$region0: #{tpu_custom_call.1}
  #allocation0 [shape = 'u32[]', space=smem, size = 0x4, offset = 0x4, fixed_abs, tag = 'smem constant byte address 0x4 - core index']
  #allocation1 [shape = 'u32[72,128]{1,0:T(1,128)}', space=vmem, size = 0x9000, scoped, tag = 'internal scratch']
  %s0 = inlined_call_operand.hbm [shape: f32[8,128], index: 0, kind: input, shape index: {}]
  %s1 = inlined_call_operand.hbm [shape: f32[8,128], index: 1, kind: output, shape index: {}]
  %s2 = sld [smem:[#allocation0]]
  $region18: #{tpu_custom_call.1} parent=0
    _
  %s4 = ssub.s32 1, %s2
  %s5 = scalar_select 0, %s4, %s2
  $region1: #{tpu_custom_call.1} parent=0
    #allocation2 [shape = 'u8[4096]{0}', space=vmem, size = 0x1000, scoped, tag = 'input window, operand 0, single buffered']
    #allocation3 [shape = 's32[1]{0}', space=sflag, size = 0x4, scoped, tag = 'scoped memory for tpu_custom_call.1']
    #allocation4 [shape = 's32[1]{0}', space=sflag, size = 0x4, scoped, tag = 'scoped memory for tpu_custom_call.1']
    #allocation5 [shape = 'u8[4096]{0}', space=vmem, size = 0x1000, scoped, tag = 'output window, operand 0, single buffered']
    %6 = vsyncpa [#allocation3], 0
    %7 = vsyncpa [#allocation4], 0
    // Predicated region
    $region2: #{tpu_custom_call.1} parent=1 // pred_check
      _
    $region3: #{tpu_custom_call.1} parent=1 // pred_check_branch
      %9 = sbr.rel (0) target = $region5
    $region4: #{tpu_custom_call.1} parent=1 // pred_region
      %11 = vsyncadd [#allocation3], 0
      %s13 = sshll.u32 %s0, 4
      %s14 = int_to_ptr.hbm [resolvable:$true] %s13
      %s15 = sshll.u32 [#allocation2], 4
      %s16 = int_to_ptr.vmem [resolvable:$true] %s15
      %18 = dma.hbm_to_vmem [thread:$0]  %s14, 128, %s16, [#allocation3]
    $region5: #{tpu_custom_call.1} parent=1 // pred_fallthru
      _
    // Predicated region
    $region6: #{tpu_custom_call.1} parent=1 // pred_check
      _
    $region7: #{tpu_custom_call.1} parent=1 // pred_check_branch
      %20 = sbr.rel (0) target = $region9
    $region8: #{tpu_custom_call.1} parent=1 // pred_region
      %22 = dma.done [#allocation3], 128
    $region9: #{tpu_custom_call.1} parent=1 // pred_fallthru
      _
    %v23 = vld [vmem:[#allocation2] sm:$0xff]
    %v24 = vadd.f32 %v23, 1.0
    %25 = vst [vmem:[#allocation5] sm:$0xff] %v24
    // Predicated region
    $region10: #{tpu_custom_call.1} parent=1 // pred_check
      _
    $region11: #{tpu_custom_call.1} parent=1 // pred_check_branch
      %27 = sbr.rel (0) target = $region13
    $region12: #{tpu_custom_call.1} parent=1 // pred_region
      %29 = vsyncadd [#allocation4], 0
      %s31 = sshll.u32 [#allocation5], 4
      %s32 = int_to_ptr.vmem [resolvable:$true] %s31
      %s33 = sshll.u32 %s1, 4
      %s34 = int_to_ptr.hbm [resolvable:$true] %s33
      %36 = dma.vmem_to_hbm [thread:$0]  %s32, 128, %s34, [#allocation4]
    $region13: #{tpu_custom_call.1} parent=1 // pred_fallthru
      _
    // Predicated region
    $region14: #{tpu_custom_call.1} parent=1 // pred_check
      _
    $region15: #{tpu_custom_call.1} parent=1 // pred_check_branch
      %38 = sbr.rel (0) target = $region17
    $region16: #{tpu_custom_call.1} parent=1 // pred_region
      %40 = dma.done [#allocation4], 128
    $region17: #{tpu_custom_call.1} parent=1 // pred_fallthru
      _
    %41 = vsyncpa [#allocation3], 1
    %42 = vsyncpa [#allocation4], 1

// kernel: _roi_head_forward.1
$region0: #{_roi_head_forward.1}
  #allocation0 [shape = 'u32[]', space=smem, size = 0x4, offset = 0x4, fixed_abs, tag = 'smem constant byte address 0x4 - core index']
  #allocation1 [shape = 'u32[72,128]{1,0:T(1,128)}', space=vmem, size = 0x9000, scoped, tag = 'internal scratch']
  %s0 = inlined_call_operand.vmem [shape: bf16[16,256], index: 0, kind: input, shape index: {}]
  %s1 = inlined_call_operand.hbm [shape: bf16[256,1024], index: 1, kind: input, shape index: {}]
  %s2 = inlined_call_operand.hbm [shape: f32[1,1024], index: 2, kind: input, shape index: {}]
  %s3 = inlined_call_operand.hbm [shape: bf16[1024,1024], index: 3, kind: input, shape index: {}]
  %s4 = inlined_call_operand.hbm [shape: f32[1,1024], index: 4, kind: input, shape index: {}]
  %s5 = inlined_call_operand.hbm [shape: bf16[1024,256], index: 5, kind: input, shape index: {}]
  %s6 = inlined_call_operand.hbm [shape: f32[1,256], index: 6, kind: input, shape index: {}]
  %s7 = inlined_call_operand.vmem [shape: f32[16,256], index: 7, kind: output, shape index: {}]
  %s8 = sld [smem:[#allocation0]]
  $region62: #{_roi_head_forward.1} parent=0
    _
  %s10 = ssub.s32 1, %s8
  %s11 = scalar_select 0, %s10, %s8
  $region1: #{_roi_head_forward.1} parent=0
    #allocation2 [shape = 'u8[524288]{0}', space=vmem, size = 0x80000, scoped, tag = 'input window, operand 1, single buffered']
    #allocation3 [shape = 's32[1]{0}', space=sflag, size = 0x4, scoped, tag = 'scoped memory for _roi_head_forward.1']
    #allocation4 [shape = 'u8[4096]{0}', space=vmem, size = 0x1000, scoped, tag = 'input window, operand 2, single buffered']
    #allocation5 [shape = 's32[1]{0}', space=sflag, size = 0x4, scoped, tag = 'scoped memory for _roi_head_forward.1']
    #allocation6 [shape = 'u8[2097152]{0}', space=vmem, size = 0x200000, scoped, tag = 'input window, operand 3, single buffered']
    #allocation7 [shape = 'u8[4096]{0}', space=vmem, size = 0x1000, scoped, tag = 'input window, operand 4, single buffered']
    #allocation8 [shape = 's32[1]{0}', space=sflag, size = 0x4, scoped, tag = 'scoped memory for _roi_head_forward.1']
    #allocation9 [shape = 'u8[524288]{0}', space=vmem, size = 0x80000, scoped, tag = 'input window, operand 5, single buffered']
    #allocation10 [shape = 'u8[1024]{0}', space=vmem, size = 0x400, scoped, tag = 'input window, operand 6, single buffered']
    #allocation11 [shape = 's32[1]{0}', space=sflag, size = 0x4, scoped, tag = 'scoped memory for _roi_head_forward.1']
    %12 = vsyncpa [#allocation3], 0
    %13 = vsyncpa [#allocation5], 0
    %14 = vsyncpa [#allocation8], 0
    %15 = vsyncpa [#allocation11], 0
    // Predicated region
    $region2: #{_roi_head_forward.1} parent=1 // pred_check
      _
    $region3: #{_roi_head_forward.1} parent=1 // pred_check_branch
      %17 = sbr.rel (0) target = $region5
    $region4: #{_roi_head_forward.1} parent=1 // pred_region
      _
    $region5: #{_roi_head_forward.1} parent=1 // pred_fallthru
      _
    // Predicated region
    $region6: #{_roi_head_forward.1} parent=1 // pred_check
      _
    $region7: #{_roi_head_forward.1} parent=1 // pred_check_branch
      %19 = sbr.rel (0) target = $region9
    $region8: #{_roi_head_forward.1} parent=1 // pred_region
      %21 = vsyncadd [#allocation3], 0
      %s22 = sshll.u32 %s1, 4
      %s23 = int_to_ptr.hbm [resolvable:$true] %s22
      %s24 = sshll.u32 [#allocation2], 4
      %s25 = int_to_ptr.vmem [resolvable:$true] %s24
      %30 = dma.hbm_to_vmem [thread:$0]  %s23, 16384, %s25, [#allocation3], 512, 512, 32
    $region9: #{_roi_head_forward.1} parent=1 // pred_fallthru
      _
    // Predicated region
    $region10: #{_roi_head_forward.1} parent=1 // pred_check
      _
    $region11: #{_roi_head_forward.1} parent=1 // pred_check_branch
      %32 = sbr.rel (0) target = $region13
    $region12: #{_roi_head_forward.1} parent=1 // pred_region
      %34 = vsyncadd [#allocation5], 0
      %s36 = sshll.u32 %s2, 4
      %s37 = int_to_ptr.hbm [resolvable:$true] %s36
      %s38 = sshll.u32 [#allocation4], 4
      %s39 = int_to_ptr.vmem [resolvable:$true] %s38
      %41 = dma.hbm_to_vmem [thread:$0]  %s37, 128, %s39, [#allocation5]
    $region13: #{_roi_head_forward.1} parent=1 // pred_fallthru
      _
    // Predicated region
    $region14: #{_roi_head_forward.1} parent=1 // pred_check
      _
    $region15: #{_roi_head_forward.1} parent=1 // pred_check_branch
      %43 = sbr.rel (0) target = $region17
    $region16: #{_roi_head_forward.1} parent=1 // pred_region
      %45 = vsyncadd [#allocation5], 0
      %s46 = sshll.u32 %s3, 4
      %s47 = int_to_ptr.hbm [resolvable:$true] %s46
      %s48 = sshll.u32 [#allocation6], 4
      %s49 = int_to_ptr.vmem [resolvable:$true] %s48
      %54 = dma.hbm_to_vmem [thread:$0]  %s47, 65536, %s49, [#allocation5], 512, 512, 32
    $region17: #{_roi_head_forward.1} parent=1 // pred_fallthru
      _
    // Predicated region
    $region18: #{_roi_head_forward.1} parent=1 // pred_check
      _
    $region19: #{_roi_head_forward.1} parent=1 // pred_check_branch
      %56 = sbr.rel (0) target = $region21
    $region20: #{_roi_head_forward.1} parent=1 // pred_region
      %58 = vsyncadd [#allocation8], 0
      %s60 = sshll.u32 %s4, 4
      %s61 = int_to_ptr.hbm [resolvable:$true] %s60
      %s62 = sshll.u32 [#allocation7], 4
      %s63 = int_to_ptr.vmem [resolvable:$true] %s62
      %65 = dma.hbm_to_vmem [thread:$0]  %s61, 128, %s63, [#allocation8]
    $region21: #{_roi_head_forward.1} parent=1 // pred_fallthru
      _
    // Predicated region
    $region22: #{_roi_head_forward.1} parent=1 // pred_check
      _
    $region23: #{_roi_head_forward.1} parent=1 // pred_check_branch
      %67 = sbr.rel (0) target = $region25
    $region24: #{_roi_head_forward.1} parent=1 // pred_region
      %69 = vsyncadd [#allocation8], 0
      %s70 = sshll.u32 %s5, 4
      %s71 = int_to_ptr.hbm [resolvable:$true] %s70
      %s72 = sshll.u32 [#allocation9], 4
      %s73 = int_to_ptr.vmem [resolvable:$true] %s72
      %78 = dma.hbm_to_vmem [thread:$0]  %s71, 16384, %s73, [#allocation8], 128, 128, 8
    $region25: #{_roi_head_forward.1} parent=1 // pred_fallthru
      _
    // Predicated region
    $region26: #{_roi_head_forward.1} parent=1 // pred_check
      _
    $region27: #{_roi_head_forward.1} parent=1 // pred_check_branch
      %80 = sbr.rel (0) target = $region29
    $region28: #{_roi_head_forward.1} parent=1 // pred_region
      %82 = vsyncadd [#allocation11], 0
      %s84 = sshll.u32 %s6, 4
      %s85 = int_to_ptr.hbm [resolvable:$true] %s84
      %s86 = sshll.u32 [#allocation10], 4
      %s87 = int_to_ptr.vmem [resolvable:$true] %s86
      %89 = dma.hbm_to_vmem [thread:$0]  %s85, 32, %s87, [#allocation11]
    $region29: #{_roi_head_forward.1} parent=1 // pred_fallthru
      _
    // Predicated region
    $region30: #{_roi_head_forward.1} parent=1 // pred_check
      _
    $region31: #{_roi_head_forward.1} parent=1 // pred_check_branch
      %91 = sbr.rel (0) target = $region33
    $region32: #{_roi_head_forward.1} parent=1 // pred_region
      %93 = dma.done [#allocation3], 16384
    $region33: #{_roi_head_forward.1} parent=1 // pred_fallthru
      _
    // Predicated region
    $region34: #{_roi_head_forward.1} parent=1 // pred_check
      _
    $region35: #{_roi_head_forward.1} parent=1 // pred_check_branch
      %95 = sbr.rel (0) target = $region37
    $region36: #{_roi_head_forward.1} parent=1 // pred_region
      %97 = dma.done [#allocation5], 128
    $region37: #{_roi_head_forward.1} parent=1 // pred_fallthru
      _
    // Predicated region
    $region38: #{_roi_head_forward.1} parent=1 // pred_check
      _
    $region39: #{_roi_head_forward.1} parent=1 // pred_check_branch
      %99 = sbr.rel (0) target = $region41
    $region40: #{_roi_head_forward.1} parent=1 // pred_region
      %101 = dma.done [#allocation5], 65536
    $region41: #{_roi_head_forward.1} parent=1 // pred_fallthru
      _
    // Predicated region
    $region42: #{_roi_head_forward.1} parent=1 // pred_check
      _
    $region43: #{_roi_head_forward.1} parent=1 // pred_check_branch
      %103 = sbr.rel (0) target = $region45
    $region44: #{_roi_head_forward.1} parent=1 // pred_region
      %105 = dma.done [#allocation8], 128
    $region45: #{_roi_head_forward.1} parent=1 // pred_fallthru
      _
    // Predicated region
    $region46: #{_roi_head_forward.1} parent=1 // pred_check
      _
    $region47: #{_roi_head_forward.1} parent=1 // pred_check_branch
      %107 = sbr.rel (0) target = $region49
    $region48: #{_roi_head_forward.1} parent=1 // pred_region
      %109 = dma.done [#allocation8], 16384
    $region49: #{_roi_head_forward.1} parent=1 // pred_fallthru
      _
    // Predicated region
    $region50: #{_roi_head_forward.1} parent=1 // pred_check
      _
    $region51: #{_roi_head_forward.1} parent=1 // pred_check_branch
      %111 = sbr.rel (0) target = $region53
    $region52: #{_roi_head_forward.1} parent=1 // pred_region
      %113 = dma.done [#allocation11], 32
    $region53: #{_roi_head_forward.1} parent=1 // pred_fallthru
      _
    %v114 = vld [vmem:[%s0] sm:$0xff]
    %v115 = vld [vmem:[%s0 + $0x8] sm:$0xff]
    %v116 = vld [vmem:[#allocation2] sm:$0xff]
    %v117 = vld [vmem:[#allocation2 + $0x8] sm:$0xff]
    %v118 = vld [vmem:[#allocation2 + $0x10] sm:$0xff]
    %v119 = vld [vmem:[#allocation2 + $0x18] sm:$0xff]
    %v120 = vld [vmem:[#allocation2 + $0x20] sm:$0xff]
    %v121 = vld [vmem:[#allocation2 + $0x28] sm:$0xff]
    %v122 = vld [vmem:[#allocation2 + $0x30] sm:$0xff]
    %v123 = vld [vmem:[#allocation2 + $0x38] sm:$0xff]
    %v124 = vld [vmem:[#allocation2 + $0x40] sm:$0xff]
    %v125 = vld [vmem:[#allocation2 + $0x48] sm:$0xff]
    %v126 = vld [vmem:[#allocation2 + $0x50] sm:$0xff]
    %v127 = vld [vmem:[#allocation2 + $0x58] sm:$0xff]
    %v128 = vld [vmem:[#allocation2 + $0x60] sm:$0xff]
    %v129 = vld [vmem:[#allocation2 + $0x68] sm:$0xff]
    %v130 = vld [vmem:[#allocation2 + $0x70] sm:$0xff]
    %v131 = vld [vmem:[#allocation2 + $0x78] sm:$0xff]
    %v132 = vld [vmem:[#allocation2 + $0x80] sm:$0xff]
    %v133 = vld [vmem:[#allocation2 + $0x88] sm:$0xff]
    %v134 = vld [vmem:[#allocation2 + $0x90] sm:$0xff]
    %v135 = vld [vmem:[#allocation2 + $0x98] sm:$0xff]
    %v136 = vld [vmem:[#allocation2 + $0xa0] sm:$0xff]
    %v137 = vld [vmem:[#allocation2 + $0xa8] sm:$0xff]
    %v138 = vld [vmem:[#allocation2 + $0xb0] sm:$0xff]
    %v139 = vld [vmem:[#allocation2 + $0xb8] sm:$0xff]
    %v140 = vld [vmem:[#allocation2 + $0xc0] sm:$0xff]
    %v141 = vld [vmem:[#allocation2 + $0xc8] sm:$0xff]
    %v142 = vld [vmem:[#allocation2 + $0xd0] sm:$0xff]
    %v143 = vld [vmem:[#allocation2 + $0xd8] sm:$0xff]
    %v144 = vld [vmem:[#allocation2 + $0xe0] sm:$0xff]
    %v145 = vld [vmem:[#allocation2 + $0xe8] sm:$0xff]
    %v146 = vld [vmem:[#allocation2 + $0xf0] sm:$0xff]
    %v147 = vld [vmem:[#allocation2 + $0xf8] sm:$0xff]
    %v148 = vld [vmem:[#allocation2 + $0x100] sm:$0xff]
    %v149 = vld [vmem:[#allocation2 + $0x108] sm:$0xff]
    %v150 = vld [vmem:[#allocation2 + $0x110] sm:$0xff]
    %v151 = vld [vmem:[#allocation2 + $0x118] sm:$0xff]
    %v152 = vld [vmem:[#allocation2 + $0x120] sm:$0xff]
    %v153 = vld [vmem:[#allocation2 + $0x128] sm:$0xff]
    %v154 = vld [vmem:[#allocation2 + $0x130] sm:$0xff]
    %v155 = vld [vmem:[#allocation2 + $0x138] sm:$0xff]
    %v156 = vld [vmem:[#allocation2 + $0x140] sm:$0xff]
    %v157 = vld [vmem:[#allocation2 + $0x148] sm:$0xff]
    %v158 = vld [vmem:[#allocation2 + $0x150] sm:$0xff]
    %v159 = vld [vmem:[#allocation2 + $0x158] sm:$0xff]
    %v160 = vld [vmem:[#allocation2 + $0x160] sm:$0xff]
    %v161 = vld [vmem:[#allocation2 + $0x168] sm:$0xff]
    %v162 = vld [vmem:[#allocation2 + $0x170] sm:$0xff]
    %v163 = vld [vmem:[#allocation2 + $0x178] sm:$0xff]
    %v164 = vld [vmem:[#allocation2 + $0x180] sm:$0xff]
    %v165 = vld [vmem:[#allocation2 + $0x188] sm:$0xff]
    %v166 = vld [vmem:[#allocation2 + $0x190] sm:$0xff]
    %v167 = vld [vmem:[#allocation2 + $0x198] sm:$0xff]
    %v168 = vld [vmem:[#allocation2 + $0x1a0] sm:$0xff]
    %v169 = vld [vmem:[#allocation2 + $0x1a8] sm:$0xff]
    %v170 = vld [vmem:[#allocation2 + $0x1b0] sm:$0xff]
    %v171 = vld [vmem:[#allocation2 + $0x1b8] sm:$0xff]
    %v172 = vld [vmem:[#allocation2 + $0x1c0] sm:$0xff]
    %v173 = vld [vmem:[#allocation2 + $0x1c8] sm:$0xff]
    %v174 = vld [vmem:[#allocation2 + $0x1d0] sm:$0xff]
    %v175 = vld [vmem:[#allocation2 + $0x1d8] sm:$0xff]
    %v176 = vld [vmem:[#allocation2 + $0x1e0] sm:$0xff]
    %v177 = vld [vmem:[#allocation2 + $0x1e8] sm:$0xff]
    %v178 = vld [vmem:[#allocation2 + $0x1f0] sm:$0xff]
    %v179 = vld [vmem:[#allocation2 + $0x1f8] sm:$0xff]
    %v180 = vld [vmem:[#allocation2 + $0x200] sm:$0xff]
    %v181 = vld [vmem:[#allocation2 + $0x208] sm:$0xff]
    %v182 = vld [vmem:[#allocation2 + $0x210] sm:$0xff]
    %v183 = vld [vmem:[#allocation2 + $0x218] sm:$0xff]
    %v184 = vld [vmem:[#allocation2 + $0x220] sm:$0xff]
    %v185 = vld [vmem:[#allocation2 + $0x228] sm:$0xff]
    %v186 = vld [vmem:[#allocation2 + $0x230] sm:$0xff]
    %v187 = vld [vmem:[#allocation2 + $0x238] sm:$0xff]
    %v188 = vld [vmem:[#allocation2 + $0x240] sm:$0xff]
    %v189 = vld [vmem:[#allocation2 + $0x248] sm:$0xff]
    %v190 = vld [vmem:[#allocation2 + $0x250] sm:$0xff]
    %v191 = vld [vmem:[#allocation2 + $0x258] sm:$0xff]
    %v192 = vld [vmem:[#allocation2 + $0x260] sm:$0xff]
    %v193 = vld [vmem:[#allocation2 + $0x268] sm:$0xff]
    %v194 = vld [vmem:[#allocation2 + $0x270] sm:$0xff]
    %v195 = vld [vmem:[#allocation2 + $0x278] sm:$0xff]
    %v196 = vld [vmem:[#allocation2 + $0x280] sm:$0xff]
    %v197 = vld [vmem:[#allocation2 + $0x288] sm:$0xff]
    %v198 = vld [vmem:[#allocation2 + $0x290] sm:$0xff]
    %v199 = vld [vmem:[#allocation2 + $0x298] sm:$0xff]
    %v200 = vld [vmem:[#allocation2 + $0x2a0] sm:$0xff]
    %v201 = vld [vmem:[#allocation2 + $0x2a8] sm:$0xff]
    %v202 = vld [vmem:[#allocation2 + $0x2b0] sm:$0xff]
    %v203 = vld [vmem:[#allocation2 + $0x2b8] sm:$0xff]
    %v204 = vld [vmem:[#allocation2 + $0x2c0] sm:$0xff]
    %v205 = vld [vmem:[#allocation2 + $0x2c8] sm:$0xff]
    %v206 = vld [vmem:[#allocation2 + $0x2d0] sm:$0xff]
    %v207 = vld [vmem:[#allocation2 + $0x2d8] sm:$0xff]
    %v208 = vld [vmem:[#allocation2 + $0x2e0] sm:$0xff]
    %v209 = vld [vmem:[#allocation2 + $0x2e8] sm:$0xff]
    %v210 = vld [vmem:[#allocation2 + $0x2f0] sm:$0xff]
    %v211 = vld [vmem:[#allocation2 + $0x2f8] sm:$0xff]
    %v212 = vld [vmem:[#allocation2 + $0x300] sm:$0xff]
    %v213 = vld [vmem:[#allocation2 + $0x308] sm:$0xff]
    %v214 = vld [vmem:[#allocation2 + $0x310] sm:$0xff]
    %v215 = vld [vmem:[#allocation2 + $0x318] sm:$0xff]
    %v216 = vld [vmem:[#allocation2 + $0x320] sm:$0xff]
    %v217 = vld [vmem:[#allocation2 + $0x328] sm:$0xff]
    %v218 = vld [vmem:[#allocation2 + $0x330] sm:$0xff]
    %v219 = vld [vmem:[#allocation2 + $0x338] sm:$0xff]
    %v220 = vld [vmem:[#allocation2 + $0x340] sm:$0xff]
    %v221 = vld [vmem:[#allocation2 + $0x348] sm:$0xff]
    %v222 = vld [vmem:[#allocation2 + $0x350] sm:$0xff]
    %v223 = vld [vmem:[#allocation2 + $0x358] sm:$0xff]
    %v224 = vld [vmem:[#allocation2 + $0x360] sm:$0xff]
    %v225 = vld [vmem:[#allocation2 + $0x368] sm:$0xff]
    %v226 = vld [vmem:[#allocation2 + $0x370] sm:$0xff]
    %v227 = vld [vmem:[#allocation2 + $0x378] sm:$0xff]
    %v228 = vld [vmem:[#allocation2 + $0x380] sm:$0xff]
    %v229 = vld [vmem:[#allocation2 + $0x388] sm:$0xff]
    %v230 = vld [vmem:[#allocation2 + $0x390] sm:$0xff]
    %v231 = vld [vmem:[#allocation2 + $0x398] sm:$0xff]
    %v232 = vld [vmem:[#allocation2 + $0x3a0] sm:$0xff]
    %v233 = vld [vmem:[#allocation2 + $0x3a8] sm:$0xff]
    %v234 = vld [vmem:[#allocation2 + $0x3b0] sm:$0xff]
    %v235 = vld [vmem:[#allocation2 + $0x3b8] sm:$0xff]
    %v236 = vld [vmem:[#allocation2 + $0x3c0] sm:$0xff]
    %v237 = vld [vmem:[#allocation2 + $0x3c8] sm:$0xff]
    %v238 = vld [vmem:[#allocation2 + $0x3d0] sm:$0xff]
    %v239 = vld [vmem:[#allocation2 + $0x3d8] sm:$0xff]
    %v240 = vld [vmem:[#allocation2 + $0x3e0] sm:$0xff]
    %v241 = vld [vmem:[#allocation2 + $0x3e8] sm:$0xff]
    %v242 = vld [vmem:[#allocation2 + $0x3f0] sm:$0xff]
    %v243 = vld [vmem:[#allocation2 + $0x3f8] sm:$0xff]
    %v246 = vunpack.c.l.b16 %v114
    %v247 = vunpack.c.h.b16 %v114
    %v248 = vunpack.c.l.b16 %v115
    %v249 = vunpack.c.h.b16 %v115
    %v250 = vpack.c.b16 %v248, %v246
    %v251 = vpack.c.b16 %v249, %v247
    %v382 = vunpack.c.l.b16 %v116
    %v383 = vunpack.c.h.b16 %v116
    %v384 = vunpack.c.l.b16 %v117
    %v385 = vunpack.c.h.b16 %v117
    %v386 = vunpack.c.l.b16 %v118
    %v387 = vunpack.c.h.b16 %v118
    %v388 = vunpack.c.l.b16 %v119
    %v389 = vunpack.c.h.b16 %v119
    %v390 = vunpack.c.l.b16 %v120
    %v391 = vunpack.c.h.b16 %v120
    %v392 = vunpack.c.l.b16 %v121
    %v393 = vunpack.c.h.b16 %v121
    %v394 = vunpack.c.l.b16 %v122
    %v395 = vunpack.c.h.b16 %v122
    %v396 = vunpack.c.l.b16 %v123
    %v397 = vunpack.c.h.b16 %v123
    %v398 = vunpack.c.l.b16 %v124
    %v399 = vunpack.c.h.b16 %v124
    %v400 = vunpack.c.l.b16 %v125
    %v401 = vunpack.c.h.b16 %v125
    %v402 = vunpack.c.l.b16 %v126
    %v403 = vunpack.c.h.b16 %v126
    %v404 = vunpack.c.l.b16 %v127
    %v405 = vunpack.c.h.b16 %v127
    %v406 = vunpack.c.l.b16 %v128
    %v407 = vunpack.c.h.b16 %v128
    %v408 = vunpack.c.l.b16 %v129
    %v409 = vunpack.c.h.b16 %v129
    %v410 = vunpack.c.l.b16 %v130
    %v411 = vunpack.c.h.b16 %v130
    %v412 = vunpack.c.l.b16 %v131
    %v413 = vunpack.c.h.b16 %v131
    %v414 = vunpack.c.l.b16 %v132
    %v415 = vunpack.c.h.b16 %v132
    %v416 = vunpack.c.l.b16 %v133
    %v417 = vunpack.c.h.b16 %v133
    %v418 = vunpack.c.l.b16 %v134
    %v419 = vunpack.c.h.b16 %v134
    %v420 = vunpack.c.l.b16 %v135
    %v421 = vunpack.c.h.b16 %v135
    %v422 = vunpack.c.l.b16 %v136
    %v423 = vunpack.c.h.b16 %v136
    %v424 = vunpack.c.l.b16 %v137
    %v425 = vunpack.c.h.b16 %v137
    %v426 = vunpack.c.l.b16 %v138
    %v427 = vunpack.c.h.b16 %v138
    %v428 = vunpack.c.l.b16 %v139
    %v429 = vunpack.c.h.b16 %v139
    %v430 = vunpack.c.l.b16 %v140
    %v431 = vunpack.c.h.b16 %v140
    %v432 = vunpack.c.l.b16 %v141
    %v433 = vunpack.c.h.b16 %v141
    %v434 = vunpack.c.l.b16 %v142
    %v435 = vunpack.c.h.b16 %v142
    %v436 = vunpack.c.l.b16 %v143
    %v437 = vunpack.c.h.b16 %v143
    %v438 = vunpack.c.l.b16 %v144
    %v439 = vunpack.c.h.b16 %v144
    %v440 = vunpack.c.l.b16 %v145
    %v441 = vunpack.c.h.b16 %v145
    %v442 = vunpack.c.l.b16 %v146
    %v443 = vunpack.c.h.b16 %v146
    %v444 = vunpack.c.l.b16 %v147
    %v445 = vunpack.c.h.b16 %v147
    %v446 = vunpack.c.l.b16 %v148
    %v447 = vunpack.c.h.b16 %v148
    %v448 = vunpack.c.l.b16 %v149
    %v449 = vunpack.c.h.b16 %v149
    %v450 = vunpack.c.l.b16 %v150
    %v451 = vunpack.c.h.b16 %v150
    %v452 = vunpack.c.l.b16 %v151
    %v453 = vunpack.c.h.b16 %v151
    %v454 = vunpack.c.l.b16 %v152
    %v455 = vunpack.c.h.b16 %v152
    %v456 = vunpack.c.l.b16 %v153
    %v457 = vunpack.c.h.b16 %v153
    %v458 = vunpack.c.l.b16 %v154
    %v459 = vunpack.c.h.b16 %v154
    %v460 = vunpack.c.l.b16 %v155
    %v461 = vunpack.c.h.b16 %v155
    %v462 = vunpack.c.l.b16 %v156
    %v463 = vunpack.c.h.b16 %v156
    %v464 = vunpack.c.l.b16 %v157
    %v465 = vunpack.c.h.b16 %v157
    %v466 = vunpack.c.l.b16 %v158
    %v467 = vunpack.c.h.b16 %v158
    %v468 = vunpack.c.l.b16 %v159
    %v469 = vunpack.c.h.b16 %v159
    %v470 = vunpack.c.l.b16 %v160
    %v471 = vunpack.c.h.b16 %v160
    %v472 = vunpack.c.l.b16 %v161
    %v473 = vunpack.c.h.b16 %v161
    %v474 = vunpack.c.l.b16 %v162
    %v475 = vunpack.c.h.b16 %v162
    %v476 = vunpack.c.l.b16 %v163
    %v477 = vunpack.c.h.b16 %v163
    %v478 = vunpack.c.l.b16 %v164
    %v479 = vunpack.c.h.b16 %v164
    %v480 = vunpack.c.l.b16 %v165
    %v481 = vunpack.c.h.b16 %v165
    %v482 = vunpack.c.l.b16 %v166
    %v483 = vunpack.c.h.b16 %v166
    %v484 = vunpack.c.l.b16 %v167
    %v485 = vunpack.c.h.b16 %v167
    %v486 = vunpack.c.l.b16 %v168
    %v487 = vunpack.c.h.b16 %v168
    %v488 = vunpack.c.l.b16 %v169
    %v489 = vunpack.c.h.b16 %v169
    %v490 = vunpack.c.l.b16 %v170
    %v491 = vunpack.c.h.b16 %v170
    %v492 = vunpack.c.l.b16 %v171
    %v493 = vunpack.c.h.b16 %v171
    %v494 = vunpack.c.l.b16 %v172
    %v495 = vunpack.c.h.b16 %v172
    %v496 = vunpack.c.l.b16 %v173
    %v497 = vunpack.c.h.b16 %v173
    %v498 = vunpack.c.l.b16 %v174
    %v499 = vunpack.c.h.b16 %v174
    %v500 = vunpack.c.l.b16 %v175
    %v501 = vunpack.c.h.b16 %v175
    %v502 = vunpack.c.l.b16 %v176
    %v503 = vunpack.c.h.b16 %v176
    %v504 = vunpack.c.l.b16 %v177
    %v505 = vunpack.c.h.b16 %v177
    %v506 = vunpack.c.l.b16 %v178
    %v507 = vunpack.c.h.b16 %v178
    %v508 = vunpack.c.l.b16 %v179
    %v509 = vunpack.c.h.b16 %v179
    %v510 = vunpack.c.l.b16 %v180
    %v511 = vunpack.c.h.b16 %v180
    %v512 = vunpack.c.l.b16 %v181
    %v513 = vunpack.c.h.b16 %v181
    %v514 = vunpack.c.l.b16 %v182
    %v515 = vunpack.c.h.b16 %v182
    %v516 = vunpack.c.l.b16 %v183
    %v517 = vunpack.c.h.b16 %v183
    %v518 = vunpack.c.l.b16 %v184
    %v519 = vunpack.c.h.b16 %v184
    %v520 = vunpack.c.l.b16 %v185
    %v521 = vunpack.c.h.b16 %v185
    %v522 = vunpack.c.l.b16 %v186
    %v523 = vunpack.c.h.b16 %v186
    %v524 = vunpack.c.l.b16 %v187
    %v525 = vunpack.c.h.b16 %v187
    %v526 = vunpack.c.l.b16 %v188
    %v527 = vunpack.c.h.b16 %v188
    %v528 = vunpack.c.l.b16 %v189
    %v529 = vunpack.c.h.b16 %v189
    %v530 = vunpack.c.l.b16 %v190
    %v531 = vunpack.c.h.b16 %v190
    %v532 = vunpack.c.l.b16 %v191
    %v533 = vunpack.c.h.b16 %v191
    %v534 = vunpack.c.l.b16 %v192
    %v535 = vunpack.c.h.b16 %v192
    %v536 = vunpack.c.l.b16 %v193
    %v537 = vunpack.c.h.b16 %v193
    %v538 = vunpack.c.l.b16 %v194
    %v539 = vunpack.c.h.b16 %v194
    %v540 = vunpack.c.l.b16 %v195
    %v541 = vunpack.c.h.b16 %v195
    %v542 = vunpack.c.l.b16 %v196
    %v543 = vunpack.c.h.b16 %v196
    %v544 = vunpack.c.l.b16 %v197
    %v545 = vunpack.c.h.b16 %v197
    %v546 = vunpack.c.l.b16 %v198
    %v547 = vunpack.c.h.b16 %v198
    %v548 = vunpack.c.l.b16 %v199
    %v549 = vunpack.c.h.b16 %v199
    %v550 = vunpack.c.l.b16 %v200
    %v551 = vunpack.c.h.b16 %v200
    %v552 = vunpack.c.l.b16 %v201
    %v553 = vunpack.c.h.b16 %v201
    %v554 = vunpack.c.l.b16 %v202
    %v555 = vunpack.c.h.b16 %v202
    %v556 = vunpack.c.l.b16 %v203
    %v557 = vunpack.c.h.b16 %v203
    %v558 = vunpack.c.l.b16 %v204
    %v559 = vunpack.c.h.b16 %v204
    %v560 = vunpack.c.l.b16 %v205
    %v561 = vunpack.c.h.b16 %v205
    %v562 = vunpack.c.l.b16 %v206
    %v563 = vunpack.c.h.b16 %v206
    %v564 = vunpack.c.l.b16 %v207
    %v565 = vunpack.c.h.b16 %v207
    %v566 = vunpack.c.l.b16 %v208
    %v567 = vunpack.c.h.b16 %v208
    %v568 = vunpack.c.l.b16 %v209
    %v569 = vunpack.c.h.b16 %v209
    %v570 = vunpack.c.l.b16 %v210
    %v571 = vunpack.c.h.b16 %v210
    %v572 = vunpack.c.l.b16 %v211
    %v573 = vunpack.c.h.b16 %v211
    %v574 = vunpack.c.l.b16 %v212
    %v575 = vunpack.c.h.b16 %v212
    %v576 = vunpack.c.l.b16 %v213
    %v577 = vunpack.c.h.b16 %v213
    %v578 = vunpack.c.l.b16 %v214
    %v579 = vunpack.c.h.b16 %v214
    %v580 = vunpack.c.l.b16 %v215
    %v581 = vunpack.c.h.b16 %v215
    %v582 = vunpack.c.l.b16 %v216
    %v583 = vunpack.c.h.b16 %v216
    %v584 = vunpack.c.l.b16 %v217
    %v585 = vunpack.c.h.b16 %v217
    %v586 = vunpack.c.l.b16 %v218
    %v587 = vunpack.c.h.b16 %v218
    %v588 = vunpack.c.l.b16 %v219
    %v589 = vunpack.c.h.b16 %v219
    %v590 = vunpack.c.l.b16 %v220
    %v591 = vunpack.c.h.b16 %v220
    %v592 = vunpack.c.l.b16 %v221
    %v593 = vunpack.c.h.b16 %v221
    %v594 = vunpack.c.l.b16 %v222
    %v595 = vunpack.c.h.b16 %v222
    %v596 = vunpack.c.l.b16 %v223
    %v597 = vunpack.c.h.b16 %v223
    %v598 = vunpack.c.l.b16 %v224
    %v599 = vunpack.c.h.b16 %v224
    %v600 = vunpack.c.l.b16 %v225
    %v601 = vunpack.c.h.b16 %v225
    %v602 = vunpack.c.l.b16 %v226
    %v603 = vunpack.c.h.b16 %v226
    %v604 = vunpack.c.l.b16 %v227
    %v605 = vunpack.c.h.b16 %v227
    %v606 = vunpack.c.l.b16 %v228
    %v607 = vunpack.c.h.b16 %v228
    %v608 = vunpack.c.l.b16 %v229
    %v609 = vunpack.c.h.b16 %v229
    %v610 = vunpack.c.l.b16 %v230
    %v611 = vunpack.c.h.b16 %v230
    %v612 = vunpack.c.l.b16 %v231
    %v613 = vunpack.c.h.b16 %v231
    %v614 = vunpack.c.l.b16 %v232
    %v615 = vunpack.c.h.b16 %v232
    %v616 = vunpack.c.l.b16 %v233
    %v617 = vunpack.c.h.b16 %v233
    %v618 = vunpack.c.l.b16 %v234
    %v619 = vunpack.c.h.b16 %v234
    %v620 = vunpack.c.l.b16 %v235
    %v621 = vunpack.c.h.b16 %v235
    %v622 = vunpack.c.l.b16 %v236
    %v623 = vunpack.c.h.b16 %v236
    %v624 = vunpack.c.l.b16 %v237
    %v625 = vunpack.c.h.b16 %v237
    %v626 = vunpack.c.l.b16 %v238
    %v627 = vunpack.c.h.b16 %v238
    %v628 = vunpack.c.l.b16 %v239
    %v629 = vunpack.c.h.b16 %v239
    %v630 = vunpack.c.l.b16 %v240
    %v631 = vunpack.c.h.b16 %v240
    %v632 = vunpack.c.l.b16 %v241
    %v633 = vunpack.c.h.b16 %v241
    %v634 = vunpack.c.l.b16 %v242
    %v635 = vunpack.c.h.b16 %v242
    %v636 = vunpack.c.l.b16 %v243
    %v637 = vunpack.c.h.b16 %v243
    %v638 = vpack.c.b16 %v390, %v382
    %v639 = vpack.c.b16 %v391, %v383
    %v640 = vpack.c.b16 %v392, %v384
    %v641 = vpack.c.b16 %v393, %v385
    %v642 = vpack.c.b16 %v394, %v386
    %v643 = vpack.c.b16 %v395, %v387
    %v644 = vpack.c.b16 %v396, %v388
    %v645 = vpack.c.b16 %v397, %v389
    %v646 = vpack.c.b16 %v406, %v398
    %v647 = vpack.c.b16 %v407, %v399
    %v648 = vpack.c.b16 %v408, %v400
    %v649 = vpack.c.b16 %v409, %v401
    %v650 = vpack.c.b16 %v410, %v402
    %v651 = vpack.c.b16 %v411, %v403
    %v652 = vpack.c.b16 %v412, %v404
    %v653 = vpack.c.b16 %v413, %v405
    %v654 = vpack.c.b16 %v422, %v414
    %v655 = vpack.c.b16 %v423, %v415
    %v656 = vpack.c.b16 %v424, %v416
    %v657 = vpack.c.b16 %v425, %v417
    %v658 = vpack.c.b16 %v426, %v418
    %v659 = vpack.c.b16 %v427, %v419
    %v660 = vpack.c.b16 %v428, %v420
    %v661 = vpack.c.b16 %v429, %v421
    %v662 = vpack.c.b16 %v438, %v430
    %v663 = vpack.c.b16 %v439, %v431
    %v664 = vpack.c.b16 %v440, %v432
    %v665 = vpack.c.b16 %v441, %v433
    %v666 = vpack.c.b16 %v442, %v434
    %v667 = vpack.c.b16 %v443, %v435
    %v668 = vpack.c.b16 %v444, %v436
    %v669 = vpack.c.b16 %v445, %v437
    %v670 = vpack.c.b16 %v454, %v446
    %v671 = vpack.c.b16 %v455, %v447
    %v672 = vpack.c.b16 %v456, %v448
    %v673 = vpack.c.b16 %v457, %v449
    %v674 = vpack.c.b16 %v458, %v450
    %v675 = vpack.c.b16 %v459, %v451
    %v676 = vpack.c.b16 %v460, %v452
    %v677 = vpack.c.b16 %v461, %v453
    %v678 = vpack.c.b16 %v470, %v462
    %v679 = vpack.c.b16 %v471, %v463
    %v680 = vpack.c.b16 %v472, %v464
    %v681 = vpack.c.b16 %v473, %v465
    %v682 = vpack.c.b16 %v474, %v466
    %v683 = vpack.c.b16 %v475, %v467
    %v684 = vpack.c.b16 %v476, %v468
    %v685 = vpack.c.b16 %v477, %v469
    %v686 = vpack.c.b16 %v486, %v478
    %v687 = vpack.c.b16 %v487, %v479
    %v688 = vpack.c.b16 %v488, %v480
    %v689 = vpack.c.b16 %v489, %v481
    %v690 = vpack.c.b16 %v490, %v482
    %v691 = vpack.c.b16 %v491, %v483
    %v692 = vpack.c.b16 %v492, %v484
    %v693 = vpack.c.b16 %v493, %v485
    %v694 = vpack.c.b16 %v502, %v494
    %v695 = vpack.c.b16 %v503, %v495
    %v696 = vpack.c.b16 %v504, %v496
    %v697 = vpack.c.b16 %v505, %v497
    %v698 = vpack.c.b16 %v506, %v498
    %v699 = vpack.c.b16 %v507, %v499
    %v700 = vpack.c.b16 %v508, %v500
    %v701 = vpack.c.b16 %v509, %v501
    %v702 = vpack.c.b16 %v518, %v510
    %v703 = vpack.c.b16 %v519, %v511
    %v704 = vpack.c.b16 %v520, %v512
    %v705 = vpack.c.b16 %v521, %v513
    %v706 = vpack.c.b16 %v522, %v514
    %v707 = vpack.c.b16 %v523, %v515
    %v708 = vpack.c.b16 %v524, %v516
    %v709 = vpack.c.b16 %v525, %v517
    %v710 = vpack.c.b16 %v534, %v526
    %v711 = vpack.c.b16 %v535, %v527
    %v712 = vpack.c.b16 %v536, %v528
    %v713 = vpack.c.b16 %v537, %v529
    %v714 = vpack.c.b16 %v538, %v530
    %v715 = vpack.c.b16 %v539, %v531
    %v716 = vpack.c.b16 %v540, %v532
    %v717 = vpack.c.b16 %v541, %v533
    %v718 = vpack.c.b16 %v550, %v542
    %v719 = vpack.c.b16 %v551, %v543
    %v720 = vpack.c.b16 %v552, %v544
    %v721 = vpack.c.b16 %v553, %v545
    %v722 = vpack.c.b16 %v554, %v546
    %v723 = vpack.c.b16 %v555, %v547
    %v724 = vpack.c.b16 %v556, %v548
    %v725 = vpack.c.b16 %v557, %v549
    %v726 = vpack.c.b16 %v566, %v558
    %v727 = vpack.c.b16 %v567, %v559
    %v728 = vpack.c.b16 %v568, %v560
    %v729 = vpack.c.b16 %v569, %v561
    %v730 = vpack.c.b16 %v570, %v562
    %v731 = vpack.c.b16 %v571, %v563
    %v732 = vpack.c.b16 %v572, %v564
    %v733 = vpack.c.b16 %v573, %v565
    %v734 = vpack.c.b16 %v582, %v574
    %v735 = vpack.c.b16 %v583, %v575
    %v736 = vpack.c.b16 %v584, %v576
    %v737 = vpack.c.b16 %v585, %v577
    %v738 = vpack.c.b16 %v586, %v578
    %v739 = vpack.c.b16 %v587, %v579
    %v740 = vpack.c.b16 %v588, %v580
    %v741 = vpack.c.b16 %v589, %v581
    %v742 = vpack.c.b16 %v598, %v590
    %v743 = vpack.c.b16 %v599, %v591
    %v744 = vpack.c.b16 %v600, %v592
    %v745 = vpack.c.b16 %v601, %v593
    %v746 = vpack.c.b16 %v602, %v594
    %v747 = vpack.c.b16 %v603, %v595
    %v748 = vpack.c.b16 %v604, %v596
    %v749 = vpack.c.b16 %v605, %v597
    %v750 = vpack.c.b16 %v614, %v606
    %v751 = vpack.c.b16 %v615, %v607
    %v752 = vpack.c.b16 %v616, %v608
    %v753 = vpack.c.b16 %v617, %v609
    %v754 = vpack.c.b16 %v618, %v610
    %v755 = vpack.c.b16 %v619, %v611
    %v756 = vpack.c.b16 %v620, %v612
    %v757 = vpack.c.b16 %v621, %v613
    %v758 = vpack.c.b16 %v630, %v622
    %v759 = vpack.c.b16 %v631, %v623
    %v760 = vpack.c.b16 %v632, %v624
    %v761 = vpack.c.b16 %v633, %v625
    %v762 = vpack.c.b16 %v634, %v626
    %v763 = vpack.c.b16 %v635, %v627
    %v764 = vpack.c.b16 %v636, %v628
    %v765 = vpack.c.b16 %v637, %v629
    %894 = vmatpush.bf16.msra.mxu0 %v694
    %895 = vmatpush.bf16.msra.mxu0 %v686
    %896 = vmatpush.bf16.msra.mxu0 %v678
    %897 = vmatpush.bf16.msra.mxu0 %v670
    %898 = vmatpush.bf16.msra.mxu0 %v662
    %899 = vmatpush.bf16.msra.mxu0 %v654
    %900 = vmatpush.bf16.msra.mxu0 %v646
    %901 = vmatpush.bf16.msra.mxu0 %v638
    %902 = vmatmul.bf16.gmra.mxu0 %v250
    %v903 = vpop.f32.mrf.mxu0
    %v904 = vadd.f32 0.0, %v903
    %v905 = vpop.f32.mrf.mxu0
    %v906 = vadd.f32 0.0, %v905
    %907 = vdwg.mxu0
    %908 = vmatpush.bf16.msra.mxu0 %v758
    %909 = vmatpush.bf16.msra.mxu0 %v750
    %910 = vmatpush.bf16.msra.mxu0 %v742
    %911 = vmatpush.bf16.msra.mxu0 %v734
    %912 = vmatpush.bf16.msra.mxu0 %v726
    %913 = vmatpush.bf16.msra.mxu0 %v718
    %914 = vmatpush.bf16.msra.mxu0 %v710
    %915 = vmatpush.bf16.msra.mxu0 %v702
    %916 = vmatmul.bf16.gmra.mxu0 %v251
    %v917 = vpop.f32.mrf.mxu0
    %v918 = vadd.f32 %v904, %v917
    %v919 = vpop.f32.mrf.mxu0
    %v920 = vadd.f32 %v906, %v919
    %921 = vdwg.mxu0
    %922 = vmatpush.bf16.msra.mxu0 %v695
    %923 = vmatpush.bf16.msra.mxu0 %v687
    %924 = vmatpush.bf16.msra.mxu0 %v679
    %925 = vmatpush.bf16.msra.mxu0 %v671
    %926 = vmatpush.bf16.msra.mxu0 %v663
    %927 = vmatpush.bf16.msra.mxu0 %v655
    %928 = vmatpush.bf16.msra.mxu0 %v647
    %929 = vmatpush.bf16.msra.mxu0 %v639
    %930 = vmatmul.bf16.gmra.mxu0 %v250
    %v931 = vpop.f32.mrf.mxu0
    %v932 = vadd.f32 0.0, %v931
    %v933 = vpop.f32.mrf.mxu0
    %v934 = vadd.f32 0.0, %v933
    %935 = vdwg.mxu0
    %936 = vmatpush.bf16.msra.mxu0 %v759
    %937 = vmatpush.bf16.msra.mxu0 %v751
    %938 = vmatpush.bf16.msra.mxu0 %v743
    %939 = vmatpush.bf16.msra.mxu0 %v735
    %940 = vmatpush.bf16.msra.mxu0 %v727
    %941 = vmatpush.bf16.msra.mxu0 %v719
    %942 = vmatpush.bf16.msra.mxu0 %v711
    %943 = vmatpush.bf16.msra.mxu0 %v703
    %944 = vmatmul.bf16.gmra.mxu0 %v251
    %v945 = vpop.f32.mrf.mxu0
    %v946 = vadd.f32 %v932, %v945
    %v947 = vpop.f32.mrf.mxu0
    %v948 = vadd.f32 %v934, %v947
    %949 = vdwg.mxu0
    %950 = vmatpush.bf16.msra.mxu0 %v696
    %951 = vmatpush.bf16.msra.mxu0 %v688
    %952 = vmatpush.bf16.msra.mxu0 %v680
    %953 = vmatpush.bf16.msra.mxu0 %v672
    %954 = vmatpush.bf16.msra.mxu0 %v664
    %955 = vmatpush.bf16.msra.mxu0 %v656
    %956 = vmatpush.bf16.msra.mxu0 %v648
    %957 = vmatpush.bf16.msra.mxu0 %v640
    %958 = vmatmul.bf16.gmra.mxu0 %v250
    %v959 = vpop.f32.mrf.mxu0
    %v960 = vadd.f32 0.0, %v959
    %v961 = vpop.f32.mrf.mxu0
    %v962 = vadd.f32 0.0, %v961
    %963 = vdwg.mxu0
    %964 = vmatpush.bf16.msra.mxu0 %v760
    %965 = vmatpush.bf16.msra.mxu0 %v752
    %966 = vmatpush.bf16.msra.mxu0 %v744
    %967 = vmatpush.bf16.msra.mxu0 %v736
    %968 = vmatpush.bf16.msra.mxu0 %v728
    %969 = vmatpush.bf16.msra.mxu0 %v720
    %970 = vmatpush.bf16.msra.mxu0 %v712
    %971 = vmatpush.bf16.msra.mxu0 %v704
    %972 = vmatmul.bf16.gmra.mxu0 %v251
    %v973 = vpop.f32.mrf.mxu0
    %v974 = vadd.f32 %v960, %v973
    %v975 = vpop.f32.mrf.mxu0
    %v976 = vadd.f32 %v962, %v975
    %977 = vdwg.mxu0
    %978 = vmatpush.bf16.msra.mxu0 %v697
    %979 = vmatpush.bf16.msra.mxu0 %v689
    %980 = vmatpush.bf16.msra.mxu0 %v681
    %981 = vmatpush.bf16.msra.mxu0 %v673
    %982 = vmatpush.bf16.msra.mxu0 %v665
    %983 = vmatpush.bf16.msra.mxu0 %v657
    %984 = vmatpush.bf16.msra.mxu0 %v649
    %985 = vmatpush.bf16.msra.mxu0 %v641
    %986 = vmatmul.bf16.gmra.mxu0 %v250
    %v987 = vpop.f32.mrf.mxu0
    %v988 = vadd.f32 0.0, %v987
    %v989 = vpop.f32.mrf.mxu0
    %v990 = vadd.f32 0.0, %v989
    %991 = vdwg.mxu0
    %992 = vmatpush.bf16.msra.mxu0 %v761
    %993 = vmatpush.bf16.msra.mxu0 %v753
    %994 = vmatpush.bf16.msra.mxu0 %v745
    %995 = vmatpush.bf16.msra.mxu0 %v737
    %996 = vmatpush.bf16.msra.mxu0 %v729
    %997 = vmatpush.bf16.msra.mxu0 %v721
    %998 = vmatpush.bf16.msra.mxu0 %v713
    %999 = vmatpush.bf16.msra.mxu0 %v705
    %1000 = vmatmul.bf16.gmra.mxu0 %v251
    %v1001 = vpop.f32.mrf.mxu0
    %v1002 = vadd.f32 %v988, %v1001
    %v1003 = vpop.f32.mrf.mxu0
    %v1004 = vadd.f32 %v990, %v1003
    %1005 = vdwg.mxu0
    %1006 = vmatpush.bf16.msra.mxu0 %v698
    %1007 = vmatpush.bf16.msra.mxu0 %v690
    %1008 = vmatpush.bf16.msra.mxu0 %v682
    %1009 = vmatpush.bf16.msra.mxu0 %v674
    %1010 = vmatpush.bf16.msra.mxu0 %v666
    %1011 = vmatpush.bf16.msra.mxu0 %v658
    %1012 = vmatpush.bf16.msra.mxu0 %v650
    %1013 = vmatpush.bf16.msra.mxu0 %v642
    %1014 = vmatmul.bf16.gmra.mxu0 %v250
    %v1015 = vpop.f32.mrf.mxu0
    %v1016 = vadd.f32 0.0, %v1015
    %v1017 = vpop.f32.mrf.mxu0
    %v1018 = vadd.f32 0.0, %v1017
    %1019 = vdwg.mxu0
    %1020 = vmatpush.bf16.msra.mxu0 %v762
    %1021 = vmatpush.bf16.msra.mxu0 %v754
    %1022 = vmatpush.bf16.msra.mxu0 %v746
    %1023 = vmatpush.bf16.msra.mxu0 %v738
    %1024 = vmatpush.bf16.msra.mxu0 %v730
    %1025 = vmatpush.bf16.msra.mxu0 %v722
    %1026 = vmatpush.bf16.msra.mxu0 %v714
    %1027 = vmatpush.bf16.msra.mxu0 %v706
    %1028 = vmatmul.bf16.gmra.mxu0 %v251
    %v1029 = vpop.f32.mrf.mxu0
    %v1030 = vadd.f32 %v1016, %v1029
    %v1031 = vpop.f32.mrf.mxu0
    %v1032 = vadd.f32 %v1018, %v1031
    %1033 = vdwg.mxu0
    %1034 = vmatpush.bf16.msra.mxu0 %v699
    %1035 = vmatpush.bf16.msra.mxu0 %v691
    %1036 = vmatpush.bf16.msra.mxu0 %v683
    %1037 = vmatpush.bf16.msra.mxu0 %v675
    %1038 = vmatpush.bf16.msra.mxu0 %v667
    %1039 = vmatpush.bf16.msra.mxu0 %v659
    %1040 = vmatpush.bf16.msra.mxu0 %v651
    %1041 = vmatpush.bf16.msra.mxu0 %v643
    %1042 = vmatmul.bf16.gmra.mxu0 %v250
    %v1043 = vpop.f32.mrf.mxu0
    %v1044 = vadd.f32 0.0, %v1043
    %v1045 = vpop.f32.mrf.mxu0
    %v1046 = vadd.f32 0.0, %v1045
    %1047 = vdwg.mxu0
    %1048 = vmatpush.bf16.msra.mxu0 %v763
    %1049 = vmatpush.bf16.msra.mxu0 %v755
    %1050 = vmatpush.bf16.msra.mxu0 %v747
    %1051 = vmatpush.bf16.msra.mxu0 %v739
    %1052 = vmatpush.bf16.msra.mxu0 %v731
    %1053 = vmatpush.bf16.msra.mxu0 %v723
    %1054 = vmatpush.bf16.msra.mxu0 %v715
    %1055 = vmatpush.bf16.msra.mxu0 %v707
    %1056 = vmatmul.bf16.gmra.mxu0 %v251
    %v1057 = vpop.f32.mrf.mxu0
    %v1058 = vadd.f32 %v1044, %v1057
    %v1059 = vpop.f32.mrf.mxu0
    %v1060 = vadd.f32 %v1046, %v1059
    %1061 = vdwg.mxu0
    %1062 = vmatpush.bf16.msra.mxu0 %v700
    %1063 = vmatpush.bf16.msra.mxu0 %v692
    %1064 = vmatpush.bf16.msra.mxu0 %v684
    %1065 = vmatpush.bf16.msra.mxu0 %v676
    %1066 = vmatpush.bf16.msra.mxu0 %v668
    %1067 = vmatpush.bf16.msra.mxu0 %v660
    %1068 = vmatpush.bf16.msra.mxu0 %v652
    %1069 = vmatpush.bf16.msra.mxu0 %v644
    %1070 = vmatmul.bf16.gmra.mxu0 %v250
    %v1071 = vpop.f32.mrf.mxu0
    %v1072 = vadd.f32 0.0, %v1071
    %v1073 = vpop.f32.mrf.mxu0
    %v1074 = vadd.f32 0.0, %v1073
    %1075 = vdwg.mxu0
    %1076 = vmatpush.bf16.msra.mxu0 %v764
    %1077 = vmatpush.bf16.msra.mxu0 %v756
    %1078 = vmatpush.bf16.msra.mxu0 %v748
    %1079 = vmatpush.bf16.msra.mxu0 %v740
    %1080 = vmatpush.bf16.msra.mxu0 %v732
    %1081 = vmatpush.bf16.msra.mxu0 %v724
    %1082 = vmatpush.bf16.msra.mxu0 %v716
    %1083 = vmatpush.bf16.msra.mxu0 %v708
    %1084 = vmatmul.bf16.gmra.mxu0 %v251
    %v1085 = vpop.f32.mrf.mxu0
    %v1086 = vadd.f32 %v1072, %v1085
    %v1087 = vpop.f32.mrf.mxu0
    %v1088 = vadd.f32 %v1074, %v1087
    %1089 = vdwg.mxu0
    %1090 = vmatpush.bf16.msra.mxu0 %v701
    %1091 = vmatpush.bf16.msra.mxu0 %v693
    %1092 = vmatpush.bf16.msra.mxu0 %v685
    %1093 = vmatpush.bf16.msra.mxu0 %v677
    %1094 = vmatpush.bf16.msra.mxu0 %v669
    %1095 = vmatpush.bf16.msra.mxu0 %v661
    %1096 = vmatpush.bf16.msra.mxu0 %v653
    %1097 = vmatpush.bf16.msra.mxu0 %v645
    %1098 = vmatmul.bf16.gmra.mxu0 %v250
    %v1099 = vpop.f32.mrf.mxu0
    %v1100 = vadd.f32 0.0, %v1099
    %v1101 = vpop.f32.mrf.mxu0
    %v1102 = vadd.f32 0.0, %v1101
    %1103 = vdwg.mxu0
    %1104 = vmatpush.bf16.msra.mxu0 %v765
    %1105 = vmatpush.bf16.msra.mxu0 %v757
    %1106 = vmatpush.bf16.msra.mxu0 %v749
    %1107 = vmatpush.bf16.msra.mxu0 %v741
    %1108 = vmatpush.bf16.msra.mxu0 %v733
    %1109 = vmatpush.bf16.msra.mxu0 %v725
    %1110 = vmatpush.bf16.msra.mxu0 %v717
    %1111 = vmatpush.bf16.msra.mxu0 %v709
    %1112 = vmatmul.bf16.gmra.mxu0 %v251
    %v1113 = vpop.f32.mrf.mxu0
    %v1114 = vadd.f32 %v1100, %v1113
    %v1115 = vpop.f32.mrf.mxu0
    %v1116 = vadd.f32 %v1102, %v1115
    %1117 = vdwg.mxu0
    %v1118 = vpack.c.bf16 %v946, %v918
    %v1119 = vpack.c.bf16 %v1002, %v974
    %v1120 = vpack.c.bf16 %v1058, %v1030
    %v1121 = vpack.c.bf16 %v1114, %v1086
    %v1122 = vpack.c.bf16 %v948, %v920
    %v1123 = vpack.c.bf16 %v1004, %v976
    %v1124 = vpack.c.bf16 %v1060, %v1032
    %v1125 = vpack.c.bf16 %v1116, %v1088
    %v1126 = vld [vmem:[#allocation4] sm:$0xff]
    %v1128 = vperm.slane %v1126, 0
    %v1129 = vperm.slane %v1126, 1
    %v1130 = vperm.slane %v1126, 2
    %v1131 = vperm.slane %v1126, 3
    %v1132 = vperm.slane %v1126, 4
    %v1133 = vperm.slane %v1126, 5
    %v1134 = vperm.slane %v1126, 6
    %v1135 = vperm.slane %v1126, 7
    %v1144 = vpack.c.bf16 %v1129, %v1128
    %v1145 = vpack.c.bf16 %v1131, %v1130
    %v1146 = vpack.c.bf16 %v1133, %v1132
    %v1147 = vpack.c.bf16 %v1135, %v1134
    %v1152 = vunpack.c.l.b16 %v1144
    %v1153 = vunpack.c.h.b16 %v1144
    %v1154 = vunpack.c.l.b16 %v1145
    %v1155 = vunpack.c.h.b16 %v1145
    %v1156 = vunpack.c.l.b16 %v1146
    %v1157 = vunpack.c.h.b16 %v1146
    %v1158 = vunpack.c.l.b16 %v1147
    %v1159 = vunpack.c.h.b16 %v1147
    %v1160 = vpack.c.b16 %v1152, %v1152
    %v1161 = vpack.c.b16 %v1153, %v1153
    %v1162 = vpack.c.b16 %v1154, %v1154
    %v1163 = vpack.c.b16 %v1155, %v1155
    %v1164 = vpack.c.b16 %v1156, %v1156
    %v1165 = vpack.c.b16 %v1157, %v1157
    %v1166 = vpack.c.b16 %v1158, %v1158
    %v1167 = vpack.c.b16 %v1159, %v1159
    %v1169 = vpack.i.b16 %v1160, %v1160
    %v1171 = vperm.slane %v1169, 0
    %v1173 = vpack.i.b16 %v1161, %v1161
    %v1175 = vperm.slane %v1173, 0
    %v1177 = vpack.i.b16 %v1162, %v1162
    %v1179 = vperm.slane %v1177, 0
    %v1181 = vpack.i.b16 %v1163, %v1163
    %v1183 = vperm.slane %v1181, 0
    %v1185 = vpack.i.b16 %v1164, %v1164
    %v1187 = vperm.slane %v1185, 0
    %v1189 = vpack.i.b16 %v1165, %v1165
    %v1191 = vperm.slane %v1189, 0
    %v1193 = vpack.i.b16 %v1166, %v1166
    %v1195 = vperm.slane %v1193, 0
    %v1197 = vpack.i.b16 %v1167, %v1167
    %v1199 = vperm.slane %v1197, 0
    %v1200 = vunpack.c.l.bf16 %v1118
    %v1201 = vunpack.c.h.bf16 %v1118
    %v1202 = vunpack.c.l.bf16 %v1119
    %v1203 = vunpack.c.h.bf16 %v1119
    %v1204 = vunpack.c.l.bf16 %v1120
    %v1205 = vunpack.c.h.bf16 %v1120
    %v1206 = vunpack.c.l.bf16 %v1121
    %v1207 = vunpack.c.h.bf16 %v1121
    %v1208 = vunpack.c.l.bf16 %v1122
    %v1209 = vunpack.c.h.bf16 %v1122
    %v1210 = vunpack.c.l.bf16 %v1123
    %v1211 = vunpack.c.h.bf16 %v1123
    %v1212 = vunpack.c.l.bf16 %v1124
    %v1213 = vunpack.c.h.bf16 %v1124
    %v1214 = vunpack.c.l.bf16 %v1125
    %v1215 = vunpack.c.h.bf16 %v1125
    %v1216 = vunpack.c.l.bf16 %v1171
    %v1217 = vunpack.c.l.bf16 %v1175
    %v1218 = vunpack.c.l.bf16 %v1179
    %v1219 = vunpack.c.l.bf16 %v1183
    %v1220 = vunpack.c.l.bf16 %v1187
    %v1221 = vunpack.c.l.bf16 %v1191
    %v1222 = vunpack.c.l.bf16 %v1195
    %v1223 = vunpack.c.l.bf16 %v1199
    %v1224 = vadd.f32 %v1200, %v1216
    %v1225 = vadd.f32 %v1201, %v1217
    %v1226 = vadd.f32 %v1202, %v1218
    %v1227 = vadd.f32 %v1203, %v1219
    %v1228 = vadd.f32 %v1204, %v1220
    %v1229 = vadd.f32 %v1205, %v1221
    %v1230 = vadd.f32 %v1206, %v1222
    %v1231 = vadd.f32 %v1207, %v1223
    %v1232 = vadd.f32 %v1208, %v1216
    %v1233 = vadd.f32 %v1209, %v1217
    %v1234 = vadd.f32 %v1210, %v1218
    %v1235 = vadd.f32 %v1211, %v1219
    %v1236 = vadd.f32 %v1212, %v1220
    %v1237 = vadd.f32 %v1213, %v1221
    %v1238 = vadd.f32 %v1214, %v1222
    %v1239 = vadd.f32 %v1215, %v1223
    %v1240 = vpack.c.bf16 %v1225, %v1224
    %v1241 = vpack.c.bf16 %v1227, %v1226
    %v1242 = vpack.c.bf16 %v1229, %v1228
    %v1243 = vpack.c.bf16 %v1231, %v1230
    %v1244 = vpack.c.bf16 %v1233, %v1232
    %v1245 = vpack.c.bf16 %v1235, %v1234
    %v1246 = vpack.c.bf16 %v1237, %v1236
    %v1247 = vpack.c.bf16 %v1239, %v1238
    %v1248 = vunpack.c.l.bf16 %v1240
    %v1249 = vunpack.c.h.bf16 %v1240
    %v1250 = vunpack.c.l.bf16 %v1241
    %v1251 = vunpack.c.h.bf16 %v1241
    %v1252 = vunpack.c.l.bf16 %v1242
    %v1253 = vunpack.c.h.bf16 %v1242
    %v1254 = vunpack.c.l.bf16 %v1243
    %v1255 = vunpack.c.h.bf16 %v1243
    %v1256 = vunpack.c.l.bf16 %v1244
    %v1257 = vunpack.c.h.bf16 %v1244
    %v1258 = vunpack.c.l.bf16 %v1245
    %v1259 = vunpack.c.h.bf16 %v1245
    %v1260 = vunpack.c.l.bf16 %v1246
    %v1261 = vunpack.c.h.bf16 %v1246
    %v1262 = vunpack.c.l.bf16 %v1247
    %v1263 = vunpack.c.h.bf16 %v1247
    %v1264 = vmax.f32 %v1248, 0.0
    %v1265 = vmax.f32 %v1249, 0.0
    %v1266 = vmax.f32 %v1250, 0.0
    %v1267 = vmax.f32 %v1251, 0.0
    %v1268 = vmax.f32 %v1252, 0.0
    %v1269 = vmax.f32 %v1253, 0.0
    %v1270 = vmax.f32 %v1254, 0.0
    %v1271 = vmax.f32 %v1255, 0.0
    %v1272 = vmax.f32 %v1256, 0.0
    %v1273 = vmax.f32 %v1257, 0.0
    %v1274 = vmax.f32 %v1258, 0.0
    %v1275 = vmax.f32 %v1259, 0.0
    %v1276 = vmax.f32 %v1260, 0.0
    %v1277 = vmax.f32 %v1261, 0.0
    %v1278 = vmax.f32 %v1262, 0.0
    %v1279 = vmax.f32 %v1263, 0.0
    %v1280 = vpack.c.bf16 %v1272, %v1264
    %v1281 = vpack.c.bf16 %v1273, %v1265
    %v1282 = vpack.c.bf16 %v1274, %v1266
    %v1283 = vpack.c.bf16 %v1275, %v1267
    %v1284 = vpack.c.bf16 %v1276, %v1268
    %v1285 = vpack.c.bf16 %v1277, %v1269
    %v1286 = vpack.c.bf16 %v1278, %v1270
    %v1287 = vpack.c.bf16 %v1279, %v1271
    %v1288 = vld [vmem:[#allocation6] sm:$0xff]
    %v1289 = vld [vmem:[#allocation6 + $0x8] sm:$0xff]
    %v1290 = vld [vmem:[#allocation6 + $0x10] sm:$0xff]
    %v1291 = vld [vmem:[#allocation6 + $0x18] sm:$0xff]
    %v1292 = vld [vmem:[#allocation6 + $0x20] sm:$0xff]
    %v1293 = vld [vmem:[#allocation6 + $0x28] sm:$0xff]
    %v1294 = vld [vmem:[#allocation6 + $0x30] sm:$0xff]
    %v1295 = vld [vmem:[#allocation6 + $0x38] sm:$0xff]
    %v1296 = vld [vmem:[#allocation6 + $0x40] sm:$0xff]
    %v1297 = vld [vmem:[#allocation6 + $0x48] sm:$0xff]
    %v1298 = vld [vmem:[#allocation6 + $0x50] sm:$0xff]
    %v1299 = vld [vmem:[#allocation6 + $0x58] sm:$0xff]
    %v1300 = vld [vmem:[#allocation6 + $0x60] sm:$0xff]
    %v1301 = vld [vmem:[#allocation6 + $0x68] sm:$0xff]
    %v1302 = vld [vmem:[#allocation6 + $0x70] sm:$0xff]
    %v1303 = vld [vmem:[#allocation6 + $0x78] sm:$0xff]
    %v1304 = vld [vmem:[#allocation6 + $0x80] sm:$0xff]
    %v1305 = vld [vmem:[#allocation6 + $0x88] sm:$0xff]
    %v1306 = vld [vmem:[#allocation6 + $0x90] sm:$0xff]
    %v1307 = vld [vmem:[#allocation6 + $0x98] sm:$0xff]
    %v1308 = vld [vmem:[#allocation6 + $0xa0] sm:$0xff]
    %v1309 = vld [vmem:[#allocation6 + $0xa8] sm:$0xff]
    %v1310 = vld [vmem:[#allocation6 + $0xb0] sm:$0xff]
    %v1311 = vld [vmem:[#allocation6 + $0xb8] sm:$0xff]
    %v1312 = vld [vmem:[#allocation6 + $0xc0] sm:$0xff]
    %v1313 = vld [vmem:[#allocation6 + $0xc8] sm:$0xff]
    %v1314 = vld [vmem:[#allocation6 + $0xd0] sm:$0xff]
    %v1315 = vld [vmem:[#allocation6 + $0xd8] sm:$0xff]
    %v1316 = vld [vmem:[#allocation6 + $0xe0] sm:$0xff]
    %v1317 = vld [vmem:[#allocation6 + $0xe8] sm:$0xff]
    %v1318 = vld [vmem:[#allocation6 + $0xf0] sm:$0xff]
    %v1319 = vld [vmem:[#allocation6 + $0xf8] sm:$0xff]
    %v1320 = vld [vmem:[#allocation6 + $0x100] sm:$0xff]
    %v1321 = vld [vmem:[#allocation6 + $0x108] sm:$0xff]
    %v1322 = vld [vmem:[#allocation6 + $0x110] sm:$0xff]
    %v1323 = vld [vmem:[#allocation6 + $0x118] sm:$0xff]
    %v1324 = vld [vmem:[#allocation6 + $0x120] sm:$0xff]
    %v1325 = vld [vmem:[#allocation6 + $0x128] sm:$0xff]
    %v1326 = vld [vmem:[#allocation6 + $0x130] sm:$0xff]
    %v1327 = vld [vmem:[#allocation6 + $0x138] sm:$0xff]
    %v1328 = vld [vmem:[#allocation6 + $0x140] sm:$0xff]
    %v1329 = vld [vmem:[#allocation6 + $0x148] sm:$0xff]
    %v1330 = vld [vmem:[#allocation6 + $0x150] sm:$0xff]
    %v1331 = vld [vmem:[#allocation6 + $0x158] sm:$0xff]
    %v1332 = vld [vmem:[#allocation6 + $0x160] sm:$0xff]
    %v1333 = vld [vmem:[#allocation6 + $0x168] sm:$0xff]
    %v1334 = vld [vmem:[#allocation6 + $0x170] sm:$0xff]
    %v1335 = vld [vmem:[#allocation6 + $0x178] sm:$0xff]
    %v1336 = vld [vmem:[#allocation6 + $0x180] sm:$0xff]
    %v1337 = vld [vmem:[#allocation6 + $0x188] sm:$0xff]
    %v1338 = vld [vmem:[#allocation6 + $0x190] sm:$0xff]
    %v1339 = vld [vmem:[#allocation6 + $0x198] sm:$0xff]
    %v1340 = vld [vmem:[#allocation6 + $0x1a0] sm:$0xff]
    %v1341 = vld [vmem:[#allocation6 + $0x1a8] sm:$0xff]
    %v1342 = vld [vmem:[#allocation6 + $0x1b0] sm:$0xff]
    %v1343 = vld [vmem:[#allocation6 + $0x1b8] sm:$0xff]
    %v1344 = vld [vmem:[#allocation6 + $0x1c0] sm:$0xff]
    %v1345 = vld [vmem:[#allocation6 + $0x1c8] sm:$0xff]
    %v1346 = vld [vmem:[#allocation6 + $0x1d0] sm:$0xff]
    %v1347 = vld [vmem:[#allocation6 + $0x1d8] sm:$0xff]
    %v1348 = vld [vmem:[#allocation6 + $0x1e0] sm:$0xff]
    %v1349 = vld [vmem:[#allocation6 + $0x1e8] sm:$0xff]
    %v1350 = vld [vmem:[#allocation6 + $0x1f0] sm:$0xff]
    %v1351 = vld [vmem:[#allocation6 + $0x1f8] sm:$0xff]
    %v1352 = vld [vmem:[#allocation6 + $0x200] sm:$0xff]
    %v1353 = vld [vmem:[#allocation6 + $0x208] sm:$0xff]
    %v1354 = vld [vmem:[#allocation6 + $0x210] sm:$0xff]
    %v1355 = vld [vmem:[#allocation6 + $0x218] sm:$0xff]
    %v1356 = vld [vmem:[#allocation6 + $0x220] sm:$0xff]
    %v1357 = vld [vmem:[#allocation6 + $0x228] sm:$0xff]
    %v1358 = vld [vmem:[#allocation6 + $0x230] sm:$0xff]
    %v1359 = vld [vmem:[#allocation6 + $0x238] sm:$0xff]
    %v1360 = vld [vmem:[#allocation6 + $0x240] sm:$0xff]
    %v1361 = vld [vmem:[#allocation6 + $0x248] sm:$0xff]
    %v1362 = vld [vmem:[#allocation6 + $0x250] sm:$0xff]
    %v1363 = vld [vmem:[#allocation6 + $0x258] sm:$0xff]
    %v1364 = vld [vmem:[#allocation6 + $0x260] sm:$0xff]
    %v1365 = vld [vmem:[#allocation6 + $0x268] sm:$0xff]
    %v1366 = vld [vmem:[#allocation6 + $0x270] sm:$0xff]
    %v1367 = vld [vmem:[#allocation6 + $0x278] sm:$0xff]
    %v1368 = vld [vmem:[#allocation6 + $0x280] sm:$0xff]
    %v1369 = vld [vmem:[#allocation6 + $0x288] sm:$0xff]
    %v1370 = vld [vmem:[#allocation6 + $0x290] sm:$0xff]
    %v1371 = vld [vmem:[#allocation6 + $0x298] sm:$0xff]
    %v1372 = vld [vmem:[#allocation6 + $0x2a0] sm:$0xff]
    %v1373 = vld [vmem:[#allocation6 + $0x2a8] sm:$0xff]
    %v1374 = vld [vmem:[#allocation6 + $0x2b0] sm:$0xff]
    %v1375 = vld [vmem:[#allocation6 + $0x2b8] sm:$0xff]
    %v1376 = vld [vmem:[#allocation6 + $0x2c0] sm:$0xff]
    %v1377 = vld [vmem:[#allocation6 + $0x2c8] sm:$0xff]
    %v1378 = vld [vmem:[#allocation6 + $0x2d0] sm:$0xff]
    %v1379 = vld [vmem:[#allocation6 + $0x2d8] sm:$0xff]
    %v1380 = vld [vmem:[#allocation6 + $0x2e0] sm:$0xff]
    %v1381 = vld [vmem:[#allocation6 + $0x2e8] sm:$0xff]
    %v1382 = vld [vmem:[#allocation6 + $0x2f0] sm:$0xff]
    %v1383 = vld [vmem:[#allocation6 + $0x2f8] sm:$0xff]
    %v1384 = vld [vmem:[#allocation6 + $0x300] sm:$0xff]
    %v1385 = vld [vmem:[#allocation6 + $0x308] sm:$0xff]
    %v1386 = vld [vmem:[#allocation6 + $0x310] sm:$0xff]
    %v1387 = vld [vmem:[#allocation6 + $0x318] sm:$0xff]
    %v1388 = vld [vmem:[#allocation6 + $0x320] sm:$0xff]
    %v1389 = vld [vmem:[#allocation6 + $0x328] sm:$0xff]
    %v1390 = vld [vmem:[#allocation6 + $0x330] sm:$0xff]
    %v1391 = vld [vmem:[#allocation6 + $0x338] sm:$0xff]
    %v1392 = vld [vmem:[#allocation6 + $0x340] sm:$0xff]
    %v1393 = vld [vmem:[#allocation6 + $0x348] sm:$0xff]
    %v1394 = vld [vmem:[#allocation6 + $0x350] sm:$0xff]
    %v1395 = vld [vmem:[#allocation6 + $0x358] sm:$0xff]
    %v1396 = vld [vmem:[#allocation6 + $0x360] sm:$0xff]
    %v1397 = vld [vmem:[#allocation6 + $0x368] sm:$0xff]
    %v1398 = vld [vmem:[#allocation6 + $0x370] sm:$0xff]
    %v1399 = vld [vmem:[#allocation6 + $0x378] sm:$0xff]
    %v1400 = vld [vmem:[#allocation6 + $0x380] sm:$0xff]
    %v1401 = vld [vmem:[#allocation6 + $0x388] sm:$0xff]
    %v1402 = vld [vmem:[#allocation6 + $0x390] sm:$0xff]
    %v1403 = vld [vmem:[#allocation6 + $0x398] sm:$0xff]
    %v1404 = vld [vmem:[#allocation6 + $0x3a0] sm:$0xff]
    %v1405 = vld [vmem:[#allocation6 + $0x3a8] sm:$0xff]
    %v1406 = vld [vmem:[#allocation6 + $0x3b0] sm:$0xff]
    %v1407 = vld [vmem:[#allocation6 + $0x3b8] sm:$0xff]
    %v1408 = vld [vmem:[#allocation6 + $0x3c0] sm:$0xff]
    %v1409 = vld [vmem:[#allocation6 + $0x3c8] sm:$0xff]
    %v1410 = vld [vmem:[#allocation6 + $0x3d0] sm:$0xff]
    %v1411 = vld [vmem:[#allocation6 + $0x3d8] sm:$0xff]
    %v1412 = vld [vmem:[#allocation6 + $0x3e0] sm:$0xff]
    %v1413 = vld [vmem:[#allocation6 + $0x3e8] sm:$0xff]
    %v1414 = vld [vmem:[#allocation6 + $0x3f0] sm:$0xff]
    %v1415 = vld [vmem:[#allocation6 + $0x3f8] sm:$0xff]
    %v1416 = vld [vmem:[#allocation6 + $0x400] sm:$0xff]
    %v1417 = vld [vmem:[#allocation6 + $0x408] sm:$0xff]
    %v1418 = vld [vmem:[#allocation6 + $0x410] sm:$0xff]
    %v1419 = vld [vmem:[#allocation6 + $0x418] sm:$0xff]
    %v1420 = vld [vmem:[#allocation6 + $0x420] sm:$0xff]
    %v1421 = vld [vmem:[#allocation6 + $0x428] sm:$0xff]
    %v1422 = vld [vmem:[#allocation6 + $0x430] sm:$0xff]
    %v1423 = vld [vmem:[#allocation6 + $0x438] sm:$0xff]
    %v1424 = vld [vmem:[#allocation6 + $0x440] sm:$0xff]
    %v1425 = vld [vmem:[#allocation6 + $0x448] sm:$0xff]
    %v1426 = vld [vmem:[#allocation6 + $0x450] sm:$0xff]
    %v1427 = vld [vmem:[#allocation6 + $0x458] sm:$0xff]
    %v1428 = vld [vmem:[#allocation6 + $0x460] sm:$0xff]
    %v1429 = vld [vmem:[#allocation6 + $0x468] sm:$0xff]
    %v1430 = vld [vmem:[#allocation6 + $0x470] sm:$0xff]
    %v1431 = vld [vmem:[#allocation6 + $0x478] sm:$0xff]
    %v1432 = vld [vmem:[#allocation6 + $0x480] sm:$0xff]
    %v1433 = vld [vmem:[#allocation6 + $0x488] sm:$0xff]
    %v1434 = vld [vmem:[#allocation6 + $0x490] sm:$0xff]
    %v1435 = vld [vmem:[#allocation6 + $0x498] sm:$0xff]
    %v1436 = vld [vmem:[#allocation6 + $0x4a0] sm:$0xff]
    %v1437 = vld [vmem:[#allocation6 + $0x4a8] sm:$0xff]
    %v1438 = vld [vmem:[#allocation6 + $0x4b0] sm:$0xff]
    %v1439 = vld [vmem:[#allocation6 + $0x4b8] sm:$0xff]
    %v1440 = vld [vmem:[#allocation6 + $0x4c0] sm:$0xff]
    %v1441 = vld [vmem:[#allocation6 + $0x4c8] sm:$0xff]
    %v1442 = vld [vmem:[#allocation6 + $0x4d0] sm:$0xff]
    %v1443 = vld [vmem:[#allocation6 + $0x4d8] sm:$0xff]
    %v1444 = vld [vmem:[#allocation6 + $0x4e0] sm:$0xff]
    %v1445 = vld [vmem:[#allocation6 + $0x4e8] sm:$0xff]
    %v1446 = vld [vmem:[#allocation6 + $0x4f0] sm:$0xff]
    %v1447 = vld [vmem:[#allocation6 + $0x4f8] sm:$0xff]
    %v1448 = vld [vmem:[#allocation6 + $0x500] sm:$0xff]
    %v1449 = vld [vmem:[#allocation6 + $0x508] sm:$0xff]
    %v1450 = vld [vmem:[#allocation6 + $0x510] sm:$0xff]
    %v1451 = vld [vmem:[#allocation6 + $0x518] sm:$0xff]
    %v1452 = vld [vmem:[#allocation6 + $0x520] sm:$0xff]
    %v1453 = vld [vmem:[#allocation6 + $0x528] sm:$0xff]
    %v1454 = vld [vmem:[#allocation6 + $0x530] sm:$0xff]
    %v1455 = vld [vmem:[#allocation6 + $0x538] sm:$0xff]
    %v1456 = vld [vmem:[#allocation6 + $0x540] sm:$0xff]
    %v1457 = vld [vmem:[#allocation6 + $0x548] sm:$0xff]
    %v1458 = vld [vmem:[#allocation6 + $0x550] sm:$0xff]
    %v1459 = vld [vmem:[#allocation6 + $0x558] sm:$0xff]
    %v1460 = vld [vmem:[#allocation6 + $0x560] sm:$0xff]
    %v1461 = vld [vmem:[#allocation6 + $0x568] sm:$0xff]
    %v1462 = vld [vmem:[#allocation6 + $0x570] sm:$0xff]
    %v1463 = vld [vmem:[#allocation6 + $0x578] sm:$0xff]
    %v1464 = vld [vmem:[#allocation6 + $0x580] sm:$0xff]
    %v1465 = vld [vmem:[#allocation6 + $0x588] sm:$0xff]
    %v1466 = vld [vmem:[#allocation6 + $0x590] sm:$0xff]
    %v1467 = vld [vmem:[#allocation6 + $0x598] sm:$0xff]
    %v1468 = vld [vmem:[#allocation6 + $0x5a0] sm:$0xff]
    %v1469 = vld [vmem:[#allocation6 + $0x5a8] sm:$0xff]
    %v1470 = vld [vmem:[#allocation6 + $0x5b0] sm:$0xff]
    %v1471 = vld [vmem:[#allocation6 + $0x5b8] sm:$0xff]
    %v1472 = vld [vmem:[#allocation6 + $0x5c0] sm:$0xff]
    %v1473 = vld [vmem:[#allocation6 + $0x5c8] sm:$0xff]
    %v1474 = vld [vmem:[#allocation6 + $0x5d0] sm:$0xff]
    %v1475 = vld [vmem:[#allocation6 + $0x5d8] sm:$0xff]
    %v1476 = vld [vmem:[#allocation6 + $0x5e0] sm:$0xff]
    %v1477 = vld [vmem:[#allocation6 + $0x5e8] sm:$0xff]
    %v1478 = vld [vmem:[#allocation6 + $0x5f0] sm:$0xff]
    %v1479 = vld [vmem:[#allocation6 + $0x5f8] sm:$0xff]
    %v1480 = vld [vmem:[#allocation6 + $0x600] sm:$0xff]
    %v1481 = vld [vmem:[#allocation6 + $0x608] sm:$0xff]
    %v1482 = vld [vmem:[#allocation6 + $0x610] sm:$0xff]
    %v1483 = vld [vmem:[#allocation6 + $0x618] sm:$0xff]
    %v1484 = vld [vmem:[#allocation6 + $0x620] sm:$0xff]
    %v1485 = vld [vmem:[#allocation6 + $0x628] sm:$0xff]
    %v1486 = vld [vmem:[#allocation6 + $0x630] sm:$0xff]
    %v1487 = vld [vmem:[#allocation6 + $0x638] sm:$0xff]
    %v1488 = vld [vmem:[#allocation6 + $0x640] sm:$0xff]
    %v1489 = vld [vmem:[#allocation6 + $0x648] sm:$0xff]
    %v1490 = vld [vmem:[#allocation6 + $0x650] sm:$0xff]
    %v1491 = vld [vmem:[#allocation6 + $0x658] sm:$0xff]
    %v1492 = vld [vmem:[#allocation6 + $0x660] sm:$0xff]
    %v1493 = vld [vmem:[#allocation6 + $0x668] sm:$0xff]
    %v1494 = vld [vmem:[#allocation6 + $0x670] sm:$0xff]
    %v1495 = vld [vmem:[#allocation6 + $0x678] sm:$0xff]
    %v1496 = vld [vmem:[#allocation6 + $0x680] sm:$0xff]
    %v1497 = vld [vmem:[#allocation6 + $0x688] sm:$0xff]
    %v1498 = vld [vmem:[#allocation6 + $0x690] sm:$0xff]
    %v1499 = vld [vmem:[#allocation6 + $0x698] sm:$0xff]
    %v1500 = vld [vmem:[#allocation6 + $0x6a0] sm:$0xff]
    %v1501 = vld [vmem:[#allocation6 + $0x6a8] sm:$0xff]
    %v1502 = vld [vmem:[#allocation6 + $0x6b0] sm:$0xff]
    %v1503 = vld [vmem:[#allocation6 + $0x6b8] sm:$0xff]
    %v1504 = vld [vmem:[#allocation6 + $0x6c0] sm:$0xff]
    %v1505 = vld [vmem:[#allocation6 + $0x6c8] sm:$0xff]
    %v1506 = vld [vmem:[#allocation6 + $0x6d0] sm:$0xff]
    %v1507 = vld [vmem:[#allocation6 + $0x6d8] sm:$0xff]
    %v1508 = vld [vmem:[#allocation6 + $0x6e0] sm:$0xff]
    %v1509 = vld [vmem:[#allocation6 + $0x6e8] sm:$0xff]
    %v1510 = vld [vmem:[#allocation6 + $0x6f0] sm:$0xff]
    %v1511 = vld [vmem:[#allocation6 + $0x6f8] sm:$0xff]
    %v1512 = vld [vmem:[#allocation6 + $0x700] sm:$0xff]
    %v1513 = vld [vmem:[#allocation6 + $0x708] sm:$0xff]
    %v1514 = vld [vmem:[#allocation6 + $0x710] sm:$0xff]
    %v1515 = vld [vmem:[#allocation6 + $0x718] sm:$0xff]
    %v1516 = vld [vmem:[#allocation6 + $0x720] sm:$0xff]
    %v1517 = vld [vmem:[#allocation6 + $0x728] sm:$0xff]
    %v1518 = vld [vmem:[#allocation6 + $0x730] sm:$0xff]
    %v1519 = vld [vmem:[#allocation6 + $0x738] sm:$0xff]
    %v1520 = vld [vmem:[#allocation6 + $0x740] sm:$0xff]
    %v1521 = vld [vmem:[#allocation6 + $0x748] sm:$0xff]
    %v1522 = vld [vmem:[#allocation6 + $0x750] sm:$0xff]
    %v1523 = vld [vmem:[#allocation6 + $0x758] sm:$0xff]
    %v1524 = vld [vmem:[#allocation6 + $0x760] sm:$0xff]
    %v1525 = vld [vmem:[#allocation6 + $0x768] sm:$0xff]
    %v1526 = vld [vmem:[#allocation6 + $0x770] sm:$0xff]
    %v1527 = vld [vmem:[#allocation6 + $0x778] sm:$0xff]
    %v1528 = vld [vmem:[#allocation6 + $0x780] sm:$0xff]
    %v1529 = vld [vmem:[#allocation6 + $0x788] sm:$0xff]
    %v1530 = vld [vmem:[#allocation6 + $0x790] sm:$0xff]
    %v1531 = vld [vmem:[#allocation6 + $0x798] sm:$0xff]
    %v1532 = vld [vmem:[#allocation6 + $0x7a0] sm:$0xff]
    %v1533 = vld [vmem:[#allocation6 + $0x7a8] sm:$0xff]
    %v1534 = vld [vmem:[#allocation6 + $0x7b0] sm:$0xff]
    %v1535 = vld [vmem:[#allocation6 + $0x7b8] sm:$0xff]
    %v1536 = vld [vmem:[#allocation6 + $0x7c0] sm:$0xff]
    %v1537 = vld [vmem:[#allocation6 + $0x7c8] sm:$0xff]
    %v1538 = vld [vmem:[#allocation6 + $0x7d0] sm:$0xff]
    %v1539 = vld [vmem:[#allocation6 + $0x7d8] sm:$0xff]
    %v1540 = vld [vmem:[#allocation6 + $0x7e0] sm:$0xff]
    %v1541 = vld [vmem:[#allocation6 + $0x7e8] sm:$0xff]
    %v1542 = vld [vmem:[#allocation6 + $0x7f0] sm:$0xff]
    %v1543 = vld [vmem:[#allocation6 + $0x7f8] sm:$0xff]
    %v1544 = vld [vmem:[#allocation6 + $0x800] sm:$0xff]
    %v1545 = vld [vmem:[#allocation6 + $0x808] sm:$0xff]
    %v1546 = vld [vmem:[#allocation6 + $0x810] sm:$0xff]
    %v1547 = vld [vmem:[#allocation6 + $0x818] sm:$0xff]
    %v1548 = vld [vmem:[#allocation6 + $0x820] sm:$0xff]
    %v1549 = vld [vmem:[#allocation6 + $0x828] sm:$0xff]
    %v1550 = vld [vmem:[#allocation6 + $0x830] sm:$0xff]
    %v1551 = vld [vmem:[#allocation6 + $0x838] sm:$0xff]
    %v1552 = vld [vmem:[#allocation6 + $0x840] sm:$0xff]
    %v1553 = vld [vmem:[#allocation6 + $0x848] sm:$0xff]
    %v1554 = vld [vmem:[#allocation6 + $0x850] sm:$0xff]
    %v1555 = vld [vmem:[#allocation6 + $0x858] sm:$0xff]
    %v1556 = vld [vmem:[#allocation6 + $0x860] sm:$0xff]
    %v1557 = vld [vmem:[#allocation6 + $0x868] sm:$0xff]
    %v1558 = vld [vmem:[#allocation6 + $0x870] sm:$0xff]
    %v1559 = vld [vmem:[#allocation6 + $0x878] sm:$0xff]
    %v1560 = vld [vmem:[#allocation6 + $0x880] sm:$0xff]
    %v1561 = vld [vmem:[#allocation6 + $0x888] sm:$0xff]
    %v1562 = vld [vmem:[#allocation6 + $0x890] sm:$0xff]
    %v1563 = vld [vmem:[#allocation6 + $0x898] sm:$0xff]
    %v1564 = vld [vmem:[#allocation6 + $0x8a0] sm:$0xff]
    %v1565 = vld [vmem:[#allocation6 + $0x8a8] sm:$0xff]
    %v1566 = vld [vmem:[#allocation6 + $0x8b0] sm:$0xff]
    %v1567 = vld [vmem:[#allocation6 + $0x8b8] sm:$0xff]
    %v1568 = vld [vmem:[#allocation6 + $0x8c0] sm:$0xff]
    %v1569 = vld [vmem:[#allocation6 + $0x8c8] sm:$0xff]
    %v1570 = vld [vmem:[#allocation6 + $0x8d0] sm:$0xff]
    %v1571 = vld [vmem:[#allocation6 + $0x8d8] sm:$0xff]
    %v1572 = vld [vmem:[#allocation6 + $0x8e0] sm:$0xff]
    %v1573 = vld [vmem:[#allocation6 + $0x8e8] sm:$0xff]
    %v1574 = vld [vmem:[#allocation6 + $0x8f0] sm:$0xff]
    %v1575 = vld [vmem:[#allocation6 + $0x8f8] sm:$0xff]
    %v1576 = vld [vmem:[#allocation6 + $0x900] sm:$0xff]
    %v1577 = vld [vmem:[#allocation6 + $0x908] sm:$0xff]
    %v1578 = vld [vmem:[#allocation6 + $0x910] sm:$0xff]
    %v1579 = vld [vmem:[#allocation6 + $0x918] sm:$0xff]
    %v1580 = vld [vmem:[#allocation6 + $0x920] sm:$0xff]
    %v1581 = vld [vmem:[#allocation6 + $0x928] sm:$0xff]
    %v1582 = vld [vmem:[#allocation6 + $0x930] sm:$0xff]
    %v1583 = vld [vmem:[#allocation6 + $0x938] sm:$0xff]
    %v1584 = vld [vmem:[#allocation6 + $0x940] sm:$0xff]
    %v1585 = vld [vmem:[#allocation6 + $0x948] sm:$0xff]
    %v1586 = vld [vmem:[#allocation6 + $0x950] sm:$0xff]
    %v1587 = vld [vmem:[#allocation6 + $0x958] sm:$0xff]
    %v1588 = vld [vmem:[#allocation6 + $0x960] sm:$0xff]
    %v1589 = vld [vmem:[#allocation6 + $0x968] sm:$0xff]
    %v1590 = vld [vmem:[#allocation6 + $0x970] sm:$0xff]
    %v1591 = vld [vmem:[#allocation6 + $0x978] sm:$0xff]
    %v1592 = vld [vmem:[#allocation6 + $0x980] sm:$0xff]
    %v1593 = vld [vmem:[#allocation6 + $0x988] sm:$0xff]
    %v1594 = vld [vmem:[#allocation6 + $0x990] sm:$0xff]
    %v1595 = vld [vmem:[#allocation6 + $0x998] sm:$0xff]
    %v1596 = vld [vmem:[#allocation6 + $0x9a0] sm:$0xff]
    %v1597 = vld [vmem:[#allocation6 + $0x9a8] sm:$0xff]
    %v1598 = vld [vmem:[#allocation6 + $0x9b0] sm:$0xff]
    %v1599 = vld [vmem:[#allocation6 + $0x9b8] sm:$0xff]
    %v1600 = vld [vmem:[#allocation6 + $0x9c0] sm:$0xff]
    %v1601 = vld [vmem:[#allocation6 + $0x9c8] sm:$0xff]
    %v1602 = vld [vmem:[#allocation6 + $0x9d0] sm:$0xff]
    %v1603 = vld [vmem:[#allocation6 + $0x9d8] sm:$0xff]
    %v1604 = vld [vmem:[#allocation6 + $0x9e0] sm:$0xff]
    %v1605 = vld [vmem:[#allocation6 + $0x9e8] sm:$0xff]
    %v1606 = vld [vmem:[#allocation6 + $0x9f0] sm:$0xff]
    %v1607 = vld [vmem:[#allocation6 + $0x9f8] sm:$0xff]
    %v1608 = vld [vmem:[#allocation6 + $0xa00] sm:$0xff]
    %v1609 = vld [vmem:[#allocation6 + $0xa08] sm:$0xff]
    %v1610 = vld [vmem:[#allocation6 + $0xa10] sm:$0xff]
    %v1611 = vld [vmem:[#allocation6 + $0xa18] sm:$0xff]
    %v1612 = vld [vmem:[#allocation6 + $0xa20] sm:$0xff]
    %v1613 = vld [vmem:[#allocation6 + $0xa28] sm:$0xff]
    %v1614 = vld [vmem:[#allocation6 + $0xa30] sm:$0xff]
    %v1615 = vld [vmem:[#allocation6 + $0xa38] sm:$0xff]
    %v1616 = vld [vmem:[#allocation6 + $0xa40] sm:$0xff]
    %v1617 = vld [vmem:[#allocation6 + $0xa48] sm:$0xff]
    %v1618 = vld [vmem:[#allocation6 + $0xa50] sm:$0xff]
    %v1619 = vld [vmem:[#allocation6 + $0xa58] sm:$0xff]
    %v1620 = vld [vmem:[#allocation6 + $0xa60] sm:$0xff]
    %v1621 = vld [vmem:[#allocation6 + $0xa68] sm:$0xff]
    %v1622 = vld [vmem:[#allocation6 + $0xa70] sm:$0xff]
    %v1623 = vld [vmem:[#allocation6 + $0xa78] sm:$0xff]
    %v1624 = vld [vmem:[#allocation6 + $0xa80] sm:$0xff]
    %v1625 = vld [vmem:[#allocation6 + $0xa88] sm:$0xff]
    %v1626 = vld [vmem:[#allocation6 + $0xa90] sm:$0xff]
    %v1627 = vld [vmem:[#allocation6 + $0xa98] sm:$0xff]
    %v1628 = vld [vmem:[#allocation6 + $0xaa0] sm:$0xff]
    %v1629 = vld [vmem:[#allocation6 + $0xaa8] sm:$0xff]
    %v1630 = vld [vmem:[#allocation6 + $0xab0] sm:$0xff]
    %v1631 = vld [vmem:[#allocation6 + $0xab8] sm:$0xff]
    %v1632 = vld [vmem:[#allocation6 + $0xac0] sm:$0xff]
    %v1633 = vld [vmem:[#allocation6 + $0xac8] sm:$0xff]
    %v1634 = vld [vmem:[#allocation6 + $0xad0] sm:$0xff]
    %v1635 = vld [vmem:[#allocation6 + $0xad8] sm:$0xff]
    %v1636 = vld [vmem:[#allocation6 + $0xae0] sm:$0xff]
    %v1637 = vld [vmem:[#allocation6 + $0xae8] sm:$0xff]
    %v1638 = vld [vmem:[#allocation6 + $0xaf0] sm:$0xff]
    %v1639 = vld [vmem:[#allocation6 + $0xaf8] sm:$0xff]
    %v1640 = vld [vmem:[#allocation6 + $0xb00] sm:$0xff]
    %v1641 = vld [vmem:[#allocation6 + $0xb08] sm:$0xff]
    %v1642 = vld [vmem:[#allocation6 + $0xb10] sm:$0xff]
    %v1643 = vld [vmem:[#allocation6 + $0xb18] sm:$0xff]
    %v1644 = vld [vmem:[#allocation6 + $0xb20] sm:$0xff]
    %v1645 = vld [vmem:[#allocation6 + $0xb28] sm:$0xff]
    %v1646 = vld [vmem:[#allocation6 + $0xb30] sm:$0xff]
    %v1647 = vld [vmem:[#allocation6 + $0xb38] sm:$0xff]
    %v1648 = vld [vmem:[#allocation6 + $0xb40] sm:$0xff]
    %v1649 = vld [vmem:[#allocation6 + $0xb48] sm:$0xff]
    %v1650 = vld [vmem:[#allocation6 + $0xb50] sm:$0xff]
    %v1651 = vld [vmem:[#allocation6 + $0xb58] sm:$0xff]
    %v1652 = vld [vmem:[#allocation6 + $0xb60] sm:$0xff]
    %v1653 = vld [vmem:[#allocation6 + $0xb68] sm:$0xff]
    %v1654 = vld [vmem:[#allocation6 + $0xb70] sm:$0xff]
    %v1655 = vld [vmem:[#allocation6 + $0xb78] sm:$0xff]
    %v1656 = vld [vmem:[#allocation6 + $0xb80] sm:$0xff]
    %v1657 = vld [vmem:[#allocation6 + $0xb88] sm:$0xff]
    %v1658 = vld [vmem:[#allocation6 + $0xb90] sm:$0xff]
    %v1659 = vld [vmem:[#allocation6 + $0xb98] sm:$0xff]
    %v1660 = vld [vmem:[#allocation6 + $0xba0] sm:$0xff]
    %v1661 = vld [vmem:[#allocation6 + $0xba8] sm:$0xff]
    %v1662 = vld [vmem:[#allocation6 + $0xbb0] sm:$0xff]
    %v1663 = vld [vmem:[#allocation6 + $0xbb8] sm:$0xff]
    %v1664 = vld [vmem:[#allocation6 + $0xbc0] sm:$0xff]
    %v1665 = vld [vmem:[#allocation6 + $0xbc8] sm:$0xff]
    %v1666 = vld [vmem:[#allocation6 + $0xbd0] sm:$0xff]
    %v1667 = vld [vmem:[#allocation6 + $0xbd8] sm:$0xff]
    %v1668 = vld [vmem:[#allocation6 + $0xbe0] sm:$0xff]
    %v1669 = vld [vmem:[#allocation6 + $0xbe8] sm:$0xff]
    %v1670 = vld [vmem:[#allocation6 + $0xbf0] sm:$0xff]
    %v1671 = vld [vmem:[#allocation6 + $0xbf8] sm:$0xff]
    %v1672 = vld [vmem:[#allocation6 + $0xc00] sm:$0xff]
    %v1673 = vld [vmem:[#allocation6 + $0xc08] sm:$0xff]
    %v1674 = vld [vmem:[#allocation6 + $0xc10] sm:$0xff]
    %v1675 = vld [vmem:[#allocation6 + $0xc18] sm:$0xff]
    %v1676 = vld [vmem:[#allocation6 + $0xc20] sm:$0xff]
    %v1677 = vld [vmem:[#allocation6 + $0xc28] sm:$0xff]
    %v1678 = vld [vmem:[#allocation6 + $0xc30] sm:$0xff]
    %v1679 = vld [vmem:[#allocation6 + $0xc38] sm:$0xff]
    %v1680 = vld [vmem:[#allocation6 + $0xc40] sm:$0xff]
    %v1681 = vld [vmem:[#allocation6 + $0xc48] sm:$0xff]
    %v1682 = vld [vmem:[#allocation6 + $0xc50] sm:$0xff]
    %v1683 = vld [vmem:[#allocation6 + $0xc58] sm:$0xff]
    %v1684 = vld [vmem:[#allocation6 + $0xc60] sm:$0xff]
    %v1685 = vld [vmem:[#allocation6 + $0xc68] sm:$0xff]
    %v1686 = vld [vmem:[#allocation6 + $0xc70] sm:$0xff]
    %v1687 = vld [vmem:[#allocation6 + $0xc78] sm:$0xff]
    %v1688 = vld [vmem:[#allocation6 + $0xc80] sm:$0xff]
    %v1689 = vld [vmem:[#allocation6 + $0xc88] sm:$0xff]
    %v1690 = vld [vmem:[#allocation6 + $0xc90] sm:$0xff]
    %v1691 = vld [vmem:[#allocation6 + $0xc98] sm:$0xff]
    %v1692 = vld [vmem:[#allocation6 + $0xca0] sm:$0xff]
    %v1693 = vld [vmem:[#allocation6 + $0xca8] sm:$0xff]
    %v1694 = vld [vmem:[#allocation6 + $0xcb0] sm:$0xff]
    %v1695 = vld [vmem:[#allocation6 + $0xcb8] sm:$0xff]
    %v1696 = vld [vmem:[#allocation6 + $0xcc0] sm:$0xff]
    %v1697 = vld [vmem:[#allocation6 + $0xcc8] sm:$0xff]
    %v1698 = vld [vmem:[#allocation6 + $0xcd0] sm:$0xff]
    %v1699 = vld [vmem:[#allocation6 + $0xcd8] sm:$0xff]
    %v1700 = vld [vmem:[#allocation6 + $0xce0] sm:$0xff]
    %v1701 = vld [vmem:[#allocation6 + $0xce8] sm:$0xff]
    %v1702 = vld [vmem:[#allocation6 + $0xcf0] sm:$0xff]
    %v1703 = vld [vmem:[#allocation6 + $0xcf8] sm:$0xff]
    %v1704 = vld [vmem:[#allocation6 + $0xd00] sm:$0xff]
    %v1705 = vld [vmem:[#allocation6 + $0xd08] sm:$0xff]
    %v1706 = vld [vmem:[#allocation6 + $0xd10] sm:$0xff]
    %v1707 = vld [vmem:[#allocation6 + $0xd18] sm:$0xff]
    %v1708 = vld [vmem:[#allocation6 + $0xd20] sm:$0xff]
    %v1709 = vld [vmem:[#allocation6 + $0xd28] sm:$0xff]
    %v1710 = vld [vmem:[#allocation6 + $0xd30] sm:$0xff]
    %v1711 = vld [vmem:[#allocation6 + $0xd38] sm:$0xff]
    %v1712 = vld [vmem:[#allocation6 + $0xd40] sm:$0xff]
    %v1713 = vld [vmem:[#allocation6 + $0xd48] sm:$0xff]
    %v1714 = vld [vmem:[#allocation6 + $0xd50] sm:$0xff]
    %v1715 = vld [vmem:[#allocation6 + $0xd58] sm:$0xff]
    %v1716 = vld [vmem:[#allocation6 + $0xd60] sm:$0xff]
    %v1717 = vld [vmem:[#allocation6 + $0xd68] sm:$0xff]
    %v1718 = vld [vmem:[#allocation6 + $0xd70] sm:$0xff]
    %v1719 = vld [vmem:[#allocation6 + $0xd78] sm:$0xff]
    %v1720 = vld [vmem:[#allocation6 + $0xd80] sm:$0xff]
    %v1721 = vld [vmem:[#allocation6 + $0xd88] sm:$0xff]
    %v1722 = vld [vmem:[#allocation6 + $0xd90] sm:$0xff]
    %v1723 = vld [vmem:[#allocation6 + $0xd98] sm:$0xff]
    %v1724 = vld [vmem:[#allocation6 + $0xda0] sm:$0xff]
    %v1725 = vld [vmem:[#allocation6 + $0xda8] sm:$0xff]
    %v1726 = vld [vmem:[#allocation6 + $0xdb0] sm:$0xff]
    %v1727 = vld [vmem:[#allocation6 + $0xdb8] sm:$0xff]
    %v1728 = vld [vmem:[#allocation6 + $0xdc0] sm:$0xff]
    %v1729 = vld [vmem:[#allocation6 + $0xdc8] sm:$0xff]
    %v1730 = vld [vmem:[#allocation6 + $0xdd0] sm:$0xff]
    %v1731 = vld [vmem:[#allocation6 + $0xdd8] sm:$0xff]
    %v1732 = vld [vmem:[#allocation6 + $0xde0] sm:$0xff]
    %v1733 = vld [vmem:[#allocation6 + $0xde8] sm:$0xff]
    %v1734 = vld [vmem:[#allocation6 + $0xdf0] sm:$0xff]
    %v1735 = vld [vmem:[#allocation6 + $0xdf8] sm:$0xff]
    %v1736 = vld [vmem:[#allocation6 + $0xe00] sm:$0xff]
    %v1737 = vld [vmem:[#allocation6 + $0xe08] sm:$0xff]
    %v1738 = vld [vmem:[#allocation6 + $0xe10] sm:$0xff]
    %v1739 = vld [vmem:[#allocation6 + $0xe18] sm:$0xff]
    %v1740 = vld [vmem:[#allocation6 + $0xe20] sm:$0xff]
    %v1741 = vld [vmem:[#allocation6 + $0xe28] sm:$0xff]
    %v1742 = vld [vmem:[#allocation6 + $0xe30] sm:$0xff]
    %v1743 = vld [vmem:[#allocation6 + $0xe38] sm:$0xff]
    %v1744 = vld [vmem:[#allocation6 + $0xe40] sm:$0xff]
    %v1745 = vld [vmem:[#allocation6 + $0xe48] sm:$0xff]
    %v1746 = vld [vmem:[#allocation6 + $0xe50] sm:$0xff]
    %v1747 = vld [vmem:[#allocation6 + $0xe58] sm:$0xff]
    %v1748 = vld [vmem:[#allocation6 + $0xe60] sm:$0xff]
    %v1749 = vld [vmem:[#allocation6 + $0xe68] sm:$0xff]
    %v1750 = vld [vmem:[#allocation6 + $0xe70] sm:$0xff]
    %v1751 = vld [vmem:[#allocation6 + $0xe78] sm:$0xff]
    %v1752 = vld [vmem:[#allocation6 + $0xe80] sm:$0xff]
    %v1753 = vld [vmem:[#allocation6 + $0xe88] sm:$0xff]
    %v1754 = vld [vmem:[#allocation6 + $0xe90] sm:$0xff]
    %v1755 = vld [vmem:[#allocation6 + $0xe98] sm:$0xff]
    %v1756 = vld [vmem:[#allocation6 + $0xea0] sm:$0xff]
    %v1757 = vld [vmem:[#allocation6 + $0xea8] sm:$0xff]
    %v1758 = vld [vmem:[#allocation6 + $0xeb0] sm:$0xff]
    %v1759 = vld [vmem:[#allocation6 + $0xeb8] sm:$0xff]
    %v1760 = vld [vmem:[#allocation6 + $0xec0] sm:$0xff]
    %v1761 = vld [vmem:[#allocation6 + $0xec8] sm:$0xff]
    %v1762 = vld [vmem:[#allocation6 + $0xed0] sm:$0xff]
    %v1763 = vld [vmem:[#allocation6 + $0xed8] sm:$0xff]
    %v1764 = vld [vmem:[#allocation6 + $0xee0] sm:$0xff]
    %v1765 = vld [vmem:[#allocation6 + $0xee8] sm:$0xff]
    %v1766 = vld [vmem:[#allocation6 + $0xef0] sm:$0xff]
    %v1767 = vld [vmem:[#allocation6 + $0xef8] sm:$0xff]
    %v1768 = vld [vmem:[#allocation6 + $0xf00] sm:$0xff]
    %v1769 = vld [vmem:[#allocation6 + $0xf08] sm:$0xff]
    %v1770 = vld [vmem:[#allocation6 + $0xf10] sm:$0xff]
    %v1771 = vld [vmem:[#allocation6 + $0xf18] sm:$0xff]
    %v1772 = vld [vmem:[#allocation6 + $0xf20] sm:$0xff]
    %v1773 = vld [vmem:[#allocation6 + $0xf28] sm:$0xff]
    %v1774 = vld [vmem:[#allocation6 + $0xf30] sm:$0xff]
    %v1775 = vld [vmem:[#allocation6 + $0xf38] sm:$0xff]
    %v1776 = vld [vmem:[#allocation6 + $0xf40] sm:$0xff]
    %v1777 = vld [vmem:[#allocation6 + $0xf48] sm:$0xff]
    %v1778 = vld [vmem:[#allocation6 + $0xf50] sm:$0xff]
    %v1779 = vld [vmem:[#allocation6 + $0xf58] sm:$0xff]
    %v1780 = vld [vmem:[#allocation6 + $0xf60] sm:$0xff]
    %v1781 = vld [vmem:[#allocation6 + $0xf68] sm:$0xff]
    %v1782 = vld [vmem:[#allocation6 + $0xf70] sm:$0xff]
    %v1783 = vld [vmem:[#allocation6 + $0xf78] sm:$0xff]
    %v1784 = vld [vmem:[#allocation6 + $0xf80] sm:$0xff]
    %v1785 = vld [vmem:[#allocation6 + $0xf88] sm:$0xff]
    %v1786 = vld [vmem:[#allocation6 + $0xf90] sm:$0xff]
    %v1787 = vld [vmem:[#allocation6 + $0xf98] sm:$0xff]
    %v1788 = vld [vmem:[#allocation6 + $0xfa0] sm:$0xff]
    %v1789 = vld [vmem:[#allocation6 + $0xfa8] sm:$0xff]
    %v1790 = vld [vmem:[#allocation6 + $0xfb0] sm:$0xff]
    %v1791 = vld [vmem:[#allocation6 + $0xfb8] sm:$0xff]
    %v1792 = vld [vmem:[#allocation6 + $0xfc0] sm:$0xff]
    %v1793 = vld [vmem:[#allocation6 + $0xfc8] sm:$0xff]
    %v1794 = vld [vmem:[#allocation6 + $0xfd0] sm:$0xff]
    %v1795 = vld [vmem:[#allocation6 + $0xfd8] sm:$0xff]
    %v1796 = vld [vmem:[#allocation6 + $0xfe0] sm:$0xff]
    %v1797 = vld [vmem:[#allocation6 + $0xfe8] sm:$0xff]
    %v1798 = vld [vmem:[#allocation6 + $0xff0] sm:$0xff]
    %v1799 = vld [vmem:[#allocation6 + $0xff8] sm:$0xff]
    %v2312 = vunpack.c.l.b16 %v1288
    %v2313 = vunpack.c.h.b16 %v1288
    %v2314 = vunpack.c.l.b16 %v1289
    %v2315 = vunpack.c.h.b16 %v1289
    %v2316 = vunpack.c.l.b16 %v1290
    %v2317 = vunpack.c.h.b16 %v1290
    %v2318 = vunpack.c.l.b16 %v1291
    %v2319 = vunpack.c.h.b16 %v1291
    %v2320 = vunpack.c.l.b16 %v1292
    %v2321 = vunpack.c.h.b16 %v1292
    %v2322 = vunpack.c.l.b16 %v1293
    %v2323 = vunpack.c.h.b16 %v1293
    %v2324 = vunpack.c.l.b16 %v1294
    %v2325 = vunpack.c.h.b16 %v1294
    %v2326 = vunpack.c.l.b16 %v1295
    %v2327 = vunpack.c.h.b16 %v1295
    %v2328 = vunpack.c.l.b16 %v1296
    %v2329 = vunpack.c.h.b16 %v1296
    %v2330 = vunpack.c.l.b16 %v1297
    %v2331 = vunpack.c.h.b16 %v1297
    %v2332 = vunpack.c.l.b16 %v1298
    %v2333 = vunpack.c.h.b16 %v1298
    %v2334 = vunpack.c.l.b16 %v1299
    %v2335 = vunpack.c.h.b16 %v1299
    %v2336 = vunpack.c.l.b16 %v1300
    %v2337 = vunpack.c.h.b16 %v1300
    %v2338 = vunpack.c.l.b16 %v1301
    %v2339 = vunpack.c.h.b16 %v1301
    %v2340 = vunpack.c.l.b16 %v1302
    %v2341 = vunpack.c.h.b16 %v1302
    %v2342 = vunpack.c.l.b16 %v1303
    %v2343 = vunpack.c.h.b16 %v1303
    %v2344 = vunpack.c.l.b16 %v1304
    %v2345 = vunpack.c.h.b16 %v1304
    %v2346 = vunpack.c.l.b16 %v1305
    %v2347 = vunpack.c.h.b16 %v1305
    %v2348 = vunpack.c.l.b16 %v1306
    %v2349 = vunpack.c.h.b16 %v1306
    %v2350 = vunpack.c.l.b16 %v1307
    %v2351 = vunpack.c.h.b16 %v1307
    %v2352 = vunpack.c.l.b16 %v1308
    %v2353 = vunpack.c.h.b16 %v1308
    %v2354 = vunpack.c.l.b16 %v1309
    %v2355 = vunpack.c.h.b16 %v1309
    %v2356 = vunpack.c.l.b16 %v1310
    %v2357 = vunpack.c.h.b16 %v1310
    %v2358 = vunpack.c.l.b16 %v1311
    %v2359 = vunpack.c.h.b16 %v1311
    %v2360 = vunpack.c.l.b16 %v1312
    %v2361 = vunpack.c.h.b16 %v1312
    %v2362 = vunpack.c.l.b16 %v1313
    %v2363 = vunpack.c.h.b16 %v1313
    %v2364 = vunpack.c.l.b16 %v1314
    %v2365 = vunpack.c.h.b16 %v1314
    %v2366 = vunpack.c.l.b16 %v1315
    %v2367 = vunpack.c.h.b16 %v1315
    %v2368 = vunpack.c.l.b16 %v1316
    %v2369 = vunpack.c.h.b16 %v1316
    %v2370 = vunpack.c.l.b16 %v1317
    %v2371 = vunpack.c.h.b16 %v1317
    %v2372 = vunpack.c.l.b16 %v1318
    %v2373 = vunpack.c.h.b16 %v1318
    %v2374 = vunpack.c.l.b16 %v1319
    %v2375 = vunpack.c.h.b16 %v1319
    %v2376 = vunpack.c.l.b16 %v1320
    %v2377 = vunpack.c.h.b16 %v1320
    %v2378 = vunpack.c.l.b16 %v1321
    %v2379 = vunpack.c.h.b16 %v1321
    %v2380 = vunpack.c.l.b16 %v1322
    %v2381 = vunpack.c.h.b16 %v1322
    %v2382 = vunpack.c.l.b16 %v1323
    %v2383 = vunpack.c.h.b16 %v1323
    %v2384 = vunpack.c.l.b16 %v1324
    %v2385 = vunpack.c.h.b16 %v1324
    %v2386 = vunpack.c.l.b16 %v1325
    %v2387 = vunpack.c.h.b16 %v1325
    %v2388 = vunpack.c.l.b16 %v1326
    %v2389 = vunpack.c.h.b16 %v1326
    %v2390 = vunpack.c.l.b16 %v1327
    %v2391 = vunpack.c.h.b16 %v1327
    %v2392 = vunpack.c.l.b16 %v1328
    %v2393 = vunpack.c.h.b16 %v1328
    %v2394 = vunpack.c.l.b16 %v1329
    %v2395 = vunpack.c.h.b16 %v1329
    %v2396 = vunpack.c.l.b16 %v1330
    %v2397 = vunpack.c.h.b16 %v1330
    %v2398 = vunpack.c.l.b16 %v1331
    %v2399 = vunpack.c.h.b16 %v1331
    %v2400 = vunpack.c.l.b16 %v1332
    %v2401 = vunpack.c.h.b16 %v1332
    %v2402 = vunpack.c.l.b16 %v1333
    %v2403 = vunpack.c.h.b16 %v1333
    %v2404 = vunpack.c.l.b16 %v1334
    %v2405 = vunpack.c.h.b16 %v1334
    %v2406 = vunpack.c.l.b16 %v1335
    %v2407 = vunpack.c.h.b16 %v1335
    %v2408 = vunpack.c.l.b16 %v1336
    %v2409 = vunpack.c.h.b16 %v1336
    %v2410 = vunpack.c.l.b16 %v1337
    %v2411 = vunpack.c.h.b16 %v1337
    %v2412 = vunpack.c.l.b16 %v1338
    %v2413 = vunpack.c.h.b16 %v1338
    %v2414 = vunpack.c.l.b16 %v1339
    %v2415 = vunpack.c.h.b16 %v1339
    %v2416 = vunpack.c.l.b16 %v1340
    %v2417 = vunpack.c.h.b16 %v1340
    %v2418 = vunpack.c.l.b16 %v1341
    %v2419 = vunpack.c.h.b16 %v1341
    %v2420 = vunpack.c.l.b16 %v1342
    %v2421 = vunpack.c.h.b16 %v1342
    %v2422 = vunpack.c.l.b16 %v1343
    %v2423 = vunpack.c.h.b16 %v1343
    %v2424 = vunpack.c.l.b16 %v1344
    %v2425 = vunpack.c.h.b16 %v1344
    %v2426 = vunpack.c.l.b16 %v1345
    %v2427 = vunpack.c.h.b16 %v1345
    %v2428 = vunpack.c.l.b16 %v1346
    %v2429 = vunpack.c.h.b16 %v1346
    %v2430 = vunpack.c.l.b16 %v1347
    %v2431 = vunpack.c.h.b16 %v1347
    %v2432 = vunpack.c.l.b16 %v1348
    %v2433 = vunpack.c.h.b16 %v1348
    %v2434 = vunpack.c.l.b16 %v1349
    %v2435 = vunpack.c.h.b16 %v1349
    %v2436 = vunpack.c.l.b16 %v1350
    %v2437 = vunpack.c.h.b16 %v1350
    %v2438 = vunpack.c.l.b16 %v1351
    %v2439 = vunpack.c.h.b16 %v1351
    %v2440 = vunpack.c.l.b16 %v1352
    %v2441 = vunpack.c.h.b16 %v1352
    %v2442 = vunpack.c.l.b16 %v1353
    %v2443 = vunpack.c.h.b16 %v1353
    %v2444 = vunpack.c.l.b16 %v1354
    %v2445 = vunpack.c.h.b16 %v1354
    %v2446 = vunpack.c.l.b16 %v1355
    %v2447 = vunpack.c.h.b16 %v1355
    %v2448 = vunpack.c.l.b16 %v1356
    %v2449 = vunpack.c.h.b16 %v1356
    %v2450 = vunpack.c.l.b16 %v1357
    %v2451 = vunpack.c.h.b16 %v1357
    %v2452 = vunpack.c.l.b16 %v1358
    %v2453 = vunpack.c.h.b16 %v1358
    %v2454 = vunpack.c.l.b16 %v1359
    %v2455 = vunpack.c.h.b16 %v1359
    %v2456 = vunpack.c.l.b16 %v1360
    %v2457 = vunpack.c.h.b16 %v1360
    %v2458 = vunpack.c.l.b16 %v1361
    %v2459 = vunpack.c.h.b16 %v1361
    %v2460 = vunpack.c.l.b16 %v1362
    %v2461 = vunpack.c.h.b16 %v1362
    %v2462 = vunpack.c.l.b16 %v1363
    %v2463 = vunpack.c.h.b16 %v1363
    %v2464 = vunpack.c.l.b16 %v1364
    %v2465 = vunpack.c.h.b16 %v1364
    %v2466 = vunpack.c.l.b16 %v1365
    %v2467 = vunpack.c.h.b16 %v1365
    %v2468 = vunpack.c.l.b16 %v1366
    %v2469 = vunpack.c.h.b16 %v1366
    %v2470 = vunpack.c.l.b16 %v1367
    %v2471 = vunpack.c.h.b16 %v1367
    %v2472 = vunpack.c.l.b16 %v1368
    %v2473 = vunpack.c.h.b16 %v1368
    %v2474 = vunpack.c.l.b16 %v1369
    %v2475 = vunpack.c.h.b16 %v1369
    %v2476 = vunpack.c.l.b16 %v1370
    %v2477 = vunpack.c.h.b16 %v1370
    %v2478 = vunpack.c.l.b16 %v1371
    %v2479 = vunpack.c.h.b16 %v1371
    %v2480 = vunpack.c.l.b16 %v1372
    %v2481 = vunpack.c.h.b16 %v1372
    %v2482 = vunpack.c.l.b16 %v1373
    %v2483 = vunpack.c.h.b16 %v1373
    %v2484 = vunpack.c.l.b16 %v1374
    %v2485 = vunpack.c.h.b16 %v1374
    %v2486 = vunpack.c.l.b16 %v1375
    %v2487 = vunpack.c.h.b16 %v1375
    %v2488 = vunpack.c.l.b16 %v1376
    %v2489 = vunpack.c.h.b16 %v1376
    %v2490 = vunpack.c.l.b16 %v1377
    %v2491 = vunpack.c.h.b16 %v1377
    %v2492 = vunpack.c.l.b16 %v1378
    %v2493 = vunpack.c.h.b16 %v1378
    %v2494 = vunpack.c.l.b16 %v1379
    %v2495 = vunpack.c.h.b16 %v1379
    %v2496 = vunpack.c.l.b16 %v1380
    %v2497 = vunpack.c.h.b16 %v1380
    %v2498 = vunpack.c.l.b16 %v1381
    %v2499 = vunpack.c.h.b16 %v1381
    %v2500 = vunpack.c.l.b16 %v1382
    %v2501 = vunpack.c.h.b16 %v1382
    %v2502 = vunpack.c.l.b16 %v1383
    %v2503 = vunpack.c.h.b16 %v1383
    %v2504 = vunpack.c.l.b16 %v1384
    %v2505 = vunpack.c.h.b16 %v1384
    %v2506 = vunpack.c.l.b16 %v1385
    %v2507 = vunpack.c.h.b16 %v1385
    %v2508 = vunpack.c.l.b16 %v1386
    %v2509 = vunpack.c.h.b16 %v1386
    %v2510 = vunpack.c.l.b16 %v1387
    %v2511 = vunpack.c.h.b16 %v1387
    %v2512 = vunpack.c.l.b16 %v1388
    %v2513 = vunpack.c.h.b16 %v1388
    %v2514 = vunpack.c.l.b16 %v1389
    %v2515 = vunpack.c.h.b16 %v1389
    %v2516 = vunpack.c.l.b16 %v1390
    %v2517 = vunpack.c.h.b16 %v1390
    %v2518 = vunpack.c.l.b16 %v1391
    %v2519 = vunpack.c.h.b16 %v1391
    %v2520 = vunpack.c.l.b16 %v1392
    %v2521 = vunpack.c.h.b16 %v1392
    %v2522 = vunpack.c.l.b16 %v1393
    %v2523 = vunpack.c.h.b16 %v1393
    %v2524 = vunpack.c.l.b16 %v1394
    %v2525 = vunpack.c.h.b16 %v1394
    %v2526 = vunpack.c.l.b16 %v1395
    %v2527 = vunpack.c.h.b16 %v1395
    %v2528 = vunpack.c.l.b16 %v1396
    %v2529 = vunpack.c.h.b16 %v1396
    %v2530 = vunpack.c.l.b16 %v1397
    %v2531 = vunpack.c.h.b16 %v1397
    %v2532 = vunpack.c.l.b16 %v1398
    %v2533 = vunpack.c.h.b16 %v1398
    %v2534 = vunpack.c.l.b16 %v1399
    %v2535 = vunpack.c.h.b16 %v1399
    %v2536 = vunpack.c.l.b16 %v1400
    %v2537 = vunpack.c.h.b16 %v1400
    %v2538 = vunpack.c.l.b16 %v1401
    %v2539 = vunpack.c.h.b16 %v1401
    %v2540 = vunpack.c.l.b16 %v1402
    %v2541 = vunpack.c.h.b16 %v1402
    %v2542 = vunpack.c.l.b16 %v1403
    %v2543 = vunpack.c.h.b16 %v1403
    %v2544 = vunpack.c.l.b16 %v1404
    %v2545 = vunpack.c.h.b16 %v1404
    %v2546 = vunpack.c.l.b16 %v1405
    %v2547 = vunpack.c.h.b16 %v1405
    %v2548 = vunpack.c.l.b16 %v1406
    %v2549 = vunpack.c.h.b16 %v1406
    %v2550 = vunpack.c.l.b16 %v1407
    %v2551 = vunpack.c.h.b16 %v1407
    %v2552 = vunpack.c.l.b16 %v1408
    %v2553 = vunpack.c.h.b16 %v1408
    %v2554 = vunpack.c.l.b16 %v1409
    %v2555 = vunpack.c.h.b16 %v1409
    %v2556 = vunpack.c.l.b16 %v1410
    %v2557 = vunpack.c.h.b16 %v1410
    %v2558 = vunpack.c.l.b16 %v1411
    %v2559 = vunpack.c.h.b16 %v1411
    %v2560 = vunpack.c.l.b16 %v1412
    %v2561 = vunpack.c.h.b16 %v1412
    %v2562 = vunpack.c.l.b16 %v1413
    %v2563 = vunpack.c.h.b16 %v1413
    %v2564 = vunpack.c.l.b16 %v1414
    %v2565 = vunpack.c.h.b16 %v1414
    %v2566 = vunpack.c.l.b16 %v1415
    %v2567 = vunpack.c.h.b16 %v1415
    %v2568 = vunpack.c.l.b16 %v1416
    %v2569 = vunpack.c.h.b16 %v1416
    %v2570 = vunpack.c.l.b16 %v1417
    %v2571 = vunpack.c.h.b16 %v1417
    %v2572 = vunpack.c.l.b16 %v1418
    %v2573 = vunpack.c.h.b16 %v1418
    %v2574 = vunpack.c.l.b16 %v1419
    %v2575 = vunpack.c.h.b16 %v1419
    %v2576 = vunpack.c.l.b16 %v1420
    %v2577 = vunpack.c.h.b16 %v1420
    %v2578 = vunpack.c.l.b16 %v1421
    %v2579 = vunpack.c.h.b16 %v1421
    %v2580 = vunpack.c.l.b16 %v1422
    %v2581 = vunpack.c.h.b16 %v1422
    %v2582 = vunpack.c.l.b16 %v1423
    %v2583 = vunpack.c.h.b16 %v1423
    %v2584 = vunpack.c.l.b16 %v1424
    %v2585 = vunpack.c.h.b16 %v1424
    %v2586 = vunpack.c.l.b16 %v1425
    %v2587 = vunpack.c.h.b16 %v1425
    %v2588 = vunpack.c.l.b16 %v1426
    %v2589 = vunpack.c.h.b16 %v1426
    %v2590 = vunpack.c.l.b16 %v1427
    %v2591 = vunpack.c.h.b16 %v1427
    %v2592 = vunpack.c.l.b16 %v1428
    %v2593 = vunpack.c.h.b16 %v1428
    %v2594 = vunpack.c.l.b16 %v1429
    %v2595 = vunpack.c.h.b16 %v1429
    %v2596 = vunpack.c.l.b16 %v1430
    %v2597 = vunpack.c.h.b16 %v1430
    %v2598 = vunpack.c.l.b16 %v1431
    %v2599 = vunpack.c.h.b16 %v1431
    %v2600 = vunpack.c.l.b16 %v1432
    %v2601 = vunpack.c.h.b16 %v1432
    %v2602 = vunpack.c.l.b16 %v1433
    %v2603 = vunpack.c.h.b16 %v1433
    %v2604 = vunpack.c.l.b16 %v1434
    %v2605 = vunpack.c.h.b16 %v1434
    %v2606 = vunpack.c.l.b16 %v1435
    %v2607 = vunpack.c.h.b16 %v1435
    %v2608 = vunpack.c.l.b16 %v1436
    %v2609 = vunpack.c.h.b16 %v1436
    %v2610 = vunpack.c.l.b16 %v1437
    %v2611 = vunpack.c.h.b16 %v1437
    %v2612 = vunpack.c.l.b16 %v1438
    %v2613 = vunpack.c.h.b16 %v1438
    %v2614 = vunpack.c.l.b16 %v1439
    %v2615 = vunpack.c.h.b16 %v1439
    %v2616 = vunpack.c.l.b16 %v1440
    %v2617 = vunpack.c.h.b16 %v1440
    %v2618 = vunpack.c.l.b16 %v1441
    %v2619 = vunpack.c.h.b16 %v1441
    %v2620 = vunpack.c.l.b16 %v1442
    %v2621 = vunpack.c.h.b16 %v1442
    %v2622 = vunpack.c.l.b16 %v1443
    %v2623 = vunpack.c.h.b16 %v1443
    %v2624 = vunpack.c.l.b16 %v1444
    %v2625 = vunpack.c.h.b16 %v1444
    %v2626 = vunpack.c.l.b16 %v1445
    %v2627 = vunpack.c.h.b16 %v1445
    %v2628 = vunpack.c.l.b16 %v1446
    %v2629 = vunpack.c.h.b16 %v1446
    %v2630 = vunpack.c.l.b16 %v1447
    %v2631 = vunpack.c.h.b16 %v1447
    %v2632 = vunpack.c.l.b16 %v1448
    %v2633 = vunpack.c.h.b16 %v1448
    %v2634 = vunpack.c.l.b16 %v1449
    %v2635 = vunpack.c.h.b16 %v1449
    %v2636 = vunpack.c.l.b16 %v1450
    %v2637 = vunpack.c.h.b16 %v1450
    %v2638 = vunpack.c.l.b16 %v1451
    %v2639 = vunpack.c.h.b16 %v1451
    %v2640 = vunpack.c.l.b16 %v1452
    %v2641 = vunpack.c.h.b16 %v1452
    %v2642 = vunpack.c.l.b16 %v1453
    %v2643 = vunpack.c.h.b16 %v1453
    %v2644 = vunpack.c.l.b16 %v1454
    %v2645 = vunpack.c.h.b16 %v1454
    %v2646 = vunpack.c.l.b16 %v1455
    %v2647 = vunpack.c.h.b16 %v1455
    %v2648 = vunpack.c.l.b16 %v1456
    %v2649 = vunpack.c.h.b16 %v1456
    %v2650 = vunpack.c.l.b16 %v1457
    %v2651 = vunpack.c.h.b16 %v1457
    %v2652 = vunpack.c.l.b16 %v1458
    %v2653 = vunpack.c.h.b16 %v1458
    %v2654 = vunpack.c.l.b16 %v1459
    %v2655 = vunpack.c.h.b16 %v1459
    %v2656 = vunpack.c.l.b16 %v1460
    %v2657 = vunpack.c.h.b16 %v1460
    %v2658 = vunpack.c.l.b16 %v1461
    %v2659 = vunpack.c.h.b16 %v1461
    %v2660 = vunpack.c.l.b16 %v1462
    %v2661 = vunpack.c.h.b16 %v1462
    %v2662 = vunpack.c.l.b16 %v1463
    %v2663 = vunpack.c.h.b16 %v1463
    %v2664 = vunpack.c.l.b16 %v1464
    %v2665 = vunpack.c.h.b16 %v1464
    %v2666 = vunpack.c.l.b16 %v1465
    %v2667 = vunpack.c.h.b16 %v1465
    %v2668 = vunpack.c.l.b16 %v1466
    %v2669 = vunpack.c.h.b16 %v1466
    %v2670 = vunpack.c.l.b16 %v1467
    %v2671 = vunpack.c.h.b16 %v1467
    %v2672 = vunpack.c.l.b16 %v1468
    %v2673 = vunpack.c.h.b16 %v1468
    %v2674 = vunpack.c.l.b16 %v1469
    %v2675 = vunpack.c.h.b16 %v1469
    %v2676 = vunpack.c.l.b16 %v1470
    %v2677 = vunpack.c.h.b16 %v1470
    %v2678 = vunpack.c.l.b16 %v1471
    %v2679 = vunpack.c.h.b16 %v1471
    %v2680 = vunpack.c.l.b16 %v1472
    %v2681 = vunpack.c.h.b16 %v1472
    %v2682 = vunpack.c.l.b16 %v1473
    %v2683 = vunpack.c.h.b16 %v1473
    %v2684 = vunpack.c.l.b16 %v1474
    %v2685 = vunpack.c.h.b16 %v1474
    %v2686 = vunpack.c.l.b16 %v1475
    %v2687 = vunpack.c.h.b16 %v1475
    %v2688 = vunpack.c.l.b16 %v1476
    %v2689 = vunpack.c.h.b16 %v1476
    %v2690 = vunpack.c.l.b16 %v1477
    %v2691 = vunpack.c.h.b16 %v1477
    %v2692 = vunpack.c.l.b16 %v1478
    %v2693 = vunpack.c.h.b16 %v1478
    %v2694 = vunpack.c.l.b16 %v1479
    %v2695 = vunpack.c.h.b16 %v1479
    %v2696 = vunpack.c.l.b16 %v1480
    %v2697 = vunpack.c.h.b16 %v1480
    %v2698 = vunpack.c.l.b16 %v1481
    %v2699 = vunpack.c.h.b16 %v1481
    %v2700 = vunpack.c.l.b16 %v1482
    %v2701 = vunpack.c.h.b16 %v1482
    %v2702 = vunpack.c.l.b16 %v1483
    %v2703 = vunpack.c.h.b16 %v1483
    %v2704 = vunpack.c.l.b16 %v1484
    %v2705 = vunpack.c.h.b16 %v1484
    %v2706 = vunpack.c.l.b16 %v1485
    %v2707 = vunpack.c.h.b16 %v1485
    %v2708 = vunpack.c.l.b16 %v1486
    %v2709 = vunpack.c.h.b16 %v1486
    %v2710 = vunpack.c.l.b16 %v1487
    %v2711 = vunpack.c.h.b16 %v1487
    %v2712 = vunpack.c.l.b16 %v1488
    %v2713 = vunpack.c.h.b16 %v1488
    %v2714 = vunpack.c.l.b16 %v1489
    %v2715 = vunpack.c.h.b16 %v1489
    %v2716 = vunpack.c.l.b16 %v1490
    %v2717 = vunpack.c.h.b16 %v1490
    %v2718 = vunpack.c.l.b16 %v1491
    %v2719 = vunpack.c.h.b16 %v1491
    %v2720 = vunpack.c.l.b16 %v1492
    %v2721 = vunpack.c.h.b16 %v1492
    %v2722 = vunpack.c.l.b16 %v1493
    %v2723 = vunpack.c.h.b16 %v1493
    %v2724 = vunpack.c.l.b16 %v1494
    %v2725 = vunpack.c.h.b16 %v1494
    %v2726 = vunpack.c.l.b16 %v1495
    %v2727 = vunpack.c.h.b16 %v1495
    %v2728 = vunpack.c.l.b16 %v1496
    %v2729 = vunpack.c.h.b16 %v1496
    %v2730 = vunpack.c.l.b16 %v1497
    %v2731 = vunpack.c.h.b16 %v1497
    %v2732 = vunpack.c.l.b16 %v1498
    %v2733 = vunpack.c.h.b16 %v1498
    %v2734 = vunpack.c.l.b16 %v1499
    %v2735 = vunpack.c.h.b16 %v1499
    %v2736 = vunpack.c.l.b16 %v1500
    %v2737 = vunpack.c.h.b16 %v1500
    %v2738 = vunpack.c.l.b16 %v1501
    %v2739 = vunpack.c.h.b16 %v1501
    %v2740 = vunpack.c.l.b16 %v1502
    %v2741 = vunpack.c.h.b16 %v1502
    %v2742 = vunpack.c.l.b16 %v1503
    %v2743 = vunpack.c.h.b16 %v1503
    %v2744 = vunpack.c.l.b16 %v1504
    %v2745 = vunpack.c.h.b16 %v1504
    %v2746 = vunpack.c.l.b16 %v1505
    %v2747 = vunpack.c.h.b16 %v1505
    %v2748 = vunpack.c.l.b16 %v1506
    %v2749 = vunpack.c.h.b16 %v1506
    %v2750 = vunpack.c.l.b16 %v1507
    %v2751 = vunpack.c.h.b16 %v1507
    %v2752 = vunpack.c.l.b16 %v1508
    %v2753 = vunpack.c.h.b16 %v1508
    %v2754 = vunpack.c.l.b16 %v1509
    %v2755 = vunpack.c.h.b16 %v1509
    %v2756 = vunpack.c.l.b16 %v1510
    %v2757 = vunpack.c.h.b16 %v1510
    %v2758 = vunpack.c.l.b16 %v1511
    %v2759 = vunpack.c.h.b16 %v1511
    %v2760 = vunpack.c.l.b16 %v1512
    %v2761 = vunpack.c.h.b16 %v1512
    %v2762 = vunpack.c.l.b16 %v1513
    %v2763 = vunpack.c.h.b16 %v1513
    %v2764 = vunpack.c.l.b16 %v1514
    %v2765 = vunpack.c.h.b16 %v1514
    %v2766 = vunpack.c.l.b16 %v1515
    %v2767 = vunpack.c.h.b16 %v1515
    %v2768 = vunpack.c.l.b16 %v1516
    %v2769 = vunpack.c.h.b16 %v1516
    %v2770 = vunpack.c.l.b16 %v1517
    %v2771 = vunpack.c.h.b16 %v1517
    %v2772 = vunpack.c.l.b16 %v1518
    %v2773 = vunpack.c.h.b16 %v1518
    %v2774 = vunpack.c.l.b16 %v1519
    %v2775 = vunpack.c.h.b16 %v1519
    %v2776 = vunpack.c.l.b16 %v1520
    %v2777 = vunpack.c.h.b16 %v1520
    %v2778 = vunpack.c.l.b16 %v1521
    %v2779 = vunpack.c.h.b16 %v1521
    %v2780 = vunpack.c.l.b16 %v1522
    %v2781 = vunpack.c.h.b16 %v1522
    %v2782 = vunpack.c.l.b16 %v1523
    %v2783 = vunpack.c.h.b16 %v1523
    %v2784 = vunpack.c.l.b16 %v1524
    %v2785 = vunpack.c.h.b16 %v1524
    %v2786 = vunpack.c.l.b16 %v1525
    %v2787 = vunpack.c.h.b16 %v1525
    %v2788 = vunpack.c.l.b16 %v1526
    %v2789 = vunpack.c.h.b16 %v1526
    %v2790 = vunpack.c.l.b16 %v1527
    %v2791 = vunpack.c.h.b16 %v1527
    %v2792 = vunpack.c.l.b16 %v1528
    %v2793 = vunpack.c.h.b16 %v1528
    %v2794 = vunpack.c.l.b16 %v1529
    %v2795 = vunpack.c.h.b16 %v1529
    %v2796 = vunpack.c.l.b16 %v1530
    %v2797 = vunpack.c.h.b16 %v1530
    %v2798 = vunpack.c.l.b16 %v1531
    %v2799 = vunpack.c.h.b16 %v1531
    %v2800 = vunpack.c.l.b16 %v1532
    %v2801 = vunpack.c.h.b16 %v1532
    %v2802 = vunpack.c.l.b16 %v1533
    %v2803 = vunpack.c.h.b16 %v1533
    %v2804 = vunpack.c.l.b16 %v1534
    %v2805 = vunpack.c.h.b16 %v1534
    %v2806 = vunpack.c.l.b16 %v1535
    %v2807 = vunpack.c.h.b16 %v1535
    %v2808 = vunpack.c.l.b16 %v1536
    %v2809 = vunpack.c.h.b16 %v1536
    %v2810 = vunpack.c.l.b16 %v1537
    %v2811 = vunpack.c.h.b16 %v1537
    %v2812 = vunpack.c.l.b16 %v1538
    %v2813 = vunpack.c.h.b16 %v1538
    %v2814 = vunpack.c.l.b16 %v1539
    %v2815 = vunpack.c.h.b16 %v1539
    %v2816 = vunpack.c.l.b16 %v1540
    %v2817 = vunpack.c.h.b16 %v1540
    %v2818 = vunpack.c.l.b16 %v1541
    %v2819 = vunpack.c.h.b16 %v1541
    %v2820 = vunpack.c.l.b16 %v1542
    %v2821 = vunpack.c.h.b16 %v1542
    %v2822 = vunpack.c.l.b16 %v1543
    %v2823 = vunpack.c.h.b16 %v1543
    %v2824 = vunpack.c.l.b16 %v1544
    %v2825 = vunpack.c.h.b16 %v1544
    %v2826 = vunpack.c.l.b16 %v1545
    %v2827 = vunpack.c.h.b16 %v1545
    %v2828 = vunpack.c.l.b16 %v1546
    %v2829 = vunpack.c.h.b16 %v1546
    %v2830 = vunpack.c.l.b16 %v1547
    %v2831 = vunpack.c.h.b16 %v1547
    %v2832 = vunpack.c.l.b16 %v1548
    %v2833 = vunpack.c.h.b16 %v1548
    %v2834 = vunpack.c.l.b16 %v1549
    %v2835 = vunpack.c.h.b16 %v1549
    %v2836 = vunpack.c.l.b16 %v1550
    %v2837 = vunpack.c.h.b16 %v1550
    %v2838 = vunpack.c.l.b16 %v1551
    %v2839 = vunpack.c.h.b16 %v1551
    %v2840 = vunpack.c.l.b16 %v1552
    %v2841 = vunpack.c.h.b16 %v1552
    %v2842 = vunpack.c.l.b16 %v1553
    %v2843 = vunpack.c.h.b16 %v1553
    %v2844 = vunpack.c.l.b16 %v1554
    %v2845 = vunpack.c.h.b16 %v1554
    %v2846 = vunpack.c.l.b16 %v1555
    %v2847 = vunpack.c.h.b16 %v1555
    %v2848 = vunpack.c.l.b16 %v1556
    %v2849 = vunpack.c.h.b16 %v1556
    %v2850 = vunpack.c.l.b16 %v1557
    %v2851 = vunpack.c.h.b16 %v1557
    %v2852 = vunpack.c.l.b16 %v1558
    %v2853 = vunpack.c.h.b16 %v1558
    %v2854 = vunpack.c.l.b16 %v1559
    %v2855 = vunpack.c.h.b16 %v1559
    %v2856 = vunpack.c.l.b16 %v1560
    %v2857 = vunpack.c.h.b16 %v1560
    %v2858 = vunpack.c.l.b16 %v1561
    %v2859 = vunpack.c.h.b16 %v1561
    %v2860 = vunpack.c.l.b16 %v1562
    %v2861 = vunpack.c.h.b16 %v1562
    %v2862 = vunpack.c.l.b16 %v1563
    %v2863 = vunpack.c.h.b16 %v1563
    %v2864 = vunpack.c.l.b16 %v1564
    %v2865 = vunpack.c.h.b16 %v1564
    %v2866 = vunpack.c.l.b16 %v1565
    %v2867 = vunpack.c.h.b16 %v1565
    %v2868 = vunpack.c.l.b16 %v1566
    %v2869 = vunpack.c.h.b16 %v1566
    %v2870 = vunpack.c.l.b16 %v1567
    %v2871 = vunpack.c.h.b16 %v1567
    %v2872 = vunpack.c.l.b16 %v1568
    %v2873 = vunpack.c.h.b16 %v1568
    %v2874 = vunpack.c.l.b16 %v1569
    %v2875 = vunpack.c.h.b16 %v1569
    %v2876 = vunpack.c.l.b16 %v1570
    %v2877 = vunpack.c.h.b16 %v1570
    %v2878 = vunpack.c.l.b16 %v1571
    %v2879 = vunpack.c.h.b16 %v1571
    %v2880 = vunpack.c.l.b16 %v1572
    %v2881 = vunpack.c.h.b16 %v1572
    %v2882 = vunpack.c.l.b16 %v1573
    %v2883 = vunpack.c.h.b16 %v1573
    %v2884 = vunpack.c.l.b16 %v1574
    %v2885 = vunpack.c.h.b16 %v1574
    %v2886 = vunpack.c.l.b16 %v1575
    %v2887 = vunpack.c.h.b16 %v1575
    %v2888 = vunpack.c.l.b16 %v1576
    %v2889 = vunpack.c.h.b16 %v1576
    %v2890 = vunpack.c.l.b16 %v1577
    %v2891 = vunpack.c.h.b16 %v1577
    %v2892 = vunpack.c.l.b16 %v1578
    %v2893 = vunpack.c.h.b16 %v1578
    %v2894 = vunpack.c.l.b16 %v1579
    %v2895 = vunpack.c.h.b16 %v1579
    %v2896 = vunpack.c.l.b16 %v1580
    %v2897 = vunpack.c.h.b16 %v1580
    %v2898 = vunpack.c.l.b16 %v1581
    %v2899 = vunpack.c.h.b16 %v1581
    %v2900 = vunpack.c.l.b16 %v1582
    %v2901 = vunpack.c.h.b16 %v1582
    %v2902 = vunpack.c.l.b16 %v1583
    %v2903 = vunpack.c.h.b16 %v1583
    %v2904 = vunpack.c.l.b16 %v1584
    %v2905 = vunpack.c.h.b16 %v1584
    %v2906 = vunpack.c.l.b16 %v1585
    %v2907 = vunpack.c.h.b16 %v1585
    %v2908 = vunpack.c.l.b16 %v1586
    %v2909 = vunpack.c.h.b16 %v1586
    %v2910 = vunpack.c.l.b16 %v1587
    %v2911 = vunpack.c.h.b16 %v1587
    %v2912 = vunpack.c.l.b16 %v1588
    %v2913 = vunpack.c.h.b16 %v1588
    %v2914 = vunpack.c.l.b16 %v1589
    %v2915 = vunpack.c.h.b16 %v1589
    %v2916 = vunpack.c.l.b16 %v1590
    %v2917 = vunpack.c.h.b16 %v1590
    %v2918 = vunpack.c.l.b16 %v1591
    %v2919 = vunpack.c.h.b16 %v1591
    %v2920 = vunpack.c.l.b16 %v1592
    %v2921 = vunpack.c.h.b16 %v1592
    %v2922 = vunpack.c.l.b16 %v1593
    %v2923 = vunpack.c.h.b16 %v1593
    %v2924 = vunpack.c.l.b16 %v1594
    %v2925 = vunpack.c.h.b16 %v1594
    %v2926 = vunpack.c.l.b16 %v1595
    %v2927 = vunpack.c.h.b16 %v1595
    %v2928 = vunpack.c.l.b16 %v1596
    %v2929 = vunpack.c.h.b16 %v1596
    %v2930 = vunpack.c.l.b16 %v1597
    %v2931 = vunpack.c.h.b16 %v1597
    %v2932 = vunpack.c.l.b16 %v1598
    %v2933 = vunpack.c.h.b16 %v1598
    %v2934 = vunpack.c.l.b16 %v1599
    %v2935 = vunpack.c.h.b16 %v1599
    %v2936 = vunpack.c.l.b16 %v1600
    %v2937 = vunpack.c.h.b16 %v1600
    %v2938 = vunpack.c.l.b16 %v1601
    %v2939 = vunpack.c.h.b16 %v1601
    %v2940 = vunpack.c.l.b16 %v1602
    %v2941 = vunpack.c.h.b16 %v1602
    %v2942 = vunpack.c.l.b16 %v1603
    %v2943 = vunpack.c.h.b16 %v1603
    %v2944 = vunpack.c.l.b16 %v1604
    %v2945 = vunpack.c.h.b16 %v1604
    %v2946 = vunpack.c.l.b16 %v1605
    %v2947 = vunpack.c.h.b16 %v1605
    %v2948 = vunpack.c.l.b16 %v1606
    %v2949 = vunpack.c.h.b16 %v1606
    %v2950 = vunpack.c.l.b16 %v1607
    %v2951 = vunpack.c.h.b16 %v1607
    %v2952 = vunpack.c.l.b16 %v1608
    %v2953 = vunpack.c.h.b16 %v1608
    %v2954 = vunpack.c.l.b16 %v1609
    %v2955 = vunpack.c.h.b16 %v1609
    %v2956 = vunpack.c.l.b16 %v1610
    %v2957 = vunpack.c.h.b16 %v1610
    %v2958 = vunpack.c.l.b16 %v1611
    %v2959 = vunpack.c.h.b16 %v1611
    %v2960 = vunpack.c.l.b16 %v1612
    %v2961 = vunpack.c.h.b16 %v1612
    %v2962 = vunpack.c.l.b16 %v1613
    %v2963 = vunpack.c.h.b16 %v1613
    %v2964 = vunpack.c.l.b16 %v1614
    %v2965 = vunpack.c.h.b16 %v1614
    %v2966 = vunpack.c.l.b16 %v1615
    %v2967 = vunpack.c.h.b16 %v1615
    %v2968 = vunpack.c.l.b16 %v1616
    %v2969 = vunpack.c.h.b16 %v1616
    %v2970 = vunpack.c.l.b16 %v1617
    %v2971 = vunpack.c.h.b16 %v1617
    %v2972 = vunpack.c.l.b16 %v1618
    %v2973 = vunpack.c.h.b16 %v1618
    %v2974 = vunpack.c.l.b16 %v1619
    %v2975 = vunpack.c.h.b16 %v1619
    %v2976 = vunpack.c.l.b16 %v1620
    %v2977 = vunpack.c.h.b16 %v1620
    %v2978 = vunpack.c.l.b16 %v1621
    %v2979 = vunpack.c.h.b16 %v1621
    %v2980 = vunpack.c.l.b16 %v1622
    %v2981 = vunpack.c.h.b16 %v1622
    %v2982 = vunpack.c.l.b16 %v1623
    %v2983 = vunpack.c.h.b16 %v1623
    %v2984 = vunpack.c.l.b16 %v1624
    %v2985 = vunpack.c.h.b16 %v1624
    %v2986 = vunpack.c.l.b16 %v1625
    %v2987 = vunpack.c.h.b16 %v1625
    %v2988 = vunpack.c.l.b16 %v1626
    %v2989 = vunpack.c.h.b16 %v1626
    %v2990 = vunpack.c.l.b16 %v1627
    %v2991 = vunpack.c.h.b16 %v1627
    %v2992 = vunpack.c.l.b16 %v1628
    %v2993 = vunpack.c.h.b16 %v1628
    %v2994 = vunpack.c.l.b16 %v1629
    %v2995 = vunpack.c.h.b16 %v1629
    %v2996 = vunpack.c.l.b16 %v1630
    %v2997 = vunpack.c.h.b16 %v1630
    %v2998 = vunpack.c.l.b16 %v1631
    %v2999 = vunpack.c.h.b16 %v1631
    %v3000 = vunpack.c.l.b16 %v1632
    %v3001 = vunpack.c.h.b16 %v1632
    %v3002 = vunpack.c.l.b16 %v1633
    %v3003 = vunpack.c.h.b16 %v1633
    %v3004 = vunpack.c.l.b16 %v1634
    %v3005 = vunpack.c.h.b16 %v1634
    %v3006 = vunpack.c.l.b16 %v1635
    %v3007 = vunpack.c.h.b16 %v1635
    %v3008 = vunpack.c.l.b16 %v1636
    %v3009 = vunpack.c.h.b16 %v1636
    %v3010 = vunpack.c.l.b16 %v1637
    %v3011 = vunpack.c.h.b16 %v1637
    %v3012 = vunpack.c.l.b16 %v1638
    %v3013 = vunpack.c.h.b16 %v1638
    %v3014 = vunpack.c.l.b16 %v1639
    %v3015 = vunpack.c.h.b16 %v1639
    %v3016 = vunpack.c.l.b16 %v1640
    %v3017 = vunpack.c.h.b16 %v1640
    %v3018 = vunpack.c.l.b16 %v1641
    %v3019 = vunpack.c.h.b16 %v1641
    %v3020 = vunpack.c.l.b16 %v1642
    %v3021 = vunpack.c.h.b16 %v1642
    %v3022 = vunpack.c.l.b16 %v1643
    %v3023 = vunpack.c.h.b16 %v1643
    %v3024 = vunpack.c.l.b16 %v1644
    %v3025 = vunpack.c.h.b16 %v1644
    %v3026 = vunpack.c.l.b16 %v1645
    %v3027 = vunpack.c.h.b16 %v1645
    %v3028 = vunpack.c.l.b16 %v1646
    %v3029 = vunpack.c.h.b16 %v1646
    %v3030 = vunpack.c.l.b16 %v1647
    %v3031 = vunpack.c.h.b16 %v1647
    %v3032 = vunpack.c.l.b16 %v1648
    %v3033 = vunpack.c.h.b16 %v1648
    %v3034 = vunpack.c.l.b16 %v1649
    %v3035 = vunpack.c.h.b16 %v1649
    %v3036 = vunpack.c.l.b16 %v1650
    %v3037 = vunpack.c.h.b16 %v1650
    %v3038 = vunpack.c.l.b16 %v1651
    %v3039 = vunpack.c.h.b16 %v1651
    %v3040 = vunpack.c.l.b16 %v1652
    %v3041 = vunpack.c.h.b16 %v1652
    %v3042 = vunpack.c.l.b16 %v1653
    %v3043 = vunpack.c.h.b16 %v1653
    %v3044 = vunpack.c.l.b16 %v1654
    %v3045 = vunpack.c.h.b16 %v1654
    %v3046 = vunpack.c.l.b16 %v1655
    %v3047 = vunpack.c.h.b16 %v1655
    %v3048 = vunpack.c.l.b16 %v1656
    %v3049 = vunpack.c.h.b16 %v1656
    %v3050 = vunpack.c.l.b16 %v1657
    %v3051 = vunpack.c.h.b16 %v1657
    %v3052 = vunpack.c.l.b16 %v1658
    %v3053 = vunpack.c.h.b16 %v1658
    %v3054 = vunpack.c.l.b16 %v1659
    %v3055 = vunpack.c.h.b16 %v1659
    %v3056 = vunpack.c.l.b16 %v1660
    %v3057 = vunpack.c.h.b16 %v1660
    %v3058 = vunpack.c.l.b16 %v1661
    %v3059 = vunpack.c.h.b16 %v1661
    %v3060 = vunpack.c.l.b16 %v1662
    %v3061 = vunpack.c.h.b16 %v1662
    %v3062 = vunpack.c.l.b16 %v1663
    %v3063 = vunpack.c.h.b16 %v1663
    %v3064 = vunpack.c.l.b16 %v1664
    %v3065 = vunpack.c.h.b16 %v1664
    %v3066 = vunpack.c.l.b16 %v1665
    %v3067 = vunpack.c.h.b16 %v1665
    %v3068 = vunpack.c.l.b16 %v1666
    %v3069 = vunpack.c.h.b16 %v1666
    %v3070 = vunpack.c.l.b16 %v1667
    %v3071 = vunpack.c.h.b16 %v1667
    %v3072 = vunpack.c.l.b16 %v1668
    %v3073 = vunpack.c.h.b16 %v1668
    %v3074 = vunpack.c.l.b16 %v1669
    %v3075 = vunpack.c.h.b16 %v1669
    %v3076 = vunpack.c.l.b16 %v1670
    %v3077 = vunpack.c.h.b16 %v1670
    %v3078 = vunpack.c.l.b16 %v1671
    %v3079 = vunpack.c.h.b16 %v1671
    %v3080 = vunpack.c.l.b16 %v1672
    %v3081 = vunpack.c.h.b16 %v1672
    %v3082 = vunpack.c.l.b16 %v1673
    %v3083 = vunpack.c.h.b16 %v1673
    %v3084 = vunpack.c.l.b16 %v1674
    %v3085 = vunpack.c.h.b16 %v1674
    %v3086 = vunpack.c.l.b16 %v1675
    %v3087 = vunpack.c.h.b16 %v1675
    %v3088 = vunpack.c.l.b16 %v1676
    %v3089 = vunpack.c.h.b16 %v1676
    %v3090 = vunpack.c.l.b16 %v1677
    %v3091 = vunpack.c.h.b16 %v1677
    %v3092 = vunpack.c.l.b16 %v1678
    %v3093 = vunpack.c.h.b16 %v1678
    %v3094 = vunpack.c.l.b16 %v1679
    %v3095 = vunpack.c.h.b16 %v1679
    %v3096 = vunpack.c.l.b16 %v1680
    %v3097 = vunpack.c.h.b16 %v1680
    %v3098 = vunpack.c.l.b16 %v1681
    %v3099 = vunpack.c.h.b16 %v1681
    %v3100 = vunpack.c.l.b16 %v1682
    %v3101 = vunpack.c.h.b16 %v1682
    %v3102 = vunpack.c.l.b16 %v1683
    %v3103 = vunpack.c.h.b16 %v1683
    %v3104 = vunpack.c.l.b16 %v1684
    %v3105 = vunpack.c.h.b16 %v1684
    %v3106 = vunpack.c.l.b16 %v1685
    %v3107 = vunpack.c.h.b16 %v1685
    %v3108 = vunpack.c.l.b16 %v1686
    %v3109 = vunpack.c.h.b16 %v1686
    %v3110 = vunpack.c.l.b16 %v1687
    %v3111 = vunpack.c.h.b16 %v1687
    %v3112 = vunpack.c.l.b16 %v1688
    %v3113 = vunpack.c.h.b16 %v1688
    %v3114 = vunpack.c.l.b16 %v1689
    %v3115 = vunpack.c.h.b16 %v1689
    %v3116 = vunpack.c.l.b16 %v1690
    %v3117 = vunpack.c.h.b16 %v1690
    %v3118 = vunpack.c.l.b16 %v1691
    %v3119 = vunpack.c.h.b16 %v1691
    %v3120 = vunpack.c.l.b16 %v1692
    %v3121 = vunpack.c.h.b16 %v1692
    %v3122 = vunpack.c.l.b16 %v1693
    %v3123 = vunpack.c.h.b16 %v1693
    %v3124 = vunpack.c.l.b16 %v1694
    %v3125 = vunpack.c.h.b16 %v1694
    %v3126 = vunpack.c.l.b16 %v1695
    %v3127 = vunpack.c.h.b16 %v1695
    %v3128 = vunpack.c.l.b16 %v1696
    %v3129 = vunpack.c.h.b16 %v1696
    %v3130 = vunpack.c.l.b16 %v1697
    %v3131 = vunpack.c.h.b16 %v1697
    %v3132 = vunpack.c.l.b16 %v1698
    %v3133 = vunpack.c.h.b16 %v1698
    %v3134 = vunpack.c.l.b16 %v1699
    %v3135 = vunpack.c.h.b16 %v1699
    %v3136 = vunpack.c.l.b16 %v1700
    %v3137 = vunpack.c.h.b16 %v1700
    %v3138 = vunpack.c.l.b16 %v1701
    %v3139 = vunpack.c.h.b16 %v1701
    %v3140 = vunpack.c.l.b16 %v1702
    %v3141 = vunpack.c.h.b16 %v1702
    %v3142 = vunpack.c.l.b16 %v1703
    %v3143 = vunpack.c.h.b16 %v1703
    %v3144 = vunpack.c.l.b16 %v1704
    %v3145 = vunpack.c.h.b16 %v1704
    %v3146 = vunpack.c.l.b16 %v1705
    %v3147 = vunpack.c.h.b16 %v1705
    %v3148 = vunpack.c.l.b16 %v1706
    %v3149 = vunpack.c.h.b16 %v1706
    %v3150 = vunpack.c.l.b16 %v1707
    %v3151 = vunpack.c.h.b16 %v1707
    %v3152 = vunpack.c.l.b16 %v1708
    %v3153 = vunpack.c.h.b16 %v1708
    %v3154 = vunpack.c.l.b16 %v1709
    %v3155 = vunpack.c.h.b16 %v1709
    %v3156 = vunpack.c.l.b16 %v1710
    %v3157 = vunpack.c.h.b16 %v1710
    %v3158 = vunpack.c.l.b16 %v1711
    %v3159 = vunpack.c.h.b16 %v1711
    %v3160 = vunpack.c.l.b16 %v1712
    %v3161 = vunpack.c.h.b16 %v1712
    %v3162 = vunpack.c.l.b16 %v1713
    %v3163 = vunpack.c.h.b16 %v1713
    %v3164 = vunpack.c.l.b16 %v1714
    %v3165 = vunpack.c.h.b16 %v1714
    %v3166 = vunpack.c.l.b16 %v1715
    %v3167 = vunpack.c.h.b16 %v1715
    %v3168 = vunpack.c.l.b16 %v1716
    %v3169 = vunpack.c.h.b16 %v1716
    %v3170 = vunpack.c.l.b16 %v1717
    %v3171 = vunpack.c.h.b16 %v1717
    %v3172 = vunpack.c.l.b16 %v1718
    %v3173 = vunpack.c.h.b16 %v1718
    %v3174 = vunpack.c.l.b16 %v1719
    %v3175 = vunpack.c.h.b16 %v1719
    %v3176 = vunpack.c.l.b16 %v1720
    %v3177 = vunpack.c.h.b16 %v1720
    %v3178 = vunpack.c.l.b16 %v1721
    %v3179 = vunpack.c.h.b16 %v1721
    %v3180 = vunpack.c.l.b16 %v1722
    %v3181 = vunpack.c.h.b16 %v1722
    %v3182 = vunpack.c.l.b16 %v1723
    %v3183 = vunpack.c.h.b16 %v1723
    %v3184 = vunpack.c.l.b16 %v1724
    %v3185 = vunpack.c.h.b16 %v1724
    %v3186 = vunpack.c.l.b16 %v1725
    %v3187 = vunpack.c.h.b16 %v1725
    %v3188 = vunpack.c.l.b16 %v1726
    %v3189 = vunpack.c.h.b16 %v1726
    %v3190 = vunpack.c.l.b16 %v1727
    %v3191 = vunpack.c.h.b16 %v1727
    %v3192 = vunpack.c.l.b16 %v1728
    %v3193 = vunpack.c.h.b16 %v1728
    %v3194 = vunpack.c.l.b16 %v1729
    %v3195 = vunpack.c.h.b16 %v1729
    %v3196 = vunpack.c.l.b16 %v1730
    %v3197 = vunpack.c.h.b16 %v1730
    %v3198 = vunpack.c.l.b16 %v1731
    %v3199 = vunpack.c.h.b16 %v1731
    %v3200 = vunpack.c.l.b16 %v1732
    %v3201 = vunpack.c.h.b16 %v1732
    %v3202 = vunpack.c.l.b16 %v1733
    %v3203 = vunpack.c.h.b16 %v1733
    %v3204 = vunpack.c.l.b16 %v1734
    %v3205 = vunpack.c.h.b16 %v1734
    %v3206 = vunpack.c.l.b16 %v1735
    %v3207 = vunpack.c.h.b16 %v1735
    %v3208 = vunpack.c.l.b16 %v1736
    %v3209 = vunpack.c.h.b16 %v1736
    %v3210 = vunpack.c.l.b16 %v1737
    %v3211 = vunpack.c.h.b16 %v1737
    %v3212 = vunpack.c.l.b16 %v1738
    %v3213 = vunpack.c.h.b16 %v1738
    %v3214 = vunpack.c.l.b16 %v1739
    %v3215 = vunpack.c.h.b16 %v1739
    %v3216 = vunpack.c.l.b16 %v1740
    %v3217 = vunpack.c.h.b16 %v1740
    %v3218 = vunpack.c.l.b16 %v1741
    %v3219 = vunpack.c.h.b16 %v1741
    %v3220 = vunpack.c.l.b16 %v1742
    %v3221 = vunpack.c.h.b16 %v1742
    %v3222 = vunpack.c.l.b16 %v1743
    %v3223 = vunpack.c.h.b16 %v1743
    %v3224 = vunpack.c.l.b16 %v1744
    %v3225 = vunpack.c.h.b16 %v1744
    %v3226 = vunpack.c.l.b16 %v1745
    %v3227 = vunpack.c.h.b16 %v1745
    %v3228 = vunpack.c.l.b16 %v1746
    %v3229 = vunpack.c.h.b16 %v1746
    %v3230 = vunpack.c.l.b16 %v1747
    %v3231 = vunpack.c.h.b16 %v1747
    %v3232 = vunpack.c.l.b16 %v1748
    %v3233 = vunpack.c.h.b16 %v1748
    %v3234 = vunpack.c.l.b16 %v1749
    %v3235 = vunpack.c.h.b16 %v1749
    %v3236 = vunpack.c.l.b16 %v1750
    %v3237 = vunpack.c.h.b16 %v1750
    %v3238 = vunpack.c.l.b16 %v1751
    %v3239 = vunpack.c.h.b16 %v1751
    %v3240 = vunpack.c.l.b16 %v1752
    %v3241 = vunpack.c.h.b16 %v1752
    %v3242 = vunpack.c.l.b16 %v1753
    %v3243 = vunpack.c.h.b16 %v1753
    %v3244 = vunpack.c.l.b16 %v1754
    %v3245 = vunpack.c.h.b16 %v1754
    %v3246 = vunpack.c.l.b16 %v1755
    %v3247 = vunpack.c.h.b16 %v1755
    %v3248 = vunpack.c.l.b16 %v1756
    %v3249 = vunpack.c.h.b16 %v1756
    %v3250 = vunpack.c.l.b16 %v1757
    %v3251 = vunpack.c.h.b16 %v1757
    %v3252 = vunpack.c.l.b16 %v1758
    %v3253 = vunpack.c.h.b16 %v1758
    %v3254 = vunpack.c.l.b16 %v1759
    %v3255 = vunpack.c.h.b16 %v1759
    %v3256 = vunpack.c.l.b16 %v1760
    %v3257 = vunpack.c.h.b16 %v1760
    %v3258 = vunpack.c.l.b16 %v1761
    %v3259 = vunpack.c.h.b16 %v1761
    %v3260 = vunpack.c.l.b16 %v1762
    %v3261 = vunpack.c.h.b16 %v1762
    %v3262 = vunpack.c.l.b16 %v1763
    %v3263 = vunpack.c.h.b16 %v1763
    %v3264 = vunpack.c.l.b16 %v1764
    %v3265 = vunpack.c.h.b16 %v1764
    %v3266 = vunpack.c.l.b16 %v1765
    %v3267 = vunpack.c.h.b16 %v1765
    %v3268 = vunpack.c.l.b16 %v1766
    %v3269 = vunpack.c.h.b16 %v1766
    %v3270 = vunpack.c.l.b16 %v1767
    %v3271 = vunpack.c.h.b16 %v1767
    %v3272 = vunpack.c.l.b16 %v1768
    %v3273 = vunpack.c.h.b16 %v1768
    %v3274 = vunpack.c.l.b16 %v1769
    %v3275 = vunpack.c.h.b16 %v1769
    %v3276 = vunpack.c.l.b16 %v1770
    %v3277 = vunpack.c.h.b16 %v1770
    %v3278 = vunpack.c.l.b16 %v1771
    %v3279 = vunpack.c.h.b16 %v1771
    %v3280 = vunpack.c.l.b16 %v1772
    %v3281 = vunpack.c.h.b16 %v1772
    %v3282 = vunpack.c.l.b16 %v1773
    %v3283 = vunpack.c.h.b16 %v1773
    %v3284 = vunpack.c.l.b16 %v1774
    %v3285 = vunpack.c.h.b16 %v1774
    %v3286 = vunpack.c.l.b16 %v1775
    %v3287 = vunpack.c.h.b16 %v1775
    %v3288 = vunpack.c.l.b16 %v1776
    %v3289 = vunpack.c.h.b16 %v1776
    %v3290 = vunpack.c.l.b16 %v1777
    %v3291 = vunpack.c.h.b16 %v1777
    %v3292 = vunpack.c.l.b16 %v1778
    %v3293 = vunpack.c.h.b16 %v1778
    %v3294 = vunpack.c.l.b16 %v1779
    %v3295 = vunpack.c.h.b16 %v1779
    %v3296 = vunpack.c.l.b16 %v1780
    %v3297 = vunpack.c.h.b16 %v1780
    %v3298 = vunpack.c.l.b16 %v1781
    %v3299 = vunpack.c.h.b16 %v1781
    %v3300 = vunpack.c.l.b16 %v1782
    %v3301 = vunpack.c.h.b16 %v1782
    %v3302 = vunpack.c.l.b16 %v1783
    %v3303 = vunpack.c.h.b16 %v1783
    %v3304 = vunpack.c.l.b16 %v1784
    %v3305 = vunpack.c.h.b16 %v1784
    %v3306 = vunpack.c.l.b16 %v1785
    %v3307 = vunpack.c.h.b16 %v1785
    %v3308 = vunpack.c.l.b16 %v1786
    %v3309 = vunpack.c.h.b16 %v1786
    %v3310 = vunpack.c.l.b16 %v1787
    %v3311 = vunpack.c.h.b16 %v1787
    %v3312 = vunpack.c.l.b16 %v1788
    %v3313 = vunpack.c.h.b16 %v1788
    %v3314 = vunpack.c.l.b16 %v1789
    %v3315 = vunpack.c.h.b16 %v1789
    %v3316 = vunpack.c.l.b16 %v1790
    %v3317 = vunpack.c.h.b16 %v1790
    %v3318 = vunpack.c.l.b16 %v1791
    %v3319 = vunpack.c.h.b16 %v1791
    %v3320 = vunpack.c.l.b16 %v1792
    %v3321 = vunpack.c.h.b16 %v1792
    %v3322 = vunpack.c.l.b16 %v1793
    %v3323 = vunpack.c.h.b16 %v1793
    %v3324 = vunpack.c.l.b16 %v1794
    %v3325 = vunpack.c.h.b16 %v1794
    %v3326 = vunpack.c.l.b16 %v1795
    %v3327 = vunpack.c.h.b16 %v1795
    %v3328 = vunpack.c.l.b16 %v1796
    %v3329 = vunpack.c.h.b16 %v1796
    %v3330 = vunpack.c.l.b16 %v1797
    %v3331 = vunpack.c.h.b16 %v1797
    %v3332 = vunpack.c.l.b16 %v1798
    %v3333 = vunpack.c.h.b16 %v1798
    %v3334 = vunpack.c.l.b16 %v1799
    %v3335 = vunpack.c.h.b16 %v1799
    %v3336 = vpack.c.b16 %v2320, %v2312
    %v3337 = vpack.c.b16 %v2321, %v2313
    %v3338 = vpack.c.b16 %v2322, %v2314
    %v3339 = vpack.c.b16 %v2323, %v2315
    %v3340 = vpack.c.b16 %v2324, %v2316
    %v3341 = vpack.c.b16 %v2325, %v2317
    %v3342 = vpack.c.b16 %v2326, %v2318
    %v3343 = vpack.c.b16 %v2327, %v2319
    %v3344 = vpack.c.b16 %v2336, %v2328
    %v3345 = vpack.c.b16 %v2337, %v2329
    %v3346 = vpack.c.b16 %v2338, %v2330
    %v3347 = vpack.c.b16 %v2339, %v2331
    %v3348 = vpack.c.b16 %v2340, %v2332
    %v3349 = vpack.c.b16 %v2341, %v2333
    %v3350 = vpack.c.b16 %v2342, %v2334
    %v3351 = vpack.c.b16 %v2343, %v2335
    %v3352 = vpack.c.b16 %v2352, %v2344
    %v3353 = vpack.c.b16 %v2353, %v2345
    %v3354 = vpack.c.b16 %v2354, %v2346
    %v3355 = vpack.c.b16 %v2355, %v2347
    %v3356 = vpack.c.b16 %v2356, %v2348
    %v3357 = vpack.c.b16 %v2357, %v2349
    %v3358 = vpack.c.b16 %v2358, %v2350
    %v3359 = vpack.c.b16 %v2359, %v2351
    %v3360 = vpack.c.b16 %v2368, %v2360
    %v3361 = vpack.c.b16 %v2369, %v2361
    %v3362 = vpack.c.b16 %v2370, %v2362
    %v3363 = vpack.c.b16 %v2371, %v2363
    %v3364 = vpack.c.b16 %v2372, %v2364
    %v3365 = vpack.c.b16 %v2373, %v2365
    %v3366 = vpack.c.b16 %v2374, %v2366
    %v3367 = vpack.c.b16 %v2375, %v2367
    %v3368 = vpack.c.b16 %v2384, %v2376
    %v3369 = vpack.c.b16 %v2385, %v2377
    %v3370 = vpack.c.b16 %v2386, %v2378
    %v3371 = vpack.c.b16 %v2387, %v2379
    %v3372 = vpack.c.b16 %v2388, %v2380
    %v3373 = vpack.c.b16 %v2389, %v2381
    %v3374 = vpack.c.b16 %v2390, %v2382
    %v3375 = vpack.c.b16 %v2391, %v2383
    %v3376 = vpack.c.b16 %v2400, %v2392
    %v3377 = vpack.c.b16 %v2401, %v2393
    %v3378 = vpack.c.b16 %v2402, %v2394
    %v3379 = vpack.c.b16 %v2403, %v2395
    %v3380 = vpack.c.b16 %v2404, %v2396
    %v3381 = vpack.c.b16 %v2405, %v2397
    %v3382 = vpack.c.b16 %v2406, %v2398
    %v3383 = vpack.c.b16 %v2407, %v2399
    %v3384 = vpack.c.b16 %v2416, %v2408
    %v3385 = vpack.c.b16 %v2417, %v2409
    %v3386 = vpack.c.b16 %v2418, %v2410
    %v3387 = vpack.c.b16 %v2419, %v2411
    %v3388 = vpack.c.b16 %v2420, %v2412
    %v3389 = vpack.c.b16 %v2421, %v2413
    %v3390 = vpack.c.b16 %v2422, %v2414
    %v3391 = vpack.c.b16 %v2423, %v2415
    %v3392 = vpack.c.b16 %v2432, %v2424
    %v3393 = vpack.c.b16 %v2433, %v2425
    %v3394 = vpack.c.b16 %v2434, %v2426
    %v3395 = vpack.c.b16 %v2435, %v2427
    %v3396 = vpack.c.b16 %v2436, %v2428
    %v3397 = vpack.c.b16 %v2437, %v2429
    %v3398 = vpack.c.b16 %v2438, %v2430
    %v3399 = vpack.c.b16 %v2439, %v2431
    %v3400 = vpack.c.b16 %v2448, %v2440
    %v3401 = vpack.c.b16 %v2449, %v2441
    %v3402 = vpack.c.b16 %v2450, %v2442
    %v3403 = vpack.c.b16 %v2451, %v2443
    %v3404 = vpack.c.b16 %v2452, %v2444
    %v3405 = vpack.c.b16 %v2453, %v2445
    %v3406 = vpack.c.b16 %v2454, %v2446
    %v3407 = vpack.c.b16 %v2455, %v2447
    %v3408 = vpack.c.b16 %v2464, %v2456
    %v3409 = vpack.c.b16 %v2465, %v2457
    %v3410 = vpack.c.b16 %v2466, %v2458
    %v3411 = vpack.c.b16 %v2467, %v2459
    %v3412 = vpack.c.b16 %v2468, %v2460
    %v3413 = vpack.c.b16 %v2469, %v2461
    %v3414 = vpack.c.b16 %v2470, %v2462
    %v3415 = vpack.c.b16 %v2471, %v2463
    %v3416 = vpack.c.b16 %v2480, %v2472
    %v3417 = vpack.c.b16 %v2481, %v2473
    %v3418 = vpack.c.b16 %v2482, %v2474
    %v3419 = vpack.c.b16 %v2483, %v2475
    %v3420 = vpack.c.b16 %v2484, %v2476
    %v3421 = vpack.c.b16 %v2485, %v2477
    %v3422 = vpack.c.b16 %v2486, %v2478
    %v3423 = vpack.c.b16 %v2487, %v2479
    %v3424 = vpack.c.b16 %v2496, %v2488
    %v3425 = vpack.c.b16 %v2497, %v2489
    %v3426 = vpack.c.b16 %v2498, %v2490
    %v3427 = vpack.c.b16 %v2499, %v2491
    %v3428 = vpack.c.b16 %v2500, %v2492
    %v3429 = vpack.c.b16 %v2501, %v2493
    %v3430 = vpack.c.b16 %v2502, %v2494
    %v3431 = vpack.c.b16 %v2503, %v2495
    %v3432 = vpack.c.b16 %v2512, %v2504
    %v3433 = vpack.c.b16 %v2513, %v2505
    %v3434 = vpack.c.b16 %v2514, %v2506
    %v3435 = vpack.c.b16 %v2515, %v2507
    %v3436 = vpack.c.b16 %v2516, %v2508
    %v3437 = vpack.c.b16 %v2517, %v2509
    %v3438 = vpack.c.b16 %v2518, %v2510
    %v3439 = vpack.c.b16 %v2519, %v2511
    %v3440 = vpack.c.b16 %v2528, %v2520
    %v3441 = vpack.c.b16 %v2529, %v2521
    %v3442 = vpack.c.b16 %v2530, %v2522
    %v3443 = vpack.c.b16 %v2531, %v2523
    %v3444 = vpack.c.b16 %v2532, %v2524
    %v3445 = vpack.c.b16 %v2533, %v2525
    %v3446 = vpack.c.b16 %v2534, %v2526
    %v3447 = vpack.c.b16 %v2535, %v2527
    %v3448 = vpack.c.b16 %v2544, %v2536
    %v3449 = vpack.c.b16 %v2545, %v2537
    %v3450 = vpack.c.b16 %v2546, %v2538
    %v3451 = vpack.c.b16 %v2547, %v2539
    %v3452 = vpack.c.b16 %v2548, %v2540
    %v3453 = vpack.c.b16 %v2549, %v2541
    %v3454 = vpack.c.b16 %v2550, %v2542
    %v3455 = vpack.c.b16 %v2551, %v2543
    %v3456 = vpack.c.b16 %v2560, %v2552
    %v3457 = vpack.c.b16 %v2561, %v2553
    %v3458 = vpack.c.b16 %v2562, %v2554
    %v3459 = vpack.c.b16 %v2563, %v2555
    %v3460 = vpack.c.b16 %v2564, %v2556
    %v3461 = vpack.c.b16 %v2565, %v2557
    %v3462 = vpack.c.b16 %v2566, %v2558
    %v3463 = vpack.c.b16 %v2567, %v2559
    %v3464 = vpack.c.b16 %v2576, %v2568
    %v3465 = vpack.c.b16 %v2577, %v2569
    %v3466 = vpack.c.b16 %v2578, %v2570
    %v3467 = vpack.c.b16 %v2579, %v2571
    %v3468 = vpack.c.b16 %v2580, %v2572
    %v3469 = vpack.c.b16 %v2581, %v2573
    %v3470 = vpack.c.b16 %v2582, %v2574
    %v3471 = vpack.c.b16 %v2583, %v2575
    %v3472 = vpack.c.b16 %v2592, %v2584
    %v3473 = vpack.c.b16 %v2593, %v2585
    %v3474 = vpack.c.b16 %v2594, %v2586
    %v3475 = vpack.c.b16 %v2595, %v2587
    %v3476 = vpack.c.b16 %v2596, %v2588
    %v3477 = vpack.c.b16 %v2597, %v2589
    %v3478 = vpack.c.b16 %v2598, %v2590
    %v3479 = vpack.c.b16 %v2599, %v2591
    %v3480 = vpack.c.b16 %v2608, %v2600
    %v3481 = vpack.c.b16 %v2609, %v2601
    %v3482 = vpack.c.b16 %v2610, %v2602
    %v3483 = vpack.c.b16 %v2611, %v2603
    %v3484 = vpack.c.b16 %v2612, %v2604
    %v3485 = vpack.c.b16 %v2613, %v2605
    %v3486 = vpack.c.b16 %v2614, %v2606
    %v3487 = vpack.c.b16 %v2615, %v2607
    %v3488 = vpack.c.b16 %v2624, %v2616
    %v3489 = vpack.c.b16 %v2625, %v2617
    %v3490 = vpack.c.b16 %v2626, %v2618
    %v3491 = vpack.c.b16 %v2627, %v2619
    %v3492 = vpack.c.b16 %v2628, %v2620
    %v3493 = vpack.c.b16 %v2629, %v2621
    %v3494 = vpack.c.b16 %v2630, %v2622
    %v3495 = vpack.c.b16 %v2631, %v2623
    %v3496 = vpack.c.b16 %v2640, %v2632
    %v3497 = vpack.c.b16 %v2641, %v2633
    %v3498 = vpack.c.b16 %v2642, %v2634
    %v3499 = vpack.c.b16 %v2643, %v2635
    %v3500 = vpack.c.b16 %v2644, %v2636
    %v3501 = vpack.c.b16 %v2645, %v2637
    %v3502 = vpack.c.b16 %v2646, %v2638
    %v3503 = vpack.c.b16 %v2647, %v2639
    %v3504 = vpack.c.b16 %v2656, %v2648
    %v3505 = vpack.c.b16 %v2657, %v2649
    %v3506 = vpack.c.b16 %v2658, %v2650
    %v3507 = vpack.c.b16 %v2659, %v2651
    %v3508 = vpack.c.b16 %v2660, %v2652
    %v3509 = vpack.c.b16 %v2661, %v2653
    %v3510 = vpack.c.b16 %v2662, %v2654
    %v3511 = vpack.c.b16 %v2663, %v2655
    %v3512 = vpack.c.b16 %v2672, %v2664
    %v3513 = vpack.c.b16 %v2673, %v2665
    %v3514 = vpack.c.b16 %v2674, %v2666
    %v3515 = vpack.c.b16 %v2675, %v2667
    %v3516 = vpack.c.b16 %v2676, %v2668
    %v3517 = vpack.c.b16 %v2677, %v2669
    %v3518 = vpack.c.b16 %v2678, %v2670
    %v3519 = vpack.c.b16 %v2679, %v2671
    %v3520 = vpack.c.b16 %v2688, %v2680
    %v3521 = vpack.c.b16 %v2689, %v2681
    %v3522 = vpack.c.b16 %v2690, %v2682
    %v3523 = vpack.c.b16 %v2691, %v2683
    %v3524 = vpack.c.b16 %v2692, %v2684
    %v3525 = vpack.c.b16 %v2693, %v2685
    %v3526 = vpack.c.b16 %v2694, %v2686
    %v3527 = vpack.c.b16 %v2695, %v2687
    %v3528 = vpack.c.b16 %v2704, %v2696
    %v3529 = vpack.c.b16 %v2705, %v2697
    %v3530 = vpack.c.b16 %v2706, %v2698
    %v3531 = vpack.c.b16 %v2707, %v2699
    %v3532 = vpack.c.b16 %v2708, %v2700
    %v3533 = vpack.c.b16 %v2709, %v2701
    %v3534 = vpack.c.b16 %v2710, %v2702
    %v3535 = vpack.c.b16 %v2711, %v2703
    %v3536 = vpack.c.b16 %v2720, %v2712
    %v3537 = vpack.c.b16 %v2721, %v2713
    %v3538 = vpack.c.b16 %v2722, %v2714
    %v3539 = vpack.c.b16 %v2723, %v2715
    %v3540 = vpack.c.b16 %v2724, %v2716
    %v3541 = vpack.c.b16 %v2725, %v2717
    %v3542 = vpack.c.b16 %v2726, %v2718
    %v3543 = vpack.c.b16 %v2727, %v2719
    %v3544 = vpack.c.b16 %v2736, %v2728
    %v3545 = vpack.c.b16 %v2737, %v2729
    %v3546 = vpack.c.b16 %v2738, %v2730
    %v3547 = vpack.c.b16 %v2739, %v2731
    %v3548 = vpack.c.b16 %v2740, %v2732
    %v3549 = vpack.c.b16 %v2741, %v2733
    %v3550 = vpack.c.b16 %v2742, %v2734
    %v3551 = vpack.c.b16 %v2743, %v2735
    %v3552 = vpack.c.b16 %v2752, %v2744
    %v3553 = vpack.c.b16 %v2753, %v2745
    %v3554 = vpack.c.b16 %v2754, %v2746
    %v3555 = vpack.c.b16 %v2755, %v2747
    %v3556 = vpack.c.b16 %v2756, %v2748
    %v3557 = vpack.c.b16 %v2757, %v2749
    %v3558 = vpack.c.b16 %v2758, %v2750
    %v3559 = vpack.c.b16 %v2759, %v2751
    %v3560 = vpack.c.b16 %v2768, %v2760
    %v3561 = vpack.c.b16 %v2769, %v2761
    %v3562 = vpack.c.b16 %v2770, %v2762
    %v3563 = vpack.c.b16 %v2771, %v2763
    %v3564 = vpack.c.b16 %v2772, %v2764
    %v3565 = vpack.c.b16 %v2773, %v2765
    %v3566 = vpack.c.b16 %v2774, %v2766
    %v3567 = vpack.c.b16 %v2775, %v2767
    %v3568 = vpack.c.b16 %v2784, %v2776
    %v3569 = vpack.c.b16 %v2785, %v2777
    %v3570 = vpack.c.b16 %v2786, %v2778
    %v3571 = vpack.c.b16 %v2787, %v2779
    %v3572 = vpack.c.b16 %v2788, %v2780
    %v3573 = vpack.c.b16 %v2789, %v2781
    %v3574 = vpack.c.b16 %v2790, %v2782
    %v3575 = vpack.c.b16 %v2791, %v2783
    %v3576 = vpack.c.b16 %v2800, %v2792
    %v3577 = vpack.c.b16 %v2801, %v2793
    %v3578 = vpack.c.b16 %v2802, %v2794
    %v3579 = vpack.c.b16 %v2803, %v2795
    %v3580 = vpack.c.b16 %v2804, %v2796
    %v3581 = vpack.c.b16 %v2805, %v2797
    %v3582 = vpack.c.b16 %v2806, %v2798
    %v3583 = vpack.c.b16 %v2807, %v2799
    %v3584 = vpack.c.b16 %v2816, %v2808
    %v3585 = vpack.c.b16 %v2817, %v2809
    %v3586 = vpack.c.b16 %v2818, %v2810
    %v3587 = vpack.c.b16 %v2819, %v2811
    %v3588 = vpack.c.b16 %v2820, %v2812
    %v3589 = vpack.c.b16 %v2821, %v2813
    %v3590 = vpack.c.b16 %v2822, %v2814
    %v3591 = vpack.c.b16 %v2823, %v2815
    %v3592 = vpack.c.b16 %v2832, %v2824
    %v3593 = vpack.c.b16 %v2833, %v2825
    %v3594 = vpack.c.b16 %v2834, %v2826
    %v3595 = vpack.c.b16 %v2835, %v2827
    %v3596 = vpack.c.b16 %v2836, %v2828
    %v3597 = vpack.c.b16 %v2837, %v2829
    %v3598 = vpack.c.b16 %v2838, %v2830
    %v3599 = vpack.c.b16 %v2839, %v2831
    %v3600 = vpack.c.b16 %v2848, %v2840
    %v3601 = vpack.c.b16 %v2849, %v2841
    %v3602 = vpack.c.b16 %v2850, %v2842
    %v3603 = vpack.c.b16 %v2851, %v2843
    %v3604 = vpack.c.b16 %v2852, %v2844
    %v3605 = vpack.c.b16 %v2853, %v2845
    %v3606 = vpack.c.b16 %v2854, %v2846
    %v3607 = vpack.c.b16 %v2855, %v2847
    %v3608 = vpack.c.b16 %v2864, %v2856
    %v3609 = vpack.c.b16 %v2865, %v2857
    %v3610 = vpack.c.b16 %v2866, %v2858
    %v3611 = vpack.c.b16 %v2867, %v2859
    %v3612 = vpack.c.b16 %v2868, %v2860
    %v3613 = vpack.c.b16 %v2869, %v2861
    %v3614 = vpack.c.b16 %v2870, %v2862
    %v3615 = vpack.c.b16 %v2871, %v2863
    %v3616 = vpack.c.b16 %v2880, %v2872
    %v3617 = vpack.c.b16 %v2881, %v2873
    %v3618 = vpack.c.b16 %v2882, %v2874
    %v3619 = vpack.c.b16 %v2883, %v2875
    %v3620 = vpack.c.b16 %v2884, %v2876
    %v3621 = vpack.c.b16 %v2885, %v2877
    %v3622 = vpack.c.b16 %v2886, %v2878
    %v3623 = vpack.c.b16 %v2887, %v2879
    %v3624 = vpack.c.b16 %v2896, %v2888
    %v3625 = vpack.c.b16 %v2897, %v2889
    %v3626 = vpack.c.b16 %v2898, %v2890
    %v3627 = vpack.c.b16 %v2899, %v2891
    %v3628 = vpack.c.b16 %v2900, %v2892
    %v3629 = vpack.c.b16 %v2901, %v2893
    %v3630 = vpack.c.b16 %v2902, %v2894
    %v3631 = vpack.c.b16 %v2903, %v2895
    %v3632 = vpack.c.b16 %v2912, %v2904
    %v3633 = vpack.c.b16 %v2913, %v2905
    %v3634 = vpack.c.b16 %v2914, %v2906
    %v3635 = vpack.c.b16 %v2915, %v2907
    %v3636 = vpack.c.b16 %v2916, %v2908
    %v3637 = vpack.c.b16 %v2917, %v2909
    %v3638 = vpack.c.b16 %v2918, %v2910
    %v3639 = vpack.c.b16 %v2919, %v2911
    %v3640 = vpack.c.b16 %v2928, %v2920
    %v3641 = vpack.c.b16 %v2929, %v2921
    %v3642 = vpack.c.b16 %v2930, %v2922
    %v3643 = vpack.c.b16 %v2931, %v2923
    %v3644 = vpack.c.b16 %v2932, %v2924
    %v3645 = vpack.c.b16 %v2933, %v2925
    %v3646 = vpack.c.b16 %v2934, %v2926
    %v3647 = vpack.c.b16 %v2935, %v2927
    %v3648 = vpack.c.b16 %v2944, %v2936
    %v3649 = vpack.c.b16 %v2945, %v2937
    %v3650 = vpack.c.b16 %v2946, %v2938
    %v3651 = vpack.c.b16 %v2947, %v2939
    %v3652 = vpack.c.b16 %v2948, %v2940
    %v3653 = vpack.c.b16 %v2949, %v2941
    %v3654 = vpack.c.b16 %v2950, %v2942
    %v3655 = vpack.c.b16 %v2951, %v2943
    %v3656 = vpack.c.b16 %v2960, %v2952
    %v3657 = vpack.c.b16 %v2961, %v2953
    %v3658 = vpack.c.b16 %v2962, %v2954
    %v3659 = vpack.c.b16 %v2963, %v2955
    %v3660 = vpack.c.b16 %v2964, %v2956
    %v3661 = vpack.c.b16 %v2965, %v2957
    %v3662 = vpack.c.b16 %v2966, %v2958
    %v3663 = vpack.c.b16 %v2967, %v2959
    %v3664 = vpack.c.b16 %v2976, %v2968
    %v3665 = vpack.c.b16 %v2977, %v2969
    %v3666 = vpack.c.b16 %v2978, %v2970
    %v3667 = vpack.c.b16 %v2979, %v2971
    %v3668 = vpack.c.b16 %v2980, %v2972
    %v3669 = vpack.c.b16 %v2981, %v2973
    %v3670 = vpack.c.b16 %v2982, %v2974
    %v3671 = vpack.c.b16 %v2983, %v2975
    %v3672 = vpack.c.b16 %v2992, %v2984
    %v3673 = vpack.c.b16 %v2993, %v2985
    %v3674 = vpack.c.b16 %v2994, %v2986
    %v3675 = vpack.c.b16 %v2995, %v2987
    %v3676 = vpack.c.b16 %v2996, %v2988
    %v3677 = vpack.c.b16 %v2997, %v2989
    %v3678 = vpack.c.b16 %v2998, %v2990
    %v3679 = vpack.c.b16 %v2999, %v2991
    %v3680 = vpack.c.b16 %v3008, %v3000
    %v3681 = vpack.c.b16 %v3009, %v3001
    %v3682 = vpack.c.b16 %v3010, %v3002
    %v3683 = vpack.c.b16 %v3011, %v3003
    %v3684 = vpack.c.b16 %v3012, %v3004
    %v3685 = vpack.c.b16 %v3013, %v3005
    %v3686 = vpack.c.b16 %v3014, %v3006
    %v3687 = vpack.c.b16 %v3015, %v3007
    %v3688 = vpack.c.b16 %v3024, %v3016
    %v3689 = vpack.c.b16 %v3025, %v3017
    %v3690 = vpack.c.b16 %v3026, %v3018
    %v3691 = vpack.c.b16 %v3027, %v3019
    %v3692 = vpack.c.b16 %v3028, %v3020
    %v3693 = vpack.c.b16 %v3029, %v3021
    %v3694 = vpack.c.b16 %v3030, %v3022
    %v3695 = vpack.c.b16 %v3031, %v3023
    %v3696 = vpack.c.b16 %v3040, %v3032
    %v3697 = vpack.c.b16 %v3041, %v3033
    %v3698 = vpack.c.b16 %v3042, %v3034
    %v3699 = vpack.c.b16 %v3043, %v3035
    %v3700 = vpack.c.b16 %v3044, %v3036
    %v3701 = vpack.c.b16 %v3045, %v3037
    %v3702 = vpack.c.b16 %v3046, %v3038
    %v3703 = vpack.c.b16 %v3047, %v3039
    %v3704 = vpack.c.b16 %v3056, %v3048
    %v3705 = vpack.c.b16 %v3057, %v3049
    %v3706 = vpack.c.b16 %v3058, %v3050
    %v3707 = vpack.c.b16 %v3059, %v3051
    %v3708 = vpack.c.b16 %v3060, %v3052
    %v3709 = vpack.c.b16 %v3061, %v3053
    %v3710 = vpack.c.b16 %v3062, %v3054
    %v3711 = vpack.c.b16 %v3063, %v3055
    %v3712 = vpack.c.b16 %v3072, %v3064
    %v3713 = vpack.c.b16 %v3073, %v3065
    %v3714 = vpack.c.b16 %v3074, %v3066
    %v3715 = vpack.c.b16 %v3075, %v3067
    %v3716 = vpack.c.b16 %v3076, %v3068
    %v3717 = vpack.c.b16 %v3077, %v3069
    %v3718 = vpack.c.b16 %v3078, %v3070
    %v3719 = vpack.c.b16 %v3079, %v3071
    %v3720 = vpack.c.b16 %v3088, %v3080
    %v3721 = vpack.c.b16 %v3089, %v3081
    %v3722 = vpack.c.b16 %v3090, %v3082
    %v3723 = vpack.c.b16 %v3091, %v3083
    %v3724 = vpack.c.b16 %v3092, %v3084
    %v3725 = vpack.c.b16 %v3093, %v3085
    %v3726 = vpack.c.b16 %v3094, %v3086
    %v3727 = vpack.c.b16 %v3095, %v3087
    %v3728 = vpack.c.b16 %v3104, %v3096
    %v3729 = vpack.c.b16 %v3105, %v3097
    %v3730 = vpack.c.b16 %v3106, %v3098
    %v3731 = vpack.c.b16 %v3107, %v3099
    %v3732 = vpack.c.b16 %v3108, %v3100
    %v3733 = vpack.c.b16 %v3109, %v3101
    %v3734 = vpack.c.b16 %v3110, %v3102
    %v3735 = vpack.c.b16 %v3111, %v3103
    %v3736 = vpack.c.b16 %v3120, %v3112
    %v3737 = vpack.c.b16 %v3121, %v3113
    %v3738 = vpack.c.b16 %v3122, %v3114
    %v3739 = vpack.c.b16 %v3123, %v3115
    %v3740 = vpack.c.b16 %v3124, %v3116
    %v3741 = vpack.c.b16 %v3125, %v3117
    %v3742 = vpack.c.b16 %v3126, %v3118
    %v3743 = vpack.c.b16 %v3127, %v3119
    %v3744 = vpack.c.b16 %v3136, %v3128
    %v3745 = vpack.c.b16 %v3137, %v3129
    %v3746 = vpack.c.b16 %v3138, %v3130
    %v3747 = vpack.c.b16 %v3139, %v3131
    %v3748 = vpack.c.b16 %v3140, %v3132
    %v3749 = vpack.c.b16 %v3141, %v3133
    %v3750 = vpack.c.b16 %v3142, %v3134
    %v3751 = vpack.c.b16 %v3143, %v3135
    %v3752 = vpack.c.b16 %v3152, %v3144
    %v3753 = vpack.c.b16 %v3153, %v3145
    %v3754 = vpack.c.b16 %v3154, %v3146
    %v3755 = vpack.c.b16 %v3155, %v3147
    %v3756 = vpack.c.b16 %v3156, %v3148
    %v3757 = vpack.c.b16 %v3157, %v3149
    %v3758 = vpack.c.b16 %v3158, %v3150
    %v3759 = vpack.c.b16 %v3159, %v3151
    %v3760 = vpack.c.b16 %v3168, %v3160
    %v3761 = vpack.c.b16 %v3169, %v3161
    %v3762 = vpack.c.b16 %v3170, %v3162
    %v3763 = vpack.c.b16 %v3171, %v3163
    %v3764 = vpack.c.b16 %v3172, %v3164
    %v3765 = vpack.c.b16 %v3173, %v3165
    %v3766 = vpack.c.b16 %v3174, %v3166
    %v3767 = vpack.c.b16 %v3175, %v3167
    %v3768 = vpack.c.b16 %v3184, %v3176
    %v3769 = vpack.c.b16 %v3185, %v3177
    %v3770 = vpack.c.b16 %v3186, %v3178
    %v3771 = vpack.c.b16 %v3187, %v3179
    %v3772 = vpack.c.b16 %v3188, %v3180
    %v3773 = vpack.c.b16 %v3189, %v3181
    %v3774 = vpack.c.b16 %v3190, %v3182
    %v3775 = vpack.c.b16 %v3191, %v3183
    %v3776 = vpack.c.b16 %v3200, %v3192
    %v3777 = vpack.c.b16 %v3201, %v3193
    %v3778 = vpack.c.b16 %v3202, %v3194
    %v3779 = vpack.c.b16 %v3203, %v3195
    %v3780 = vpack.c.b16 %v3204, %v3196
    %v3781 = vpack.c.b16 %v3205, %v3197
    %v3782 = vpack.c.b16 %v3206, %v3198
    %v3783 = vpack.c.b16 %v3207, %v3199
    %v3784 = vpack.c.b16 %v3216, %v3208
    %v3785 = vpack.c.b16 %v3217, %v3209
    %v3786 = vpack.c.b16 %v3218, %v3210
    %v3787 = vpack.c.b16 %v3219, %v3211
    %v3788 = vpack.c.b16 %v3220, %v3212
    %v3789 = vpack.c.b16 %v3221, %v3213
    %v3790 = vpack.c.b16 %v3222, %v3214
    %v3791 = vpack.c.b16 %v3223, %v3215
    %v3792 = vpack.c.b16 %v3232, %v3224
    %v3793 = vpack.c.b16 %v3233, %v3225
    %v3794 = vpack.c.b16 %v3234, %v3226
    %v3795 = vpack.c.b16 %v3235, %v3227
    %v3796 = vpack.c.b16 %v3236, %v3228
    %v3797 = vpack.c.b16 %v3237, %v3229
    %v3798 = vpack.c.b16 %v3238, %v3230
    %v3799 = vpack.c.b16 %v3239, %v3231
    %v3800 = vpack.c.b16 %v3248, %v3240
    %v3801 = vpack.c.b16 %v3249, %v3241
    %v3802 = vpack.c.b16 %v3250, %v3242
    %v3803 = vpack.c.b16 %v3251, %v3243
    %v3804 = vpack.c.b16 %v3252, %v3244
    %v3805 = vpack.c.b16 %v3253, %v3245
    %v3806 = vpack.c.b16 %v3254, %v3246
    %v3807 = vpack.c.b16 %v3255, %v3247
    %v3808 = vpack.c.b16 %v3264, %v3256
    %v3809 = vpack.c.b16 %v3265, %v3257
    %v3810 = vpack.c.b16 %v3266, %v3258
    %v3811 = vpack.c.b16 %v3267, %v3259
    %v3812 = vpack.c.b16 %v3268, %v3260
    %v3813 = vpack.c.b16 %v3269, %v3261
    %v3814 = vpack.c.b16 %v3270, %v3262
    %v3815 = vpack.c.b16 %v3271, %v3263
    %v3816 = vpack.c.b16 %v3280, %v3272
    %v3817 = vpack.c.b16 %v3281, %v3273
    %v3818 = vpack.c.b16 %v3282, %v3274
    %v3819 = vpack.c.b16 %v3283, %v3275
    %v3820 = vpack.c.b16 %v3284, %v3276
    %v3821 = vpack.c.b16 %v3285, %v3277
    %v3822 = vpack.c.b16 %v3286, %v3278
    %v3823 = vpack.c.b16 %v3287, %v3279
    %v3824 = vpack.c.b16 %v3296, %v3288
    %v3825 = vpack.c.b16 %v3297, %v3289
    %v3826 = vpack.c.b16 %v3298, %v3290
    %v3827 = vpack.c.b16 %v3299, %v3291
    %v3828 = vpack.c.b16 %v3300, %v3292
    %v3829 = vpack.c.b16 %v3301, %v3293
    %v3830 = vpack.c.b16 %v3302, %v3294
    %v3831 = vpack.c.b16 %v3303, %v3295
    %v3832 = vpack.c.b16 %v3312, %v3304
    %v3833 = vpack.c.b16 %v3313, %v3305
    %v3834 = vpack.c.b16 %v3314, %v3306
    %v3835 = vpack.c.b16 %v3315, %v3307
    %v3836 = vpack.c.b16 %v3316, %v3308
    %v3837 = vpack.c.b16 %v3317, %v3309
    %v3838 = vpack.c.b16 %v3318, %v3310
    %v3839 = vpack.c.b16 %v3319, %v3311
    %v3840 = vpack.c.b16 %v3328, %v3320
    %v3841 = vpack.c.b16 %v3329, %v3321
    %v3842 = vpack.c.b16 %v3330, %v3322
    %v3843 = vpack.c.b16 %v3331, %v3323
    %v3844 = vpack.c.b16 %v3332, %v3324
    %v3845 = vpack.c.b16 %v3333, %v3325
    %v3846 = vpack.c.b16 %v3334, %v3326
    %v3847 = vpack.c.b16 %v3335, %v3327
    %4360 = vmatpush.bf16.msra.mxu0 %v3392
    %4361 = vmatpush.bf16.msra.mxu0 %v3384
    %4362 = vmatpush.bf16.msra.mxu0 %v3376
    %4363 = vmatpush.bf16.msra.mxu0 %v3368
    %4364 = vmatpush.bf16.msra.mxu0 %v3360
    %4365 = vmatpush.bf16.msra.mxu0 %v3352
    %4366 = vmatpush.bf16.msra.mxu0 %v3344
    %4367 = vmatpush.bf16.msra.mxu0 %v3336
    %4368 = vmatmul.bf16.gmra.mxu0 %v1280
    %v4369 = vpop.f32.mrf.mxu0
    %v4370 = vadd.f32 0.0, %v4369
    %v4371 = vpop.f32.mrf.mxu0
    %v4372 = vadd.f32 0.0, %v4371
    %4373 = vdwg.mxu0
    %4374 = vmatpush.bf16.msra.mxu0 %v3456
    %4375 = vmatpush.bf16.msra.mxu0 %v3448
    %4376 = vmatpush.bf16.msra.mxu0 %v3440
    %4377 = vmatpush.bf16.msra.mxu0 %v3432
    %4378 = vmatpush.bf16.msra.mxu0 %v3424
    %4379 = vmatpush.bf16.msra.mxu0 %v3416
    %4380 = vmatpush.bf16.msra.mxu0 %v3408
    %4381 = vmatpush.bf16.msra.mxu0 %v3400
    %4382 = vmatmul.bf16.gmra.mxu0 %v1281
    %v4383 = vpop.f32.mrf.mxu0
    %v4384 = vadd.f32 %v4370, %v4383
    %v4385 = vpop.f32.mrf.mxu0
    %v4386 = vadd.f32 %v4372, %v4385
    %4387 = vdwg.mxu0
    %4388 = vmatpush.bf16.msra.mxu0 %v3520
    %4389 = vmatpush.bf16.msra.mxu0 %v3512
    %4390 = vmatpush.bf16.msra.mxu0 %v3504
    %4391 = vmatpush.bf16.msra.mxu0 %v3496
    %4392 = vmatpush.bf16.msra.mxu0 %v3488
    %4393 = vmatpush.bf16.msra.mxu0 %v3480
    %4394 = vmatpush.bf16.msra.mxu0 %v3472
    %4395 = vmatpush.bf16.msra.mxu0 %v3464
    %4396 = vmatmul.bf16.gmra.mxu0 %v1282
    %v4397 = vpop.f32.mrf.mxu0
    %v4398 = vadd.f32 %v4384, %v4397
    %v4399 = vpop.f32.mrf.mxu0
    %v4400 = vadd.f32 %v4386, %v4399
    %4401 = vdwg.mxu0
    %4402 = vmatpush.bf16.msra.mxu0 %v3584
    %4403 = vmatpush.bf16.msra.mxu0 %v3576
    %4404 = vmatpush.bf16.msra.mxu0 %v3568
    %4405 = vmatpush.bf16.msra.mxu0 %v3560
    %4406 = vmatpush.bf16.msra.mxu0 %v3552
    %4407 = vmatpush.bf16.msra.mxu0 %v3544
    %4408 = vmatpush.bf16.msra.mxu0 %v3536
    %4409 = vmatpush.bf16.msra.mxu0 %v3528
    %4410 = vmatmul.bf16.gmra.mxu0 %v1283
    %v4411 = vpop.f32.mrf.mxu0
    %v4412 = vadd.f32 %v4398, %v4411
    %v4413 = vpop.f32.mrf.mxu0
    %v4414 = vadd.f32 %v4400, %v4413
    %4415 = vdwg.mxu0
    %4416 = vmatpush.bf16.msra.mxu0 %v3648
    %4417 = vmatpush.bf16.msra.mxu0 %v3640
    %4418 = vmatpush.bf16.msra.mxu0 %v3632
    %4419 = vmatpush.bf16.msra.mxu0 %v3624
    %4420 = vmatpush.bf16.msra.mxu0 %v3616
    %4421 = vmatpush.bf16.msra.mxu0 %v3608
    %4422 = vmatpush.bf16.msra.mxu0 %v3600
    %4423 = vmatpush.bf16.msra.mxu0 %v3592
    %4424 = vmatmul.bf16.gmra.mxu0 %v1284
    %v4425 = vpop.f32.mrf.mxu0
    %v4426 = vadd.f32 %v4412, %v4425
    %v4427 = vpop.f32.mrf.mxu0
    %v4428 = vadd.f32 %v4414, %v4427
    %4429 = vdwg.mxu0
    %4430 = vmatpush.bf16.msra.mxu0 %v3712
    %4431 = vmatpush.bf16.msra.mxu0 %v3704
    %4432 = vmatpush.bf16.msra.mxu0 %v3696
    %4433 = vmatpush.bf16.msra.mxu0 %v3688
    %4434 = vmatpush.bf16.msra.mxu0 %v3680
    %4435 = vmatpush.bf16.msra.mxu0 %v3672
    %4436 = vmatpush.bf16.msra.mxu0 %v3664
    %4437 = vmatpush.bf16.msra.mxu0 %v3656
    %4438 = vmatmul.bf16.gmra.mxu0 %v1285
    %v4439 = vpop.f32.mrf.mxu0
    %v4440 = vadd.f32 %v4426, %v4439
    %v4441 = vpop.f32.mrf.mxu0
    %v4442 = vadd.f32 %v4428, %v4441
    %4443 = vdwg.mxu0
    %4444 = vmatpush.bf16.msra.mxu0 %v3776
    %4445 = vmatpush.bf16.msra.mxu0 %v3768
    %4446 = vmatpush.bf16.msra.mxu0 %v3760
    %4447 = vmatpush.bf16.msra.mxu0 %v3752
    %4448 = vmatpush.bf16.msra.mxu0 %v3744
    %4449 = vmatpush.bf16.msra.mxu0 %v3736
    %4450 = vmatpush.bf16.msra.mxu0 %v3728
    %4451 = vmatpush.bf16.msra.mxu0 %v3720
    %4452 = vmatmul.bf16.gmra.mxu0 %v1286
    %v4453 = vpop.f32.mrf.mxu0
    %v4454 = vadd.f32 %v4440, %v4453
    %v4455 = vpop.f32.mrf.mxu0
    %v4456 = vadd.f32 %v4442, %v4455
    %4457 = vdwg.mxu0
    %4458 = vmatpush.bf16.msra.mxu0 %v3840
    %4459 = vmatpush.bf16.msra.mxu0 %v3832
    %4460 = vmatpush.bf16.msra.mxu0 %v3824
    %4461 = vmatpush.bf16.msra.mxu0 %v3816
    %4462 = vmatpush.bf16.msra.mxu0 %v3808
    %4463 = vmatpush.bf16.msra.mxu0 %v3800
    %4464 = vmatpush.bf16.msra.mxu0 %v3792
    %4465 = vmatpush.bf16.msra.mxu0 %v3784
    %4466 = vmatmul.bf16.gmra.mxu0 %v1287
    %v4467 = vpop.f32.mrf.mxu0
    %v4468 = vadd.f32 %v4454, %v4467
    %v4469 = vpop.f32.mrf.mxu0
    %v4470 = vadd.f32 %v4456, %v4469
    %4471 = vdwg.mxu0
    %4472 = vmatpush.bf16.msra.mxu0 %v3393
    %4473 = vmatpush.bf16.msra.mxu0 %v3385
    %4474 = vmatpush.bf16.msra.mxu0 %v3377
    %4475 = vmatpush.bf16.msra.mxu0 %v3369
    %4476 = vmatpush.bf16.msra.mxu0 %v3361
    %4477 = vmatpush.bf16.msra.mxu0 %v3353
    %4478 = vmatpush.bf16.msra.mxu0 %v3345
    %4479 = vmatpush.bf16.msra.mxu0 %v3337
    %4480 = vmatmul.bf16.gmra.mxu0 %v1280
    %v4481 = vpop.f32.mrf.mxu0
    %v4482 = vadd.f32 0.0, %v4481
    %v4483 = vpop.f32.mrf.mxu0
    %v4484 = vadd.f32 0.0, %v4483
    %4485 = vdwg.mxu0
    %4486 = vmatpush.bf16.msra.mxu0 %v3457
    %4487 = vmatpush.bf16.msra.mxu0 %v3449
    %4488 = vmatpush.bf16.msra.mxu0 %v3441
    %4489 = vmatpush.bf16.msra.mxu0 %v3433
    %4490 = vmatpush.bf16.msra.mxu0 %v3425
    %4491 = vmatpush.bf16.msra.mxu0 %v3417
    %4492 = vmatpush.bf16.msra.mxu0 %v3409
    %4493 = vmatpush.bf16.msra.mxu0 %v3401
    %4494 = vmatmul.bf16.gmra.mxu0 %v1281
    %v4495 = vpop.f32.mrf.mxu0
    %v4496 = vadd.f32 %v4482, %v4495
    %v4497 = vpop.f32.mrf.mxu0
    %v4498 = vadd.f32 %v4484, %v4497
    %4499 = vdwg.mxu0
    %4500 = vmatpush.bf16.msra.mxu0 %v3521
    %4501 = vmatpush.bf16.msra.mxu0 %v3513
    %4502 = vmatpush.bf16.msra.mxu0 %v3505
    %4503 = vmatpush.bf16.msra.mxu0 %v3497
    %4504 = vmatpush.bf16.msra.mxu0 %v3489
    %4505 = vmatpush.bf16.msra.mxu0 %v3481
    %4506 = vmatpush.bf16.msra.mxu0 %v3473
    %4507 = vmatpush.bf16.msra.mxu0 %v3465
    %4508 = vmatmul.bf16.gmra.mxu0 %v1282
    %v4509 = vpop.f32.mrf.mxu0
    %v4510 = vadd.f32 %v4496, %v4509
    %v4511 = vpop.f32.mrf.mxu0
    %v4512 = vadd.f32 %v4498, %v4511
    %4513 = vdwg.mxu0
    %4514 = vmatpush.bf16.msra.mxu0 %v3585
    %4515 = vmatpush.bf16.msra.mxu0 %v3577
    %4516 = vmatpush.bf16.msra.mxu0 %v3569
    %4517 = vmatpush.bf16.msra.mxu0 %v3561
    %4518 = vmatpush.bf16.msra.mxu0 %v3553
    %4519 = vmatpush.bf16.msra.mxu0 %v3545
    %4520 = vmatpush.bf16.msra.mxu0 %v3537
    %4521 = vmatpush.bf16.msra.mxu0 %v3529
    %4522 = vmatmul.bf16.gmra.mxu0 %v1283
    %v4523 = vpop.f32.mrf.mxu0
    %v4524 = vadd.f32 %v4510, %v4523
    %v4525 = vpop.f32.mrf.mxu0
    %v4526 = vadd.f32 %v4512, %v4525
    %4527 = vdwg.mxu0
    %4528 = vmatpush.bf16.msra.mxu0 %v3649
    %4529 = vmatpush.bf16.msra.mxu0 %v3641
    %4530 = vmatpush.bf16.msra.mxu0 %v3633
    %4531 = vmatpush.bf16.msra.mxu0 %v3625
    %4532 = vmatpush.bf16.msra.mxu0 %v3617
    %4533 = vmatpush.bf16.msra.mxu0 %v3609
    %4534 = vmatpush.bf16.msra.mxu0 %v3601
    %4535 = vmatpush.bf16.msra.mxu0 %v3593
    %4536 = vmatmul.bf16.gmra.mxu0 %v1284
    %v4537 = vpop.f32.mrf.mxu0
    %v4538 = vadd.f32 %v4524, %v4537
    %v4539 = vpop.f32.mrf.mxu0
    %v4540 = vadd.f32 %v4526, %v4539
    %4541 = vdwg.mxu0
    %4542 = vmatpush.bf16.msra.mxu0 %v3713
    %4543 = vmatpush.bf16.msra.mxu0 %v3705
    %4544 = vmatpush.bf16.msra.mxu0 %v3697
    %4545 = vmatpush.bf16.msra.mxu0 %v3689
    %4546 = vmatpush.bf16.msra.mxu0 %v3681
    %4547 = vmatpush.bf16.msra.mxu0 %v3673
    %4548 = vmatpush.bf16.msra.mxu0 %v3665
    %4549 = vmatpush.bf16.msra.mxu0 %v3657
    %4550 = vmatmul.bf16.gmra.mxu0 %v1285
    %v4551 = vpop.f32.mrf.mxu0
    %v4552 = vadd.f32 %v4538, %v4551
    %v4553 = vpop.f32.mrf.mxu0
    %v4554 = vadd.f32 %v4540, %v4553
    %4555 = vdwg.mxu0
    %4556 = vmatpush.bf16.msra.mxu0 %v3777
    %4557 = vmatpush.bf16.msra.mxu0 %v3769
    %4558 = vmatpush.bf16.msra.mxu0 %v3761
    %4559 = vmatpush.bf16.msra.mxu0 %v3753
    %4560 = vmatpush.bf16.msra.mxu0 %v3745
    %4561 = vmatpush.bf16.msra.mxu0 %v3737
    %4562 = vmatpush.bf16.msra.mxu0 %v3729
    %4563 = vmatpush.bf16.msra.mxu0 %v3721
    %4564 = vmatmul.bf16.gmra.mxu0 %v1286
    %v4565 = vpop.f32.mrf.mxu0
    %v4566 = vadd.f32 %v4552, %v4565
    %v4567 = vpop.f32.mrf.mxu0
    %v4568 = vadd.f32 %v4554, %v4567
    %4569 = vdwg.mxu0
    %4570 = vmatpush.bf16.msra.mxu0 %v3841
    %4571 = vmatpush.bf16.msra.mxu0 %v3833
    %4572 = vmatpush.bf16.msra.mxu0 %v3825
    %4573 = vmatpush.bf16.msra.mxu0 %v3817
    %4574 = vmatpush.bf16.msra.mxu0 %v3809
    %4575 = vmatpush.bf16.msra.mxu0 %v3801
    %4576 = vmatpush.bf16.msra.mxu0 %v3793
    %4577 = vmatpush.bf16.msra.mxu0 %v3785
    %4578 = vmatmul.bf16.gmra.mxu0 %v1287
    %v4579 = vpop.f32.mrf.mxu0
    %v4580 = vadd.f32 %v4566, %v4579
    %v4581 = vpop.f32.mrf.mxu0
    %v4582 = vadd.f32 %v4568, %v4581
    %4583 = vdwg.mxu0
    %4584 = vmatpush.bf16.msra.mxu0 %v3394
    %4585 = vmatpush.bf16.msra.mxu0 %v3386
    %4586 = vmatpush.bf16.msra.mxu0 %v3378
    %4587 = vmatpush.bf16.msra.mxu0 %v3370
    %4588 = vmatpush.bf16.msra.mxu0 %v3362
    %4589 = vmatpush.bf16.msra.mxu0 %v3354
    %4590 = vmatpush.bf16.msra.mxu0 %v3346
    %4591 = vmatpush.bf16.msra.mxu0 %v3338
    %4592 = vmatmul.bf16.gmra.mxu0 %v1280
    %v4593 = vpop.f32.mrf.mxu0
    %v4594 = vadd.f32 0.0, %v4593
    %v4595 = vpop.f32.mrf.mxu0
    %v4596 = vadd.f32 0.0, %v4595
    %4597 = vdwg.mxu0
    %4598 = vmatpush.bf16.msra.mxu0 %v3458
    %4599 = vmatpush.bf16.msra.mxu0 %v3450
    %4600 = vmatpush.bf16.msra.mxu0 %v3442
    %4601 = vmatpush.bf16.msra.mxu0 %v3434
    %4602 = vmatpush.bf16.msra.mxu0 %v3426
    %4603 = vmatpush.bf16.msra.mxu0 %v3418
    %4604 = vmatpush.bf16.msra.mxu0 %v3410
    %4605 = vmatpush.bf16.msra.mxu0 %v3402
    %4606 = vmatmul.bf16.gmra.mxu0 %v1281
    %v4607 = vpop.f32.mrf.mxu0
    %v4608 = vadd.f32 %v4594, %v4607
    %v4609 = vpop.f32.mrf.mxu0
    %v4610 = vadd.f32 %v4596, %v4609
    %4611 = vdwg.mxu0
    %4612 = vmatpush.bf16.msra.mxu0 %v3522
    %4613 = vmatpush.bf16.msra.mxu0 %v3514
    %4614 = vmatpush.bf16.msra.mxu0 %v3506
    %4615 = vmatpush.bf16.msra.mxu0 %v3498
    %4616 = vmatpush.bf16.msra.mxu0 %v3490
    %4617 = vmatpush.bf16.msra.mxu0 %v3482
    %4618 = vmatpush.bf16.msra.mxu0 %v3474
    %4619 = vmatpush.bf16.msra.mxu0 %v3466
    %4620 = vmatmul.bf16.gmra.mxu0 %v1282
    %v4621 = vpop.f32.mrf.mxu0
    %v4622 = vadd.f32 %v4608, %v4621
    %v4623 = vpop.f32.mrf.mxu0
    %v4624 = vadd.f32 %v4610, %v4623
    %4625 = vdwg.mxu0
    %4626 = vmatpush.bf16.msra.mxu0 %v3586
    %4627 = vmatpush.bf16.msra.mxu0 %v3578
    %4628 = vmatpush.bf16.msra.mxu0 %v3570
    %4629 = vmatpush.bf16.msra.mxu0 %v3562
    %4630 = vmatpush.bf16.msra.mxu0 %v3554
    %4631 = vmatpush.bf16.msra.mxu0 %v3546
    %4632 = vmatpush.bf16.msra.mxu0 %v3538
    %4633 = vmatpush.bf16.msra.mxu0 %v3530
    %4634 = vmatmul.bf16.gmra.mxu0 %v1283
    %v4635 = vpop.f32.mrf.mxu0
    %v4636 = vadd.f32 %v4622, %v4635
    %v4637 = vpop.f32.mrf.mxu0
    %v4638 = vadd.f32 %v4624, %v4637
    %4639 = vdwg.mxu0
    %4640 = vmatpush.bf16.msra.mxu0 %v3650
    %4641 = vmatpush.bf16.msra.mxu0 %v3642
    %4642 = vmatpush.bf16.msra.mxu0 %v3634
    %4643 = vmatpush.bf16.msra.mxu0 %v3626
    %4644 = vmatpush.bf16.msra.mxu0 %v3618
    %4645 = vmatpush.bf16.msra.mxu0 %v3610
    %4646 = vmatpush.bf16.msra.mxu0 %v3602
    %4647 = vmatpush.bf16.msra.mxu0 %v3594
    %4648 = vmatmul.bf16.gmra.mxu0 %v1284
    %v4649 = vpop.f32.mrf.mxu0
    %v4650 = vadd.f32 %v4636, %v4649
    %v4651 = vpop.f32.mrf.mxu0
    %v4652 = vadd.f32 %v4638, %v4651
    %4653 = vdwg.mxu0
    %4654 = vmatpush.bf16.msra.mxu0 %v3714
    %4655 = vmatpush.bf16.msra.mxu0 %v3706
    %4656 = vmatpush.bf16.msra.mxu0 %v3698
    %4657 = vmatpush.bf16.msra.mxu0 %v3690
    %4658 = vmatpush.bf16.msra.mxu0 %v3682
    %4659 = vmatpush.bf16.msra.mxu0 %v3674
    %4660 = vmatpush.bf16.msra.mxu0 %v3666
    %4661 = vmatpush.bf16.msra.mxu0 %v3658
    %4662 = vmatmul.bf16.gmra.mxu0 %v1285
    %v4663 = vpop.f32.mrf.mxu0
    %v4664 = vadd.f32 %v4650, %v4663
    %v4665 = vpop.f32.mrf.mxu0
    %v4666 = vadd.f32 %v4652, %v4665
    %4667 = vdwg.mxu0
    %4668 = vmatpush.bf16.msra.mxu0 %v3778
    %4669 = vmatpush.bf16.msra.mxu0 %v3770
    %4670 = vmatpush.bf16.msra.mxu0 %v3762
    %4671 = vmatpush.bf16.msra.mxu0 %v3754
    %4672 = vmatpush.bf16.msra.mxu0 %v3746
    %4673 = vmatpush.bf16.msra.mxu0 %v3738
    %4674 = vmatpush.bf16.msra.mxu0 %v3730
    %4675 = vmatpush.bf16.msra.mxu0 %v3722
    %4676 = vmatmul.bf16.gmra.mxu0 %v1286
    %v4677 = vpop.f32.mrf.mxu0
    %v4678 = vadd.f32 %v4664, %v4677
    %v4679 = vpop.f32.mrf.mxu0
    %v4680 = vadd.f32 %v4666, %v4679
    %4681 = vdwg.mxu0
    %4682 = vmatpush.bf16.msra.mxu0 %v3842
    %4683 = vmatpush.bf16.msra.mxu0 %v3834
    %4684 = vmatpush.bf16.msra.mxu0 %v3826
    %4685 = vmatpush.bf16.msra.mxu0 %v3818
    %4686 = vmatpush.bf16.msra.mxu0 %v3810
    %4687 = vmatpush.bf16.msra.mxu0 %v3802
    %4688 = vmatpush.bf16.msra.mxu0 %v3794
    %4689 = vmatpush.bf16.msra.mxu0 %v3786
    %4690 = vmatmul.bf16.gmra.mxu0 %v1287
    %v4691 = vpop.f32.mrf.mxu0
    %v4692 = vadd.f32 %v4678, %v4691
    %v4693 = vpop.f32.mrf.mxu0
    %v4694 = vadd.f32 %v4680, %v4693
    %4695 = vdwg.mxu0
    %4696 = vmatpush.bf16.msra.mxu0 %v3395
    %4697 = vmatpush.bf16.msra.mxu0 %v3387
    %4698 = vmatpush.bf16.msra.mxu0 %v3379
    %4699 = vmatpush.bf16.msra.mxu0 %v3371
    %4700 = vmatpush.bf16.msra.mxu0 %v3363
    %4701 = vmatpush.bf16.msra.mxu0 %v3355
    %4702 = vmatpush.bf16.msra.mxu0 %v3347
    %4703 = vmatpush.bf16.msra.mxu0 %v3339
    %4704 = vmatmul.bf16.gmra.mxu0 %v1280
    %v4705 = vpop.f32.mrf.mxu0
    %v4706 = vadd.f32 0.0, %v4705
    %v4707 = vpop.f32.mrf.mxu0
    %v4708 = vadd.f32 0.0, %v4707
    %4709 = vdwg.mxu0
    %4710 = vmatpush.bf16.msra.mxu0 %v3459
    %4711 = vmatpush.bf16.msra.mxu0 %v3451
    %4712 = vmatpush.bf16.msra.mxu0 %v3443
    %4713 = vmatpush.bf16.msra.mxu0 %v3435
    %4714 = vmatpush.bf16.msra.mxu0 %v3427
    %4715 = vmatpush.bf16.msra.mxu0 %v3419
    %4716 = vmatpush.bf16.msra.mxu0 %v3411
    %4717 = vmatpush.bf16.msra.mxu0 %v3403
    %4718 = vmatmul.bf16.gmra.mxu0 %v1281
    %v4719 = vpop.f32.mrf.mxu0
    %v4720 = vadd.f32 %v4706, %v4719
    %v4721 = vpop.f32.mrf.mxu0
    %v4722 = vadd.f32 %v4708, %v4721
    %4723 = vdwg.mxu0
    %4724 = vmatpush.bf16.msra.mxu0 %v3523
    %4725 = vmatpush.bf16.msra.mxu0 %v3515
    %4726 = vmatpush.bf16.msra.mxu0 %v3507
    %4727 = vmatpush.bf16.msra.mxu0 %v3499
    %4728 = vmatpush.bf16.msra.mxu0 %v3491
    %4729 = vmatpush.bf16.msra.mxu0 %v3483
    %4730 = vmatpush.bf16.msra.mxu0 %v3475
    %4731 = vmatpush.bf16.msra.mxu0 %v3467
    %4732 = vmatmul.bf16.gmra.mxu0 %v1282
    %v4733 = vpop.f32.mrf.mxu0
    %v4734 = vadd.f32 %v4720, %v4733
    %v4735 = vpop.f32.mrf.mxu0
    %v4736 = vadd.f32 %v4722, %v4735
    %4737 = vdwg.mxu0
    %4738 = vmatpush.bf16.msra.mxu0 %v3587
    %4739 = vmatpush.bf16.msra.mxu0 %v3579
    %4740 = vmatpush.bf16.msra.mxu0 %v3571
    %4741 = vmatpush.bf16.msra.mxu0 %v3563
    %4742 = vmatpush.bf16.msra.mxu0 %v3555
    %4743 = vmatpush.bf16.msra.mxu0 %v3547
    %4744 = vmatpush.bf16.msra.mxu0 %v3539
    %4745 = vmatpush.bf16.msra.mxu0 %v3531
    %4746 = vmatmul.bf16.gmra.mxu0 %v1283
    %v4747 = vpop.f32.mrf.mxu0
    %v4748 = vadd.f32 %v4734, %v4747
    %v4749 = vpop.f32.mrf.mxu0
    %v4750 = vadd.f32 %v4736, %v4749
    %4751 = vdwg.mxu0
    %4752 = vmatpush.bf16.msra.mxu0 %v3651
    %4753 = vmatpush.bf16.msra.mxu0 %v3643
    %4754 = vmatpush.bf16.msra.mxu0 %v3635
    %4755 = vmatpush.bf16.msra.mxu0 %v3627
    %4756 = vmatpush.bf16.msra.mxu0 %v3619
    %4757 = vmatpush.bf16.msra.mxu0 %v3611
    %4758 = vmatpush.bf16.msra.mxu0 %v3603
    %4759 = vmatpush.bf16.msra.mxu0 %v3595
    %4760 = vmatmul.bf16.gmra.mxu0 %v1284
    %v4761 = vpop.f32.mrf.mxu0
    %v4762 = vadd.f32 %v4748, %v4761
    %v4763 = vpop.f32.mrf.mxu0
    %v4764 = vadd.f32 %v4750, %v4763
    %4765 = vdwg.mxu0
    %4766 = vmatpush.bf16.msra.mxu0 %v3715
    %4767 = vmatpush.bf16.msra.mxu0 %v3707
    %4768 = vmatpush.bf16.msra.mxu0 %v3699
    %4769 = vmatpush.bf16.msra.mxu0 %v3691
    %4770 = vmatpush.bf16.msra.mxu0 %v3683
    %4771 = vmatpush.bf16.msra.mxu0 %v3675
    %4772 = vmatpush.bf16.msra.mxu0 %v3667
    %4773 = vmatpush.bf16.msra.mxu0 %v3659
    %4774 = vmatmul.bf16.gmra.mxu0 %v1285
    %v4775 = vpop.f32.mrf.mxu0
    %v4776 = vadd.f32 %v4762, %v4775
    %v4777 = vpop.f32.mrf.mxu0
    %v4778 = vadd.f32 %v4764, %v4777
    %4779 = vdwg.mxu0
    %4780 = vmatpush.bf16.msra.mxu0 %v3779
    %4781 = vmatpush.bf16.msra.mxu0 %v3771
    %4782 = vmatpush.bf16.msra.mxu0 %v3763
    %4783 = vmatpush.bf16.msra.mxu0 %v3755
    %4784 = vmatpush.bf16.msra.mxu0 %v3747
    %4785 = vmatpush.bf16.msra.mxu0 %v3739
    %4786 = vmatpush.bf16.msra.mxu0 %v3731
    %4787 = vmatpush.bf16.msra.mxu0 %v3723
    %4788 = vmatmul.bf16.gmra.mxu0 %v1286
    %v4789 = vpop.f32.mrf.mxu0
    %v4790 = vadd.f32 %v4776, %v4789
    %v4791 = vpop.f32.mrf.mxu0
    %v4792 = vadd.f32 %v4778, %v4791
    %4793 = vdwg.mxu0
    %4794 = vmatpush.bf16.msra.mxu0 %v3843
    %4795 = vmatpush.bf16.msra.mxu0 %v3835
    %4796 = vmatpush.bf16.msra.mxu0 %v3827
    %4797 = vmatpush.bf16.msra.mxu0 %v3819
    %4798 = vmatpush.bf16.msra.mxu0 %v3811
    %4799 = vmatpush.bf16.msra.mxu0 %v3803
    %4800 = vmatpush.bf16.msra.mxu0 %v3795
    %4801 = vmatpush.bf16.msra.mxu0 %v3787
    %4802 = vmatmul.bf16.gmra.mxu0 %v1287
    %v4803 = vpop.f32.mrf.mxu0
    %v4804 = vadd.f32 %v4790, %v4803
    %v4805 = vpop.f32.mrf.mxu0
    %v4806 = vadd.f32 %v4792, %v4805
    %4807 = vdwg.mxu0
    %4808 = vmatpush.bf16.msra.mxu0 %v3396
    %4809 = vmatpush.bf16.msra.mxu0 %v3388
    %4810 = vmatpush.bf16.msra.mxu0 %v3380
    %4811 = vmatpush.bf16.msra.mxu0 %v3372
    %4812 = vmatpush.bf16.msra.mxu0 %v3364
    %4813 = vmatpush.bf16.msra.mxu0 %v3356
    %4814 = vmatpush.bf16.msra.mxu0 %v3348
    %4815 = vmatpush.bf16.msra.mxu0 %v3340
    %4816 = vmatmul.bf16.gmra.mxu0 %v1280
    %v4817 = vpop.f32.mrf.mxu0
    %v4818 = vadd.f32 0.0, %v4817
    %v4819 = vpop.f32.mrf.mxu0
    %v4820 = vadd.f32 0.0, %v4819
    %4821 = vdwg.mxu0
    %4822 = vmatpush.bf16.msra.mxu0 %v3460
    %4823 = vmatpush.bf16.msra.mxu0 %v3452
    %4824 = vmatpush.bf16.msra.mxu0 %v3444
    %4825 = vmatpush.bf16.msra.mxu0 %v3436
    %4826 = vmatpush.bf16.msra.mxu0 %v3428
    %4827 = vmatpush.bf16.msra.mxu0 %v3420
    %4828 = vmatpush.bf16.msra.mxu0 %v3412
    %4829 = vmatpush.bf16.msra.mxu0 %v3404
    %4830 = vmatmul.bf16.gmra.mxu0 %v1281
    %v4831 = vpop.f32.mrf.mxu0
    %v4832 = vadd.f32 %v4818, %v4831
    %v4833 = vpop.f32.mrf.mxu0
    %v4834 = vadd.f32 %v4820, %v4833
    %4835 = vdwg.mxu0
    %4836 = vmatpush.bf16.msra.mxu0 %v3524
    %4837 = vmatpush.bf16.msra.mxu0 %v3516
    %4838 = vmatpush.bf16.msra.mxu0 %v3508
    %4839 = vmatpush.bf16.msra.mxu0 %v3500
    %4840 = vmatpush.bf16.msra.mxu0 %v3492
    %4841 = vmatpush.bf16.msra.mxu0 %v3484
    %4842 = vmatpush.bf16.msra.mxu0 %v3476
    %4843 = vmatpush.bf16.msra.mxu0 %v3468
    %4844 = vmatmul.bf16.gmra.mxu0 %v1282
    %v4845 = vpop.f32.mrf.mxu0
    %v4846 = vadd.f32 %v4832, %v4845
    %v4847 = vpop.f32.mrf.mxu0
    %v4848 = vadd.f32 %v4834, %v4847
    %4849 = vdwg.mxu0
    %4850 = vmatpush.bf16.msra.mxu0 %v3588
    %4851 = vmatpush.bf16.msra.mxu0 %v3580
    %4852 = vmatpush.bf16.msra.mxu0 %v3572
    %4853 = vmatpush.bf16.msra.mxu0 %v3564
    %4854 = vmatpush.bf16.msra.mxu0 %v3556
    %4855 = vmatpush.bf16.msra.mxu0 %v3548
    %4856 = vmatpush.bf16.msra.mxu0 %v3540
    %4857 = vmatpush.bf16.msra.mxu0 %v3532
    %4858 = vmatmul.bf16.gmra.mxu0 %v1283
    %v4859 = vpop.f32.mrf.mxu0
    %v4860 = vadd.f32 %v4846, %v4859
    %v4861 = vpop.f32.mrf.mxu0
    %v4862 = vadd.f32 %v4848, %v4861
    %4863 = vdwg.mxu0
    %4864 = vmatpush.bf16.msra.mxu0 %v3652
    %4865 = vmatpush.bf16.msra.mxu0 %v3644
    %4866 = vmatpush.bf16.msra.mxu0 %v3636
    %4867 = vmatpush.bf16.msra.mxu0 %v3628
    %4868 = vmatpush.bf16.msra.mxu0 %v3620
    %4869 = vmatpush.bf16.msra.mxu0 %v3612
    %4870 = vmatpush.bf16.msra.mxu0 %v3604
    %4871 = vmatpush.bf16.msra.mxu0 %v3596
    %4872 = vmatmul.bf16.gmra.mxu0 %v1284
    %v4873 = vpop.f32.mrf.mxu0
    %v4874 = vadd.f32 %v4860, %v4873
    %v4875 = vpop.f32.mrf.mxu0
    %v4876 = vadd.f32 %v4862, %v4875
    %4877 = vdwg.mxu0
    %4878 = vmatpush.bf16.msra.mxu0 %v3716
    %4879 = vmatpush.bf16.msra.mxu0 %v3708
    %4880 = vmatpush.bf16.msra.mxu0 %v3700
    %4881 = vmatpush.bf16.msra.mxu0 %v3692
    %4882 = vmatpush.bf16.msra.mxu0 %v3684
    %4883 = vmatpush.bf16.msra.mxu0 %v3676
    %4884 = vmatpush.bf16.msra.mxu0 %v3668
    %4885 = vmatpush.bf16.msra.mxu0 %v3660
    %4886 = vmatmul.bf16.gmra.mxu0 %v1285
    %v4887 = vpop.f32.mrf.mxu0
    %v4888 = vadd.f32 %v4874, %v4887
    %v4889 = vpop.f32.mrf.mxu0
    %v4890 = vadd.f32 %v4876, %v4889
    %4891 = vdwg.mxu0
    %4892 = vmatpush.bf16.msra.mxu0 %v3780
    %4893 = vmatpush.bf16.msra.mxu0 %v3772
    %4894 = vmatpush.bf16.msra.mxu0 %v3764
    %4895 = vmatpush.bf16.msra.mxu0 %v3756
    %4896 = vmatpush.bf16.msra.mxu0 %v3748
    %4897 = vmatpush.bf16.msra.mxu0 %v3740
    %4898 = vmatpush.bf16.msra.mxu0 %v3732
    %4899 = vmatpush.bf16.msra.mxu0 %v3724
    %4900 = vmatmul.bf16.gmra.mxu0 %v1286
    %v4901 = vpop.f32.mrf.mxu0
    %v4902 = vadd.f32 %v4888, %v4901
    %v4903 = vpop.f32.mrf.mxu0
    %v4904 = vadd.f32 %v4890, %v4903
    %4905 = vdwg.mxu0
    %4906 = vmatpush.bf16.msra.mxu0 %v3844
    %4907 = vmatpush.bf16.msra.mxu0 %v3836
    %4908 = vmatpush.bf16.msra.mxu0 %v3828
    %4909 = vmatpush.bf16.msra.mxu0 %v3820
    %4910 = vmatpush.bf16.msra.mxu0 %v3812
    %4911 = vmatpush.bf16.msra.mxu0 %v3804
    %4912 = vmatpush.bf16.msra.mxu0 %v3796
    %4913 = vmatpush.bf16.msra.mxu0 %v3788
    %4914 = vmatmul.bf16.gmra.mxu0 %v1287
    %v4915 = vpop.f32.mrf.mxu0
    %v4916 = vadd.f32 %v4902, %v4915
    %v4917 = vpop.f32.mrf.mxu0
    %v4918 = vadd.f32 %v4904, %v4917
    %4919 = vdwg.mxu0
    %4920 = vmatpush.bf16.msra.mxu0 %v3397
    %4921 = vmatpush.bf16.msra.mxu0 %v3389
    %4922 = vmatpush.bf16.msra.mxu0 %v3381
    %4923 = vmatpush.bf16.msra.mxu0 %v3373
    %4924 = vmatpush.bf16.msra.mxu0 %v3365
    %4925 = vmatpush.bf16.msra.mxu0 %v3357
    %4926 = vmatpush.bf16.msra.mxu0 %v3349
    %4927 = vmatpush.bf16.msra.mxu0 %v3341
    %4928 = vmatmul.bf16.gmra.mxu0 %v1280
    %v4929 = vpop.f32.mrf.mxu0
    %v4930 = vadd.f32 0.0, %v4929
    %v4931 = vpop.f32.mrf.mxu0
    %v4932 = vadd.f32 0.0, %v4931
    %4933 = vdwg.mxu0
    %4934 = vmatpush.bf16.msra.mxu0 %v3461
    %4935 = vmatpush.bf16.msra.mxu0 %v3453
    %4936 = vmatpush.bf16.msra.mxu0 %v3445
    %4937 = vmatpush.bf16.msra.mxu0 %v3437
    %4938 = vmatpush.bf16.msra.mxu0 %v3429
    %4939 = vmatpush.bf16.msra.mxu0 %v3421
    %4940 = vmatpush.bf16.msra.mxu0 %v3413
    %4941 = vmatpush.bf16.msra.mxu0 %v3405
    %4942 = vmatmul.bf16.gmra.mxu0 %v1281
    %v4943 = vpop.f32.mrf.mxu0
    %v4944 = vadd.f32 %v4930, %v4943
    %v4945 = vpop.f32.mrf.mxu0
    %v4946 = vadd.f32 %v4932, %v4945
    %4947 = vdwg.mxu0
    %4948 = vmatpush.bf16.msra.mxu0 %v3525
    %4949 = vmatpush.bf16.msra.mxu0 %v3517
    %4950 = vmatpush.bf16.msra.mxu0 %v3509
    %4951 = vmatpush.bf16.msra.mxu0 %v3501
    %4952 = vmatpush.bf16.msra.mxu0 %v3493
    %4953 = vmatpush.bf16.msra.mxu0 %v3485
    %4954 = vmatpush.bf16.msra.mxu0 %v3477
    %4955 = vmatpush.bf16.msra.mxu0 %v3469
    %4956 = vmatmul.bf16.gmra.mxu0 %v1282
    %v4957 = vpop.f32.mrf.mxu0
    %v4958 = vadd.f32 %v4944, %v4957
    %v4959 = vpop.f32.mrf.mxu0
    %v4960 = vadd.f32 %v4946, %v4959
    %4961 = vdwg.mxu0
    %4962 = vmatpush.bf16.msra.mxu0 %v3589
    %4963 = vmatpush.bf16.msra.mxu0 %v3581
    %4964 = vmatpush.bf16.msra.mxu0 %v3573
    %4965 = vmatpush.bf16.msra.mxu0 %v3565
    %4966 = vmatpush.bf16.msra.mxu0 %v3557
    %4967 = vmatpush.bf16.msra.mxu0 %v3549
    %4968 = vmatpush.bf16.msra.mxu0 %v3541
    %4969 = vmatpush.bf16.msra.mxu0 %v3533
    %4970 = vmatmul.bf16.gmra.mxu0 %v1283
    %v4971 = vpop.f32.mrf.mxu0
    %v4972 = vadd.f32 %v4958, %v4971
    %v4973 = vpop.f32.mrf.mxu0
    %v4974 = vadd.f32 %v4960, %v4973
    %4975 = vdwg.mxu0
    %4976 = vmatpush.bf16.msra.mxu0 %v3653
    %4977 = vmatpush.bf16.msra.mxu0 %v3645
    %4978 = vmatpush.bf16.msra.mxu0 %v3637
    %4979 = vmatpush.bf16.msra.mxu0 %v3629
    %4980 = vmatpush.bf16.msra.mxu0 %v3621
    %4981 = vmatpush.bf16.msra.mxu0 %v3613
    %4982 = vmatpush.bf16.msra.mxu0 %v3605
    %4983 = vmatpush.bf16.msra.mxu0 %v3597
    %4984 = vmatmul.bf16.gmra.mxu0 %v1284
    %v4985 = vpop.f32.mrf.mxu0
    %v4986 = vadd.f32 %v4972, %v4985
    %v4987 = vpop.f32.mrf.mxu0
    %v4988 = vadd.f32 %v4974, %v4987
    %4989 = vdwg.mxu0
    %4990 = vmatpush.bf16.msra.mxu0 %v3717
    %4991 = vmatpush.bf16.msra.mxu0 %v3709
    %4992 = vmatpush.bf16.msra.mxu0 %v3701
    %4993 = vmatpush.bf16.msra.mxu0 %v3693
    %4994 = vmatpush.bf16.msra.mxu0 %v3685
    %4995 = vmatpush.bf16.msra.mxu0 %v3677
    %4996 = vmatpush.bf16.msra.mxu0 %v3669
    %4997 = vmatpush.bf16.msra.mxu0 %v3661
    %4998 = vmatmul.bf16.gmra.mxu0 %v1285
    %v4999 = vpop.f32.mrf.mxu0
    %v5000 = vadd.f32 %v4986, %v4999
    %v5001 = vpop.f32.mrf.mxu0
    %v5002 = vadd.f32 %v4988, %v5001
    %5003 = vdwg.mxu0
    %5004 = vmatpush.bf16.msra.mxu0 %v3781
    %5005 = vmatpush.bf16.msra.mxu0 %v3773
    %5006 = vmatpush.bf16.msra.mxu0 %v3765
    %5007 = vmatpush.bf16.msra.mxu0 %v3757
    %5008 = vmatpush.bf16.msra.mxu0 %v3749
    %5009 = vmatpush.bf16.msra.mxu0 %v3741
    %5010 = vmatpush.bf16.msra.mxu0 %v3733
    %5011 = vmatpush.bf16.msra.mxu0 %v3725
    %5012 = vmatmul.bf16.gmra.mxu0 %v1286
    %v5013 = vpop.f32.mrf.mxu0
    %v5014 = vadd.f32 %v5000, %v5013
    %v5015 = vpop.f32.mrf.mxu0
    %v5016 = vadd.f32 %v5002, %v5015
    %5017 = vdwg.mxu0
    %5018 = vmatpush.bf16.msra.mxu0 %v3845
    %5019 = vmatpush.bf16.msra.mxu0 %v3837
    %5020 = vmatpush.bf16.msra.mxu0 %v3829
    %5021 = vmatpush.bf16.msra.mxu0 %v3821
    %5022 = vmatpush.bf16.msra.mxu0 %v3813
    %5023 = vmatpush.bf16.msra.mxu0 %v3805
    %5024 = vmatpush.bf16.msra.mxu0 %v3797
    %5025 = vmatpush.bf16.msra.mxu0 %v3789
    %5026 = vmatmul.bf16.gmra.mxu0 %v1287
    %v5027 = vpop.f32.mrf.mxu0
    %v5028 = vadd.f32 %v5014, %v5027
    %v5029 = vpop.f32.mrf.mxu0
    %v5030 = vadd.f32 %v5016, %v5029
    %5031 = vdwg.mxu0
    %5032 = vmatpush.bf16.msra.mxu0 %v3398
    %5033 = vmatpush.bf16.msra.mxu0 %v3390
    %5034 = vmatpush.bf16.msra.mxu0 %v3382
    %5035 = vmatpush.bf16.msra.mxu0 %v3374
    %5036 = vmatpush.bf16.msra.mxu0 %v3366
    %5037 = vmatpush.bf16.msra.mxu0 %v3358
    %5038 = vmatpush.bf16.msra.mxu0 %v3350
    %5039 = vmatpush.bf16.msra.mxu0 %v3342
    %5040 = vmatmul.bf16.gmra.mxu0 %v1280
    %v5041 = vpop.f32.mrf.mxu0
    %v5042 = vadd.f32 0.0, %v5041
    %v5043 = vpop.f32.mrf.mxu0
    %v5044 = vadd.f32 0.0, %v5043
    %5045 = vdwg.mxu0
    %5046 = vmatpush.bf16.msra.mxu0 %v3462
    %5047 = vmatpush.bf16.msra.mxu0 %v3454
    %5048 = vmatpush.bf16.msra.mxu0 %v3446
    %5049 = vmatpush.bf16.msra.mxu0 %v3438
    %5050 = vmatpush.bf16.msra.mxu0 %v3430
    %5051 = vmatpush.bf16.msra.mxu0 %v3422
    %5052 = vmatpush.bf16.msra.mxu0 %v3414
    %5053 = vmatpush.bf16.msra.mxu0 %v3406
    %5054 = vmatmul.bf16.gmra.mxu0 %v1281
    %v5055 = vpop.f32.mrf.mxu0
    %v5056 = vadd.f32 %v5042, %v5055
    %v5057 = vpop.f32.mrf.mxu0
    %v5058 = vadd.f32 %v5044, %v5057
    %5059 = vdwg.mxu0
    %5060 = vmatpush.bf16.msra.mxu0 %v3526
    %5061 = vmatpush.bf16.msra.mxu0 %v3518
    %5062 = vmatpush.bf16.msra.mxu0 %v3510
    %5063 = vmatpush.bf16.msra.mxu0 %v3502
    %5064 = vmatpush.bf16.msra.mxu0 %v3494
    %5065 = vmatpush.bf16.msra.mxu0 %v3486
    %5066 = vmatpush.bf16.msra.mxu0 %v3478
    %5067 = vmatpush.bf16.msra.mxu0 %v3470
    %5068 = vmatmul.bf16.gmra.mxu0 %v1282
    %v5069 = vpop.f32.mrf.mxu0
    %v5070 = vadd.f32 %v5056, %v5069
    %v5071 = vpop.f32.mrf.mxu0
    %v5072 = vadd.f32 %v5058, %v5071
    %5073 = vdwg.mxu0
    %5074 = vmatpush.bf16.msra.mxu0 %v3590
    %5075 = vmatpush.bf16.msra.mxu0 %v3582
    %5076 = vmatpush.bf16.msra.mxu0 %v3574
    %5077 = vmatpush.bf16.msra.mxu0 %v3566
    %5078 = vmatpush.bf16.msra.mxu0 %v3558
    %5079 = vmatpush.bf16.msra.mxu0 %v3550
    %5080 = vmatpush.bf16.msra.mxu0 %v3542
    %5081 = vmatpush.bf16.msra.mxu0 %v3534
    %5082 = vmatmul.bf16.gmra.mxu0 %v1283
    %v5083 = vpop.f32.mrf.mxu0
    %v5084 = vadd.f32 %v5070, %v5083
    %v5085 = vpop.f32.mrf.mxu0
    %v5086 = vadd.f32 %v5072, %v5085
    %5087 = vdwg.mxu0
    %5088 = vmatpush.bf16.msra.mxu0 %v3654
    %5089 = vmatpush.bf16.msra.mxu0 %v3646
    %5090 = vmatpush.bf16.msra.mxu0 %v3638
    %5091 = vmatpush.bf16.msra.mxu0 %v3630
    %5092 = vmatpush.bf16.msra.mxu0 %v3622
    %5093 = vmatpush.bf16.msra.mxu0 %v3614
    %5094 = vmatpush.bf16.msra.mxu0 %v3606
    %5095 = vmatpush.bf16.msra.mxu0 %v3598
    %5096 = vmatmul.bf16.gmra.mxu0 %v1284
    %v5097 = vpop.f32.mrf.mxu0
    %v5098 = vadd.f32 %v5084, %v5097
    %v5099 = vpop.f32.mrf.mxu0
    %v5100 = vadd.f32 %v5086, %v5099
    %5101 = vdwg.mxu0
    %5102 = vmatpush.bf16.msra.mxu0 %v3718
    %5103 = vmatpush.bf16.msra.mxu0 %v3710
    %5104 = vmatpush.bf16.msra.mxu0 %v3702
    %5105 = vmatpush.bf16.msra.mxu0 %v3694
    %5106 = vmatpush.bf16.msra.mxu0 %v3686
    %5107 = vmatpush.bf16.msra.mxu0 %v3678
    %5108 = vmatpush.bf16.msra.mxu0 %v3670
    %5109 = vmatpush.bf16.msra.mxu0 %v3662
    %5110 = vmatmul.bf16.gmra.mxu0 %v1285
    %v5111 = vpop.f32.mrf.mxu0
    %v5112 = vadd.f32 %v5098, %v5111
    %v5113 = vpop.f32.mrf.mxu0
    %v5114 = vadd.f32 %v5100, %v5113
    %5115 = vdwg.mxu0
    %5116 = vmatpush.bf16.msra.mxu0 %v3782
    %5117 = vmatpush.bf16.msra.mxu0 %v3774
    %5118 = vmatpush.bf16.msra.mxu0 %v3766
    %5119 = vmatpush.bf16.msra.mxu0 %v3758
    %5120 = vmatpush.bf16.msra.mxu0 %v3750
    %5121 = vmatpush.bf16.msra.mxu0 %v3742
    %5122 = vmatpush.bf16.msra.mxu0 %v3734
    %5123 = vmatpush.bf16.msra.mxu0 %v3726
    %5124 = vmatmul.bf16.gmra.mxu0 %v1286
    %v5125 = vpop.f32.mrf.mxu0
    %v5126 = vadd.f32 %v5112, %v5125
    %v5127 = vpop.f32.mrf.mxu0
    %v5128 = vadd.f32 %v5114, %v5127
    %5129 = vdwg.mxu0
    %5130 = vmatpush.bf16.msra.mxu0 %v3846
    %5131 = vmatpush.bf16.msra.mxu0 %v3838
    %5132 = vmatpush.bf16.msra.mxu0 %v3830
    %5133 = vmatpush.bf16.msra.mxu0 %v3822
    %5134 = vmatpush.bf16.msra.mxu0 %v3814
    %5135 = vmatpush.bf16.msra.mxu0 %v3806
    %5136 = vmatpush.bf16.msra.mxu0 %v3798
    %5137 = vmatpush.bf16.msra.mxu0 %v3790
    %5138 = vmatmul.bf16.gmra.mxu0 %v1287
    %v5139 = vpop.f32.mrf.mxu0
    %v5140 = vadd.f32 %v5126, %v5139
    %v5141 = vpop.f32.mrf.mxu0
    %v5142 = vadd.f32 %v5128, %v5141
    %5143 = vdwg.mxu0
    %5144 = vmatpush.bf16.msra.mxu0 %v3399
    %5145 = vmatpush.bf16.msra.mxu0 %v3391
    %5146 = vmatpush.bf16.msra.mxu0 %v3383
    %5147 = vmatpush.bf16.msra.mxu0 %v3375
    %5148 = vmatpush.bf16.msra.mxu0 %v3367
    %5149 = vmatpush.bf16.msra.mxu0 %v3359
    %5150 = vmatpush.bf16.msra.mxu0 %v3351
    %5151 = vmatpush.bf16.msra.mxu0 %v3343
    %5152 = vmatmul.bf16.gmra.mxu0 %v1280
    %v5153 = vpop.f32.mrf.mxu0
    %v5154 = vadd.f32 0.0, %v5153
    %v5155 = vpop.f32.mrf.mxu0
    %v5156 = vadd.f32 0.0, %v5155
    %5157 = vdwg.mxu0
    %5158 = vmatpush.bf16.msra.mxu0 %v3463
    %5159 = vmatpush.bf16.msra.mxu0 %v3455
    %5160 = vmatpush.bf16.msra.mxu0 %v3447
    %5161 = vmatpush.bf16.msra.mxu0 %v3439
    %5162 = vmatpush.bf16.msra.mxu0 %v3431
    %5163 = vmatpush.bf16.msra.mxu0 %v3423
    %5164 = vmatpush.bf16.msra.mxu0 %v3415
    %5165 = vmatpush.bf16.msra.mxu0 %v3407
    %5166 = vmatmul.bf16.gmra.mxu0 %v1281
    %v5167 = vpop.f32.mrf.mxu0
    %v5168 = vadd.f32 %v5154, %v5167
    %v5169 = vpop.f32.mrf.mxu0
    %v5170 = vadd.f32 %v5156, %v5169
    %5171 = vdwg.mxu0
    %5172 = vmatpush.bf16.msra.mxu0 %v3527
    %5173 = vmatpush.bf16.msra.mxu0 %v3519
    %5174 = vmatpush.bf16.msra.mxu0 %v3511
    %5175 = vmatpush.bf16.msra.mxu0 %v3503
    %5176 = vmatpush.bf16.msra.mxu0 %v3495
    %5177 = vmatpush.bf16.msra.mxu0 %v3487
    %5178 = vmatpush.bf16.msra.mxu0 %v3479
    %5179 = vmatpush.bf16.msra.mxu0 %v3471
    %5180 = vmatmul.bf16.gmra.mxu0 %v1282
    %v5181 = vpop.f32.mrf.mxu0
    %v5182 = vadd.f32 %v5168, %v5181
    %v5183 = vpop.f32.mrf.mxu0
    %v5184 = vadd.f32 %v5170, %v5183
    %5185 = vdwg.mxu0
    %5186 = vmatpush.bf16.msra.mxu0 %v3591
    %5187 = vmatpush.bf16.msra.mxu0 %v3583
    %5188 = vmatpush.bf16.msra.mxu0 %v3575
    %5189 = vmatpush.bf16.msra.mxu0 %v3567
    %5190 = vmatpush.bf16.msra.mxu0 %v3559
    %5191 = vmatpush.bf16.msra.mxu0 %v3551
    %5192 = vmatpush.bf16.msra.mxu0 %v3543
    %5193 = vmatpush.bf16.msra.mxu0 %v3535
    %5194 = vmatmul.bf16.gmra.mxu0 %v1283
    %v5195 = vpop.f32.mrf.mxu0
    %v5196 = vadd.f32 %v5182, %v5195
    %v5197 = vpop.f32.mrf.mxu0
    %v5198 = vadd.f32 %v5184, %v5197
    %5199 = vdwg.mxu0
    %5200 = vmatpush.bf16.msra.mxu0 %v3655
    %5201 = vmatpush.bf16.msra.mxu0 %v3647
    %5202 = vmatpush.bf16.msra.mxu0 %v3639
    %5203 = vmatpush.bf16.msra.mxu0 %v3631
    %5204 = vmatpush.bf16.msra.mxu0 %v3623
    %5205 = vmatpush.bf16.msra.mxu0 %v3615
    %5206 = vmatpush.bf16.msra.mxu0 %v3607
    %5207 = vmatpush.bf16.msra.mxu0 %v3599
    %5208 = vmatmul.bf16.gmra.mxu0 %v1284
    %v5209 = vpop.f32.mrf.mxu0
    %v5210 = vadd.f32 %v5196, %v5209
    %v5211 = vpop.f32.mrf.mxu0
    %v5212 = vadd.f32 %v5198, %v5211
    %5213 = vdwg.mxu0
    %5214 = vmatpush.bf16.msra.mxu0 %v3719
    %5215 = vmatpush.bf16.msra.mxu0 %v3711
    %5216 = vmatpush.bf16.msra.mxu0 %v3703
    %5217 = vmatpush.bf16.msra.mxu0 %v3695
    %5218 = vmatpush.bf16.msra.mxu0 %v3687
    %5219 = vmatpush.bf16.msra.mxu0 %v3679
    %5220 = vmatpush.bf16.msra.mxu0 %v3671
    %5221 = vmatpush.bf16.msra.mxu0 %v3663
    %5222 = vmatmul.bf16.gmra.mxu0 %v1285
    %v5223 = vpop.f32.mrf.mxu0
    %v5224 = vadd.f32 %v5210, %v5223
    %v5225 = vpop.f32.mrf.mxu0
    %v5226 = vadd.f32 %v5212, %v5225
    %5227 = vdwg.mxu0
    %5228 = vmatpush.bf16.msra.mxu0 %v3783
    %5229 = vmatpush.bf16.msra.mxu0 %v3775
    %5230 = vmatpush.bf16.msra.mxu0 %v3767
    %5231 = vmatpush.bf16.msra.mxu0 %v3759
    %5232 = vmatpush.bf16.msra.mxu0 %v3751
    %5233 = vmatpush.bf16.msra.mxu0 %v3743
    %5234 = vmatpush.bf16.msra.mxu0 %v3735
    %5235 = vmatpush.bf16.msra.mxu0 %v3727
    %5236 = vmatmul.bf16.gmra.mxu0 %v1286
    %v5237 = vpop.f32.mrf.mxu0
    %v5238 = vadd.f32 %v5224, %v5237
    %v5239 = vpop.f32.mrf.mxu0
    %v5240 = vadd.f32 %v5226, %v5239
    %5241 = vdwg.mxu0
    %5242 = vmatpush.bf16.msra.mxu0 %v3847
    %5243 = vmatpush.bf16.msra.mxu0 %v3839
    %5244 = vmatpush.bf16.msra.mxu0 %v3831
    %5245 = vmatpush.bf16.msra.mxu0 %v3823
    %5246 = vmatpush.bf16.msra.mxu0 %v3815
    %5247 = vmatpush.bf16.msra.mxu0 %v3807
    %5248 = vmatpush.bf16.msra.mxu0 %v3799
    %5249 = vmatpush.bf16.msra.mxu0 %v3791
    %5250 = vmatmul.bf16.gmra.mxu0 %v1287
    %v5251 = vpop.f32.mrf.mxu0
    %v5252 = vadd.f32 %v5238, %v5251
    %v5253 = vpop.f32.mrf.mxu0
    %v5254 = vadd.f32 %v5240, %v5253
    %5255 = vdwg.mxu0
    %v5256 = vpack.c.bf16 %v4580, %v4468
    %v5257 = vpack.c.bf16 %v4804, %v4692
    %v5258 = vpack.c.bf16 %v5028, %v4916
    %v5259 = vpack.c.bf16 %v5252, %v5140
    %v5260 = vpack.c.bf16 %v4582, %v4470
    %v5261 = vpack.c.bf16 %v4806, %v4694
    %v5262 = vpack.c.bf16 %v5030, %v4918
    %v5263 = vpack.c.bf16 %v5254, %v5142
    %v5264 = vld [vmem:[#allocation7] sm:$0xff]
    %v5266 = vperm.slane %v5264, 0
    %v5267 = vperm.slane %v5264, 1
    %v5268 = vperm.slane %v5264, 2
    %v5269 = vperm.slane %v5264, 3
    %v5270 = vperm.slane %v5264, 4
    %v5271 = vperm.slane %v5264, 5
    %v5272 = vperm.slane %v5264, 6
    %v5273 = vperm.slane %v5264, 7
    %v5282 = vpack.c.bf16 %v5267, %v5266
    %v5283 = vpack.c.bf16 %v5269, %v5268
    %v5284 = vpack.c.bf16 %v5271, %v5270
    %v5285 = vpack.c.bf16 %v5273, %v5272
    %v5290 = vunpack.c.l.b16 %v5282
    %v5291 = vunpack.c.h.b16 %v5282
    %v5292 = vunpack.c.l.b16 %v5283
    %v5293 = vunpack.c.h.b16 %v5283
    %v5294 = vunpack.c.l.b16 %v5284
    %v5295 = vunpack.c.h.b16 %v5284
    %v5296 = vunpack.c.l.b16 %v5285
    %v5297 = vunpack.c.h.b16 %v5285
    %v5298 = vpack.c.b16 %v5290, %v5290
    %v5299 = vpack.c.b16 %v5291, %v5291
    %v5300 = vpack.c.b16 %v5292, %v5292
    %v5301 = vpack.c.b16 %v5293, %v5293
    %v5302 = vpack.c.b16 %v5294, %v5294
    %v5303 = vpack.c.b16 %v5295, %v5295
    %v5304 = vpack.c.b16 %v5296, %v5296
    %v5305 = vpack.c.b16 %v5297, %v5297
    %v5307 = vpack.i.b16 %v5298, %v5298
    %v5309 = vperm.slane %v5307, 0
    %v5311 = vpack.i.b16 %v5299, %v5299
    %v5313 = vperm.slane %v5311, 0
    %v5315 = vpack.i.b16 %v5300, %v5300
    %v5317 = vperm.slane %v5315, 0
    %v5319 = vpack.i.b16 %v5301, %v5301
    %v5321 = vperm.slane %v5319, 0
    %v5323 = vpack.i.b16 %v5302, %v5302
    %v5325 = vperm.slane %v5323, 0
    %v5327 = vpack.i.b16 %v5303, %v5303
    %v5329 = vperm.slane %v5327, 0
    %v5331 = vpack.i.b16 %v5304, %v5304
    %v5333 = vperm.slane %v5331, 0
    %v5335 = vpack.i.b16 %v5305, %v5305
    %v5337 = vperm.slane %v5335, 0
    %v5338 = vunpack.c.l.bf16 %v5256
    %v5339 = vunpack.c.h.bf16 %v5256
    %v5340 = vunpack.c.l.bf16 %v5257
    %v5341 = vunpack.c.h.bf16 %v5257
    %v5342 = vunpack.c.l.bf16 %v5258
    %v5343 = vunpack.c.h.bf16 %v5258
    %v5344 = vunpack.c.l.bf16 %v5259
    %v5345 = vunpack.c.h.bf16 %v5259
    %v5346 = vunpack.c.l.bf16 %v5260
    %v5347 = vunpack.c.h.bf16 %v5260
    %v5348 = vunpack.c.l.bf16 %v5261
    %v5349 = vunpack.c.h.bf16 %v5261
    %v5350 = vunpack.c.l.bf16 %v5262
    %v5351 = vunpack.c.h.bf16 %v5262
    %v5352 = vunpack.c.l.bf16 %v5263
    %v5353 = vunpack.c.h.bf16 %v5263
    %v5354 = vunpack.c.l.bf16 %v5309
    %v5355 = vunpack.c.l.bf16 %v5313
    %v5356 = vunpack.c.l.bf16 %v5317
    %v5357 = vunpack.c.l.bf16 %v5321
    %v5358 = vunpack.c.l.bf16 %v5325
    %v5359 = vunpack.c.l.bf16 %v5329
    %v5360 = vunpack.c.l.bf16 %v5333
    %v5361 = vunpack.c.l.bf16 %v5337
    %v5362 = vadd.f32 %v5338, %v5354
    %v5363 = vadd.f32 %v5339, %v5355
    %v5364 = vadd.f32 %v5340, %v5356
    %v5365 = vadd.f32 %v5341, %v5357
    %v5366 = vadd.f32 %v5342, %v5358
    %v5367 = vadd.f32 %v5343, %v5359
    %v5368 = vadd.f32 %v5344, %v5360
    %v5369 = vadd.f32 %v5345, %v5361
    %v5370 = vadd.f32 %v5346, %v5354
    %v5371 = vadd.f32 %v5347, %v5355
    %v5372 = vadd.f32 %v5348, %v5356
    %v5373 = vadd.f32 %v5349, %v5357
    %v5374 = vadd.f32 %v5350, %v5358
    %v5375 = vadd.f32 %v5351, %v5359
    %v5376 = vadd.f32 %v5352, %v5360
    %v5377 = vadd.f32 %v5353, %v5361
    %v5378 = vpack.c.bf16 %v5363, %v5362
    %v5379 = vpack.c.bf16 %v5365, %v5364
    %v5380 = vpack.c.bf16 %v5367, %v5366
    %v5381 = vpack.c.bf16 %v5369, %v5368
    %v5382 = vpack.c.bf16 %v5371, %v5370
    %v5383 = vpack.c.bf16 %v5373, %v5372
    %v5384 = vpack.c.bf16 %v5375, %v5374
    %v5385 = vpack.c.bf16 %v5377, %v5376
    %v5386 = vunpack.c.l.bf16 %v5378
    %v5387 = vunpack.c.h.bf16 %v5378
    %v5388 = vunpack.c.l.bf16 %v5379
    %v5389 = vunpack.c.h.bf16 %v5379
    %v5390 = vunpack.c.l.bf16 %v5380
    %v5391 = vunpack.c.h.bf16 %v5380
    %v5392 = vunpack.c.l.bf16 %v5381
    %v5393 = vunpack.c.h.bf16 %v5381
    %v5394 = vunpack.c.l.bf16 %v5382
    %v5395 = vunpack.c.h.bf16 %v5382
    %v5396 = vunpack.c.l.bf16 %v5383
    %v5397 = vunpack.c.h.bf16 %v5383
    %v5398 = vunpack.c.l.bf16 %v5384
    %v5399 = vunpack.c.h.bf16 %v5384
    %v5400 = vunpack.c.l.bf16 %v5385
    %v5401 = vunpack.c.h.bf16 %v5385
    %v5402 = vmax.f32 %v5386, 0.0
    %v5403 = vmax.f32 %v5387, 0.0
    %v5404 = vmax.f32 %v5388, 0.0
    %v5405 = vmax.f32 %v5389, 0.0
    %v5406 = vmax.f32 %v5390, 0.0
    %v5407 = vmax.f32 %v5391, 0.0
    %v5408 = vmax.f32 %v5392, 0.0
    %v5409 = vmax.f32 %v5393, 0.0
    %v5410 = vmax.f32 %v5394, 0.0
    %v5411 = vmax.f32 %v5395, 0.0
    %v5412 = vmax.f32 %v5396, 0.0
    %v5413 = vmax.f32 %v5397, 0.0
    %v5414 = vmax.f32 %v5398, 0.0
    %v5415 = vmax.f32 %v5399, 0.0
    %v5416 = vmax.f32 %v5400, 0.0
    %v5417 = vmax.f32 %v5401, 0.0
    %v5418 = vpack.c.bf16 %v5410, %v5402
    %v5419 = vpack.c.bf16 %v5411, %v5403
    %v5420 = vpack.c.bf16 %v5412, %v5404
    %v5421 = vpack.c.bf16 %v5413, %v5405
    %v5422 = vpack.c.bf16 %v5414, %v5406
    %v5423 = vpack.c.bf16 %v5415, %v5407
    %v5424 = vpack.c.bf16 %v5416, %v5408
    %v5425 = vpack.c.bf16 %v5417, %v5409
    %v5426 = vld [vmem:[#allocation9] sm:$0xff]
    %v5427 = vld [vmem:[#allocation9 + $0x8] sm:$0xff]
    %v5428 = vld [vmem:[#allocation9 + $0x10] sm:$0xff]
    %v5429 = vld [vmem:[#allocation9 + $0x18] sm:$0xff]
    %v5430 = vld [vmem:[#allocation9 + $0x20] sm:$0xff]
    %v5431 = vld [vmem:[#allocation9 + $0x28] sm:$0xff]
    %v5432 = vld [vmem:[#allocation9 + $0x30] sm:$0xff]
    %v5433 = vld [vmem:[#allocation9 + $0x38] sm:$0xff]
    %v5434 = vld [vmem:[#allocation9 + $0x40] sm:$0xff]
    %v5435 = vld [vmem:[#allocation9 + $0x48] sm:$0xff]
    %v5436 = vld [vmem:[#allocation9 + $0x50] sm:$0xff]
    %v5437 = vld [vmem:[#allocation9 + $0x58] sm:$0xff]
    %v5438 = vld [vmem:[#allocation9 + $0x60] sm:$0xff]
    %v5439 = vld [vmem:[#allocation9 + $0x68] sm:$0xff]
    %v5440 = vld [vmem:[#allocation9 + $0x70] sm:$0xff]
    %v5441 = vld [vmem:[#allocation9 + $0x78] sm:$0xff]
    %v5442 = vld [vmem:[#allocation9 + $0x80] sm:$0xff]
    %v5443 = vld [vmem:[#allocation9 + $0x88] sm:$0xff]
    %v5444 = vld [vmem:[#allocation9 + $0x90] sm:$0xff]
    %v5445 = vld [vmem:[#allocation9 + $0x98] sm:$0xff]
    %v5446 = vld [vmem:[#allocation9 + $0xa0] sm:$0xff]
    %v5447 = vld [vmem:[#allocation9 + $0xa8] sm:$0xff]
    %v5448 = vld [vmem:[#allocation9 + $0xb0] sm:$0xff]
    %v5449 = vld [vmem:[#allocation9 + $0xb8] sm:$0xff]
    %v5450 = vld [vmem:[#allocation9 + $0xc0] sm:$0xff]
    %v5451 = vld [vmem:[#allocation9 + $0xc8] sm:$0xff]
    %v5452 = vld [vmem:[#allocation9 + $0xd0] sm:$0xff]
    %v5453 = vld [vmem:[#allocation9 + $0xd8] sm:$0xff]
    %v5454 = vld [vmem:[#allocation9 + $0xe0] sm:$0xff]
    %v5455 = vld [vmem:[#allocation9 + $0xe8] sm:$0xff]
    %v5456 = vld [vmem:[#allocation9 + $0xf0] sm:$0xff]
    %v5457 = vld [vmem:[#allocation9 + $0xf8] sm:$0xff]
    %v5458 = vld [vmem:[#allocation9 + $0x100] sm:$0xff]
    %v5459 = vld [vmem:[#allocation9 + $0x108] sm:$0xff]
    %v5460 = vld [vmem:[#allocation9 + $0x110] sm:$0xff]
    %v5461 = vld [vmem:[#allocation9 + $0x118] sm:$0xff]
    %v5462 = vld [vmem:[#allocation9 + $0x120] sm:$0xff]
    %v5463 = vld [vmem:[#allocation9 + $0x128] sm:$0xff]
    %v5464 = vld [vmem:[#allocation9 + $0x130] sm:$0xff]
    %v5465 = vld [vmem:[#allocation9 + $0x138] sm:$0xff]
    %v5466 = vld [vmem:[#allocation9 + $0x140] sm:$0xff]
    %v5467 = vld [vmem:[#allocation9 + $0x148] sm:$0xff]
    %v5468 = vld [vmem:[#allocation9 + $0x150] sm:$0xff]
    %v5469 = vld [vmem:[#allocation9 + $0x158] sm:$0xff]
    %v5470 = vld [vmem:[#allocation9 + $0x160] sm:$0xff]
    %v5471 = vld [vmem:[#allocation9 + $0x168] sm:$0xff]
    %v5472 = vld [vmem:[#allocation9 + $0x170] sm:$0xff]
    %v5473 = vld [vmem:[#allocation9 + $0x178] sm:$0xff]
    %v5474 = vld [vmem:[#allocation9 + $0x180] sm:$0xff]
    %v5475 = vld [vmem:[#allocation9 + $0x188] sm:$0xff]
    %v5476 = vld [vmem:[#allocation9 + $0x190] sm:$0xff]
    %v5477 = vld [vmem:[#allocation9 + $0x198] sm:$0xff]
    %v5478 = vld [vmem:[#allocation9 + $0x1a0] sm:$0xff]
    %v5479 = vld [vmem:[#allocation9 + $0x1a8] sm:$0xff]
    %v5480 = vld [vmem:[#allocation9 + $0x1b0] sm:$0xff]
    %v5481 = vld [vmem:[#allocation9 + $0x1b8] sm:$0xff]
    %v5482 = vld [vmem:[#allocation9 + $0x1c0] sm:$0xff]
    %v5483 = vld [vmem:[#allocation9 + $0x1c8] sm:$0xff]
    %v5484 = vld [vmem:[#allocation9 + $0x1d0] sm:$0xff]
    %v5485 = vld [vmem:[#allocation9 + $0x1d8] sm:$0xff]
    %v5486 = vld [vmem:[#allocation9 + $0x1e0] sm:$0xff]
    %v5487 = vld [vmem:[#allocation9 + $0x1e8] sm:$0xff]
    %v5488 = vld [vmem:[#allocation9 + $0x1f0] sm:$0xff]
    %v5489 = vld [vmem:[#allocation9 + $0x1f8] sm:$0xff]
    %v5490 = vld [vmem:[#allocation9 + $0x200] sm:$0xff]
    %v5491 = vld [vmem:[#allocation9 + $0x208] sm:$0xff]
    %v5492 = vld [vmem:[#allocation9 + $0x210] sm:$0xff]
    %v5493 = vld [vmem:[#allocation9 + $0x218] sm:$0xff]
    %v5494 = vld [vmem:[#allocation9 + $0x220] sm:$0xff]
    %v5495 = vld [vmem:[#allocation9 + $0x228] sm:$0xff]
    %v5496 = vld [vmem:[#allocation9 + $0x230] sm:$0xff]
    %v5497 = vld [vmem:[#allocation9 + $0x238] sm:$0xff]
    %v5498 = vld [vmem:[#allocation9 + $0x240] sm:$0xff]
    %v5499 = vld [vmem:[#allocation9 + $0x248] sm:$0xff]
    %v5500 = vld [vmem:[#allocation9 + $0x250] sm:$0xff]
    %v5501 = vld [vmem:[#allocation9 + $0x258] sm:$0xff]
    %v5502 = vld [vmem:[#allocation9 + $0x260] sm:$0xff]
    %v5503 = vld [vmem:[#allocation9 + $0x268] sm:$0xff]
    %v5504 = vld [vmem:[#allocation9 + $0x270] sm:$0xff]
    %v5505 = vld [vmem:[#allocation9 + $0x278] sm:$0xff]
    %v5506 = vld [vmem:[#allocation9 + $0x280] sm:$0xff]
    %v5507 = vld [vmem:[#allocation9 + $0x288] sm:$0xff]
    %v5508 = vld [vmem:[#allocation9 + $0x290] sm:$0xff]
    %v5509 = vld [vmem:[#allocation9 + $0x298] sm:$0xff]
    %v5510 = vld [vmem:[#allocation9 + $0x2a0] sm:$0xff]
    %v5511 = vld [vmem:[#allocation9 + $0x2a8] sm:$0xff]
    %v5512 = vld [vmem:[#allocation9 + $0x2b0] sm:$0xff]
    %v5513 = vld [vmem:[#allocation9 + $0x2b8] sm:$0xff]
    %v5514 = vld [vmem:[#allocation9 + $0x2c0] sm:$0xff]
    %v5515 = vld [vmem:[#allocation9 + $0x2c8] sm:$0xff]
    %v5516 = vld [vmem:[#allocation9 + $0x2d0] sm:$0xff]
    %v5517 = vld [vmem:[#allocation9 + $0x2d8] sm:$0xff]
    %v5518 = vld [vmem:[#allocation9 + $0x2e0] sm:$0xff]
    %v5519 = vld [vmem:[#allocation9 + $0x2e8] sm:$0xff]
    %v5520 = vld [vmem:[#allocation9 + $0x2f0] sm:$0xff]
    %v5521 = vld [vmem:[#allocation9 + $0x2f8] sm:$0xff]
    %v5522 = vld [vmem:[#allocation9 + $0x300] sm:$0xff]
    %v5523 = vld [vmem:[#allocation9 + $0x308] sm:$0xff]
    %v5524 = vld [vmem:[#allocation9 + $0x310] sm:$0xff]
    %v5525 = vld [vmem:[#allocation9 + $0x318] sm:$0xff]
    %v5526 = vld [vmem:[#allocation9 + $0x320] sm:$0xff]
    %v5527 = vld [vmem:[#allocation9 + $0x328] sm:$0xff]
    %v5528 = vld [vmem:[#allocation9 + $0x330] sm:$0xff]
    %v5529 = vld [vmem:[#allocation9 + $0x338] sm:$0xff]
    %v5530 = vld [vmem:[#allocation9 + $0x340] sm:$0xff]
    %v5531 = vld [vmem:[#allocation9 + $0x348] sm:$0xff]
    %v5532 = vld [vmem:[#allocation9 + $0x350] sm:$0xff]
    %v5533 = vld [vmem:[#allocation9 + $0x358] sm:$0xff]
    %v5534 = vld [vmem:[#allocation9 + $0x360] sm:$0xff]
    %v5535 = vld [vmem:[#allocation9 + $0x368] sm:$0xff]
    %v5536 = vld [vmem:[#allocation9 + $0x370] sm:$0xff]
    %v5537 = vld [vmem:[#allocation9 + $0x378] sm:$0xff]
    %v5538 = vld [vmem:[#allocation9 + $0x380] sm:$0xff]
    %v5539 = vld [vmem:[#allocation9 + $0x388] sm:$0xff]
    %v5540 = vld [vmem:[#allocation9 + $0x390] sm:$0xff]
    %v5541 = vld [vmem:[#allocation9 + $0x398] sm:$0xff]
    %v5542 = vld [vmem:[#allocation9 + $0x3a0] sm:$0xff]
    %v5543 = vld [vmem:[#allocation9 + $0x3a8] sm:$0xff]
    %v5544 = vld [vmem:[#allocation9 + $0x3b0] sm:$0xff]
    %v5545 = vld [vmem:[#allocation9 + $0x3b8] sm:$0xff]
    %v5546 = vld [vmem:[#allocation9 + $0x3c0] sm:$0xff]
    %v5547 = vld [vmem:[#allocation9 + $0x3c8] sm:$0xff]
    %v5548 = vld [vmem:[#allocation9 + $0x3d0] sm:$0xff]
    %v5549 = vld [vmem:[#allocation9 + $0x3d8] sm:$0xff]
    %v5550 = vld [vmem:[#allocation9 + $0x3e0] sm:$0xff]
    %v5551 = vld [vmem:[#allocation9 + $0x3e8] sm:$0xff]
    %v5552 = vld [vmem:[#allocation9 + $0x3f0] sm:$0xff]
    %v5553 = vld [vmem:[#allocation9 + $0x3f8] sm:$0xff]
    %v5554 = vld [vmem:[#allocation10] sm:$0x3]
    %v5556 = vperm.slane %v5554, 0
    %v5557 = vperm.slane %v5554, 1
    %v5688 = vunpack.c.l.b16 %v5426
    %v5689 = vunpack.c.h.b16 %v5426
    %v5690 = vunpack.c.l.b16 %v5427
    %v5691 = vunpack.c.h.b16 %v5427
    %v5692 = vunpack.c.l.b16 %v5428
    %v5693 = vunpack.c.h.b16 %v5428
    %v5694 = vunpack.c.l.b16 %v5429
    %v5695 = vunpack.c.h.b16 %v5429
    %v5696 = vunpack.c.l.b16 %v5430
    %v5697 = vunpack.c.h.b16 %v5430
    %v5698 = vunpack.c.l.b16 %v5431
    %v5699 = vunpack.c.h.b16 %v5431
    %v5700 = vunpack.c.l.b16 %v5432
    %v5701 = vunpack.c.h.b16 %v5432
    %v5702 = vunpack.c.l.b16 %v5433
    %v5703 = vunpack.c.h.b16 %v5433
    %v5704 = vunpack.c.l.b16 %v5434
    %v5705 = vunpack.c.h.b16 %v5434
    %v5706 = vunpack.c.l.b16 %v5435
    %v5707 = vunpack.c.h.b16 %v5435
    %v5708 = vunpack.c.l.b16 %v5436
    %v5709 = vunpack.c.h.b16 %v5436
    %v5710 = vunpack.c.l.b16 %v5437
    %v5711 = vunpack.c.h.b16 %v5437
    %v5712 = vunpack.c.l.b16 %v5438
    %v5713 = vunpack.c.h.b16 %v5438
    %v5714 = vunpack.c.l.b16 %v5439
    %v5715 = vunpack.c.h.b16 %v5439
    %v5716 = vunpack.c.l.b16 %v5440
    %v5717 = vunpack.c.h.b16 %v5440
    %v5718 = vunpack.c.l.b16 %v5441
    %v5719 = vunpack.c.h.b16 %v5441
    %v5720 = vunpack.c.l.b16 %v5442
    %v5721 = vunpack.c.h.b16 %v5442
    %v5722 = vunpack.c.l.b16 %v5443
    %v5723 = vunpack.c.h.b16 %v5443
    %v5724 = vunpack.c.l.b16 %v5444
    %v5725 = vunpack.c.h.b16 %v5444
    %v5726 = vunpack.c.l.b16 %v5445
    %v5727 = vunpack.c.h.b16 %v5445
    %v5728 = vunpack.c.l.b16 %v5446
    %v5729 = vunpack.c.h.b16 %v5446
    %v5730 = vunpack.c.l.b16 %v5447
    %v5731 = vunpack.c.h.b16 %v5447
    %v5732 = vunpack.c.l.b16 %v5448
    %v5733 = vunpack.c.h.b16 %v5448
    %v5734 = vunpack.c.l.b16 %v5449
    %v5735 = vunpack.c.h.b16 %v5449
    %v5736 = vunpack.c.l.b16 %v5450
    %v5737 = vunpack.c.h.b16 %v5450
    %v5738 = vunpack.c.l.b16 %v5451
    %v5739 = vunpack.c.h.b16 %v5451
    %v5740 = vunpack.c.l.b16 %v5452
    %v5741 = vunpack.c.h.b16 %v5452
    %v5742 = vunpack.c.l.b16 %v5453
    %v5743 = vunpack.c.h.b16 %v5453
    %v5744 = vunpack.c.l.b16 %v5454
    %v5745 = vunpack.c.h.b16 %v5454
    %v5746 = vunpack.c.l.b16 %v5455
    %v5747 = vunpack.c.h.b16 %v5455
    %v5748 = vunpack.c.l.b16 %v5456
    %v5749 = vunpack.c.h.b16 %v5456
    %v5750 = vunpack.c.l.b16 %v5457
    %v5751 = vunpack.c.h.b16 %v5457
    %v5752 = vunpack.c.l.b16 %v5458
    %v5753 = vunpack.c.h.b16 %v5458
    %v5754 = vunpack.c.l.b16 %v5459
    %v5755 = vunpack.c.h.b16 %v5459
    %v5756 = vunpack.c.l.b16 %v5460
    %v5757 = vunpack.c.h.b16 %v5460
    %v5758 = vunpack.c.l.b16 %v5461
    %v5759 = vunpack.c.h.b16 %v5461
    %v5760 = vunpack.c.l.b16 %v5462
    %v5761 = vunpack.c.h.b16 %v5462
    %v5762 = vunpack.c.l.b16 %v5463
    %v5763 = vunpack.c.h.b16 %v5463
    %v5764 = vunpack.c.l.b16 %v5464
    %v5765 = vunpack.c.h.b16 %v5464
    %v5766 = vunpack.c.l.b16 %v5465
    %v5767 = vunpack.c.h.b16 %v5465
    %v5768 = vunpack.c.l.b16 %v5466
    %v5769 = vunpack.c.h.b16 %v5466
    %v5770 = vunpack.c.l.b16 %v5467
    %v5771 = vunpack.c.h.b16 %v5467
    %v5772 = vunpack.c.l.b16 %v5468
    %v5773 = vunpack.c.h.b16 %v5468
    %v5774 = vunpack.c.l.b16 %v5469
    %v5775 = vunpack.c.h.b16 %v5469
    %v5776 = vunpack.c.l.b16 %v5470
    %v5777 = vunpack.c.h.b16 %v5470
    %v5778 = vunpack.c.l.b16 %v5471
    %v5779 = vunpack.c.h.b16 %v5471
    %v5780 = vunpack.c.l.b16 %v5472
    %v5781 = vunpack.c.h.b16 %v5472
    %v5782 = vunpack.c.l.b16 %v5473
    %v5783 = vunpack.c.h.b16 %v5473
    %v5784 = vunpack.c.l.b16 %v5474
    %v5785 = vunpack.c.h.b16 %v5474
    %v5786 = vunpack.c.l.b16 %v5475
    %v5787 = vunpack.c.h.b16 %v5475
    %v5788 = vunpack.c.l.b16 %v5476
    %v5789 = vunpack.c.h.b16 %v5476
    %v5790 = vunpack.c.l.b16 %v5477
    %v5791 = vunpack.c.h.b16 %v5477
    %v5792 = vunpack.c.l.b16 %v5478
    %v5793 = vunpack.c.h.b16 %v5478
    %v5794 = vunpack.c.l.b16 %v5479
    %v5795 = vunpack.c.h.b16 %v5479
    %v5796 = vunpack.c.l.b16 %v5480
    %v5797 = vunpack.c.h.b16 %v5480
    %v5798 = vunpack.c.l.b16 %v5481
    %v5799 = vunpack.c.h.b16 %v5481
    %v5800 = vunpack.c.l.b16 %v5482
    %v5801 = vunpack.c.h.b16 %v5482
    %v5802 = vunpack.c.l.b16 %v5483
    %v5803 = vunpack.c.h.b16 %v5483
    %v5804 = vunpack.c.l.b16 %v5484
    %v5805 = vunpack.c.h.b16 %v5484
    %v5806 = vunpack.c.l.b16 %v5485
    %v5807 = vunpack.c.h.b16 %v5485
    %v5808 = vunpack.c.l.b16 %v5486
    %v5809 = vunpack.c.h.b16 %v5486
    %v5810 = vunpack.c.l.b16 %v5487
    %v5811 = vunpack.c.h.b16 %v5487
    %v5812 = vunpack.c.l.b16 %v5488
    %v5813 = vunpack.c.h.b16 %v5488
    %v5814 = vunpack.c.l.b16 %v5489
    %v5815 = vunpack.c.h.b16 %v5489
    %v5816 = vunpack.c.l.b16 %v5490
    %v5817 = vunpack.c.h.b16 %v5490
    %v5818 = vunpack.c.l.b16 %v5491
    %v5819 = vunpack.c.h.b16 %v5491
    %v5820 = vunpack.c.l.b16 %v5492
    %v5821 = vunpack.c.h.b16 %v5492
    %v5822 = vunpack.c.l.b16 %v5493
    %v5823 = vunpack.c.h.b16 %v5493
    %v5824 = vunpack.c.l.b16 %v5494
    %v5825 = vunpack.c.h.b16 %v5494
    %v5826 = vunpack.c.l.b16 %v5495
    %v5827 = vunpack.c.h.b16 %v5495
    %v5828 = vunpack.c.l.b16 %v5496
    %v5829 = vunpack.c.h.b16 %v5496
    %v5830 = vunpack.c.l.b16 %v5497
    %v5831 = vunpack.c.h.b16 %v5497
    %v5832 = vunpack.c.l.b16 %v5498
    %v5833 = vunpack.c.h.b16 %v5498
    %v5834 = vunpack.c.l.b16 %v5499
    %v5835 = vunpack.c.h.b16 %v5499
    %v5836 = vunpack.c.l.b16 %v5500
    %v5837 = vunpack.c.h.b16 %v5500
    %v5838 = vunpack.c.l.b16 %v5501
    %v5839 = vunpack.c.h.b16 %v5501
    %v5840 = vunpack.c.l.b16 %v5502
    %v5841 = vunpack.c.h.b16 %v5502
    %v5842 = vunpack.c.l.b16 %v5503
    %v5843 = vunpack.c.h.b16 %v5503
    %v5844 = vunpack.c.l.b16 %v5504
    %v5845 = vunpack.c.h.b16 %v5504
    %v5846 = vunpack.c.l.b16 %v5505
    %v5847 = vunpack.c.h.b16 %v5505
    %v5848 = vunpack.c.l.b16 %v5506
    %v5849 = vunpack.c.h.b16 %v5506
    %v5850 = vunpack.c.l.b16 %v5507
    %v5851 = vunpack.c.h.b16 %v5507
    %v5852 = vunpack.c.l.b16 %v5508
    %v5853 = vunpack.c.h.b16 %v5508
    %v5854 = vunpack.c.l.b16 %v5509
    %v5855 = vunpack.c.h.b16 %v5509
    %v5856 = vunpack.c.l.b16 %v5510
    %v5857 = vunpack.c.h.b16 %v5510
    %v5858 = vunpack.c.l.b16 %v5511
    %v5859 = vunpack.c.h.b16 %v5511
    %v5860 = vunpack.c.l.b16 %v5512
    %v5861 = vunpack.c.h.b16 %v5512
    %v5862 = vunpack.c.l.b16 %v5513
    %v5863 = vunpack.c.h.b16 %v5513
    %v5864 = vunpack.c.l.b16 %v5514
    %v5865 = vunpack.c.h.b16 %v5514
    %v5866 = vunpack.c.l.b16 %v5515
    %v5867 = vunpack.c.h.b16 %v5515
    %v5868 = vunpack.c.l.b16 %v5516
    %v5869 = vunpack.c.h.b16 %v5516
    %v5870 = vunpack.c.l.b16 %v5517
    %v5871 = vunpack.c.h.b16 %v5517
    %v5872 = vunpack.c.l.b16 %v5518
    %v5873 = vunpack.c.h.b16 %v5518
    %v5874 = vunpack.c.l.b16 %v5519
    %v5875 = vunpack.c.h.b16 %v5519
    %v5876 = vunpack.c.l.b16 %v5520
    %v5877 = vunpack.c.h.b16 %v5520
    %v5878 = vunpack.c.l.b16 %v5521
    %v5879 = vunpack.c.h.b16 %v5521
    %v5880 = vunpack.c.l.b16 %v5522
    %v5881 = vunpack.c.h.b16 %v5522
    %v5882 = vunpack.c.l.b16 %v5523
    %v5883 = vunpack.c.h.b16 %v5523
    %v5884 = vunpack.c.l.b16 %v5524
    %v5885 = vunpack.c.h.b16 %v5524
    %v5886 = vunpack.c.l.b16 %v5525
    %v5887 = vunpack.c.h.b16 %v5525
    %v5888 = vunpack.c.l.b16 %v5526
    %v5889 = vunpack.c.h.b16 %v5526
    %v5890 = vunpack.c.l.b16 %v5527
    %v5891 = vunpack.c.h.b16 %v5527
    %v5892 = vunpack.c.l.b16 %v5528
    %v5893 = vunpack.c.h.b16 %v5528
    %v5894 = vunpack.c.l.b16 %v5529
    %v5895 = vunpack.c.h.b16 %v5529
    %v5896 = vunpack.c.l.b16 %v5530
    %v5897 = vunpack.c.h.b16 %v5530
    %v5898 = vunpack.c.l.b16 %v5531
    %v5899 = vunpack.c.h.b16 %v5531
    %v5900 = vunpack.c.l.b16 %v5532
    %v5901 = vunpack.c.h.b16 %v5532
    %v5902 = vunpack.c.l.b16 %v5533
    %v5903 = vunpack.c.h.b16 %v5533
    %v5904 = vunpack.c.l.b16 %v5534
    %v5905 = vunpack.c.h.b16 %v5534
    %v5906 = vunpack.c.l.b16 %v5535
    %v5907 = vunpack.c.h.b16 %v5535
    %v5908 = vunpack.c.l.b16 %v5536
    %v5909 = vunpack.c.h.b16 %v5536
    %v5910 = vunpack.c.l.b16 %v5537
    %v5911 = vunpack.c.h.b16 %v5537
    %v5912 = vunpack.c.l.b16 %v5538
    %v5913 = vunpack.c.h.b16 %v5538
    %v5914 = vunpack.c.l.b16 %v5539
    %v5915 = vunpack.c.h.b16 %v5539
    %v5916 = vunpack.c.l.b16 %v5540
    %v5917 = vunpack.c.h.b16 %v5540
    %v5918 = vunpack.c.l.b16 %v5541
    %v5919 = vunpack.c.h.b16 %v5541
    %v5920 = vunpack.c.l.b16 %v5542
    %v5921 = vunpack.c.h.b16 %v5542
    %v5922 = vunpack.c.l.b16 %v5543
    %v5923 = vunpack.c.h.b16 %v5543
    %v5924 = vunpack.c.l.b16 %v5544
    %v5925 = vunpack.c.h.b16 %v5544
    %v5926 = vunpack.c.l.b16 %v5545
    %v5927 = vunpack.c.h.b16 %v5545
    %v5928 = vunpack.c.l.b16 %v5546
    %v5929 = vunpack.c.h.b16 %v5546
    %v5930 = vunpack.c.l.b16 %v5547
    %v5931 = vunpack.c.h.b16 %v5547
    %v5932 = vunpack.c.l.b16 %v5548
    %v5933 = vunpack.c.h.b16 %v5548
    %v5934 = vunpack.c.l.b16 %v5549
    %v5935 = vunpack.c.h.b16 %v5549
    %v5936 = vunpack.c.l.b16 %v5550
    %v5937 = vunpack.c.h.b16 %v5550
    %v5938 = vunpack.c.l.b16 %v5551
    %v5939 = vunpack.c.h.b16 %v5551
    %v5940 = vunpack.c.l.b16 %v5552
    %v5941 = vunpack.c.h.b16 %v5552
    %v5942 = vunpack.c.l.b16 %v5553
    %v5943 = vunpack.c.h.b16 %v5553
    %v5944 = vpack.c.b16 %v5690, %v5688
    %v5945 = vpack.c.b16 %v5691, %v5689
    %v5946 = vpack.c.b16 %v5694, %v5692
    %v5947 = vpack.c.b16 %v5695, %v5693
    %v5948 = vpack.c.b16 %v5698, %v5696
    %v5949 = vpack.c.b16 %v5699, %v5697
    %v5950 = vpack.c.b16 %v5702, %v5700
    %v5951 = vpack.c.b16 %v5703, %v5701
    %v5952 = vpack.c.b16 %v5706, %v5704
    %v5953 = vpack.c.b16 %v5707, %v5705
    %v5954 = vpack.c.b16 %v5710, %v5708
    %v5955 = vpack.c.b16 %v5711, %v5709
    %v5956 = vpack.c.b16 %v5714, %v5712
    %v5957 = vpack.c.b16 %v5715, %v5713
    %v5958 = vpack.c.b16 %v5718, %v5716
    %v5959 = vpack.c.b16 %v5719, %v5717
    %v5960 = vpack.c.b16 %v5722, %v5720
    %v5961 = vpack.c.b16 %v5723, %v5721
    %v5962 = vpack.c.b16 %v5726, %v5724
    %v5963 = vpack.c.b16 %v5727, %v5725
    %v5964 = vpack.c.b16 %v5730, %v5728
    %v5965 = vpack.c.b16 %v5731, %v5729
    %v5966 = vpack.c.b16 %v5734, %v5732
    %v5967 = vpack.c.b16 %v5735, %v5733
    %v5968 = vpack.c.b16 %v5738, %v5736
    %v5969 = vpack.c.b16 %v5739, %v5737
    %v5970 = vpack.c.b16 %v5742, %v5740
    %v5971 = vpack.c.b16 %v5743, %v5741
    %v5972 = vpack.c.b16 %v5746, %v5744
    %v5973 = vpack.c.b16 %v5747, %v5745
    %v5974 = vpack.c.b16 %v5750, %v5748
    %v5975 = vpack.c.b16 %v5751, %v5749
    %v5976 = vpack.c.b16 %v5754, %v5752
    %v5977 = vpack.c.b16 %v5755, %v5753
    %v5978 = vpack.c.b16 %v5758, %v5756
    %v5979 = vpack.c.b16 %v5759, %v5757
    %v5980 = vpack.c.b16 %v5762, %v5760
    %v5981 = vpack.c.b16 %v5763, %v5761
    %v5982 = vpack.c.b16 %v5766, %v5764
    %v5983 = vpack.c.b16 %v5767, %v5765
    %v5984 = vpack.c.b16 %v5770, %v5768
    %v5985 = vpack.c.b16 %v5771, %v5769
    %v5986 = vpack.c.b16 %v5774, %v5772
    %v5987 = vpack.c.b16 %v5775, %v5773
    %v5988 = vpack.c.b16 %v5778, %v5776
    %v5989 = vpack.c.b16 %v5779, %v5777
    %v5990 = vpack.c.b16 %v5782, %v5780
    %v5991 = vpack.c.b16 %v5783, %v5781
    %v5992 = vpack.c.b16 %v5786, %v5784
    %v5993 = vpack.c.b16 %v5787, %v5785
    %v5994 = vpack.c.b16 %v5790, %v5788
    %v5995 = vpack.c.b16 %v5791, %v5789
    %v5996 = vpack.c.b16 %v5794, %v5792
    %v5997 = vpack.c.b16 %v5795, %v5793
    %v5998 = vpack.c.b16 %v5798, %v5796
    %v5999 = vpack.c.b16 %v5799, %v5797
    %v6000 = vpack.c.b16 %v5802, %v5800
    %v6001 = vpack.c.b16 %v5803, %v5801
    %v6002 = vpack.c.b16 %v5806, %v5804
    %v6003 = vpack.c.b16 %v5807, %v5805
    %v6004 = vpack.c.b16 %v5810, %v5808
    %v6005 = vpack.c.b16 %v5811, %v5809
    %v6006 = vpack.c.b16 %v5814, %v5812
    %v6007 = vpack.c.b16 %v5815, %v5813
    %v6008 = vpack.c.b16 %v5818, %v5816
    %v6009 = vpack.c.b16 %v5819, %v5817
    %v6010 = vpack.c.b16 %v5822, %v5820
    %v6011 = vpack.c.b16 %v5823, %v5821
    %v6012 = vpack.c.b16 %v5826, %v5824
    %v6013 = vpack.c.b16 %v5827, %v5825
    %v6014 = vpack.c.b16 %v5830, %v5828
    %v6015 = vpack.c.b16 %v5831, %v5829
    %v6016 = vpack.c.b16 %v5834, %v5832
    %v6017 = vpack.c.b16 %v5835, %v5833
    %v6018 = vpack.c.b16 %v5838, %v5836
    %v6019 = vpack.c.b16 %v5839, %v5837
    %v6020 = vpack.c.b16 %v5842, %v5840
    %v6021 = vpack.c.b16 %v5843, %v5841
    %v6022 = vpack.c.b16 %v5846, %v5844
    %v6023 = vpack.c.b16 %v5847, %v5845
    %v6024 = vpack.c.b16 %v5850, %v5848
    %v6025 = vpack.c.b16 %v5851, %v5849
    %v6026 = vpack.c.b16 %v5854, %v5852
    %v6027 = vpack.c.b16 %v5855, %v5853
    %v6028 = vpack.c.b16 %v5858, %v5856
    %v6029 = vpack.c.b16 %v5859, %v5857
    %v6030 = vpack.c.b16 %v5862, %v5860
    %v6031 = vpack.c.b16 %v5863, %v5861
    %v6032 = vpack.c.b16 %v5866, %v5864
    %v6033 = vpack.c.b16 %v5867, %v5865
    %v6034 = vpack.c.b16 %v5870, %v5868
    %v6035 = vpack.c.b16 %v5871, %v5869
    %v6036 = vpack.c.b16 %v5874, %v5872
    %v6037 = vpack.c.b16 %v5875, %v5873
    %v6038 = vpack.c.b16 %v5878, %v5876
    %v6039 = vpack.c.b16 %v5879, %v5877
    %v6040 = vpack.c.b16 %v5882, %v5880
    %v6041 = vpack.c.b16 %v5883, %v5881
    %v6042 = vpack.c.b16 %v5886, %v5884
    %v6043 = vpack.c.b16 %v5887, %v5885
    %v6044 = vpack.c.b16 %v5890, %v5888
    %v6045 = vpack.c.b16 %v5891, %v5889
    %v6046 = vpack.c.b16 %v5894, %v5892
    %v6047 = vpack.c.b16 %v5895, %v5893
    %v6048 = vpack.c.b16 %v5898, %v5896
    %v6049 = vpack.c.b16 %v5899, %v5897
    %v6050 = vpack.c.b16 %v5902, %v5900
    %v6051 = vpack.c.b16 %v5903, %v5901
    %v6052 = vpack.c.b16 %v5906, %v5904
    %v6053 = vpack.c.b16 %v5907, %v5905
    %v6054 = vpack.c.b16 %v5910, %v5908
    %v6055 = vpack.c.b16 %v5911, %v5909
    %v6056 = vpack.c.b16 %v5914, %v5912
    %v6057 = vpack.c.b16 %v5915, %v5913
    %v6058 = vpack.c.b16 %v5918, %v5916
    %v6059 = vpack.c.b16 %v5919, %v5917
    %v6060 = vpack.c.b16 %v5922, %v5920
    %v6061 = vpack.c.b16 %v5923, %v5921
    %v6062 = vpack.c.b16 %v5926, %v5924
    %v6063 = vpack.c.b16 %v5927, %v5925
    %v6064 = vpack.c.b16 %v5930, %v5928
    %v6065 = vpack.c.b16 %v5931, %v5929
    %v6066 = vpack.c.b16 %v5934, %v5932
    %v6067 = vpack.c.b16 %v5935, %v5933
    %v6068 = vpack.c.b16 %v5938, %v5936
    %v6069 = vpack.c.b16 %v5939, %v5937
    %v6070 = vpack.c.b16 %v5942, %v5940
    %v6071 = vpack.c.b16 %v5943, %v5941
    %6200 = vmatpush.bf16.msra.mxu0 %v5958
    %6201 = vmatpush.bf16.msra.mxu0 %v5956
    %6202 = vmatpush.bf16.msra.mxu0 %v5954
    %6203 = vmatpush.bf16.msra.mxu0 %v5952
    %6204 = vmatpush.bf16.msra.mxu0 %v5950
    %6205 = vmatpush.bf16.msra.mxu0 %v5948
    %6206 = vmatpush.bf16.msra.mxu0 %v5946
    %6207 = vmatpush.bf16.msra.mxu0 %v5944
    %6208 = vmatmul.bf16.gmra.mxu0 %v5418
    %v6209 = vpop.f32.mrf.mxu0
    %v6210 = vadd.f32 %v5556, %v6209
    %v6211 = vpop.f32.mrf.mxu0
    %v6212 = vadd.f32 %v5556, %v6211
    %6213 = vdwg.mxu0
    %6214 = vmatpush.bf16.msra.mxu0 %v5974
    %6215 = vmatpush.bf16.msra.mxu0 %v5972
    %6216 = vmatpush.bf16.msra.mxu0 %v5970
    %6217 = vmatpush.bf16.msra.mxu0 %v5968
    %6218 = vmatpush.bf16.msra.mxu0 %v5966
    %6219 = vmatpush.bf16.msra.mxu0 %v5964
    %6220 = vmatpush.bf16.msra.mxu0 %v5962
    %6221 = vmatpush.bf16.msra.mxu0 %v5960
    %6222 = vmatmul.bf16.gmra.mxu0 %v5419
    %v6223 = vpop.f32.mrf.mxu0
    %v6224 = vadd.f32 %v6210, %v6223
    %v6225 = vpop.f32.mrf.mxu0
    %v6226 = vadd.f32 %v6212, %v6225
    %6227 = vdwg.mxu0
    %6228 = vmatpush.bf16.msra.mxu0 %v5990
    %6229 = vmatpush.bf16.msra.mxu0 %v5988
    %6230 = vmatpush.bf16.msra.mxu0 %v5986
    %6231 = vmatpush.bf16.msra.mxu0 %v5984
    %6232 = vmatpush.bf16.msra.mxu0 %v5982
    %6233 = vmatpush.bf16.msra.mxu0 %v5980
    %6234 = vmatpush.bf16.msra.mxu0 %v5978
    %6235 = vmatpush.bf16.msra.mxu0 %v5976
    %6236 = vmatmul.bf16.gmra.mxu0 %v5420
    %v6237 = vpop.f32.mrf.mxu0
    %v6238 = vadd.f32 %v6224, %v6237
    %v6239 = vpop.f32.mrf.mxu0
    %v6240 = vadd.f32 %v6226, %v6239
    %6241 = vdwg.mxu0
    %6242 = vmatpush.bf16.msra.mxu0 %v6006
    %6243 = vmatpush.bf16.msra.mxu0 %v6004
    %6244 = vmatpush.bf16.msra.mxu0 %v6002
    %6245 = vmatpush.bf16.msra.mxu0 %v6000
    %6246 = vmatpush.bf16.msra.mxu0 %v5998
    %6247 = vmatpush.bf16.msra.mxu0 %v5996
    %6248 = vmatpush.bf16.msra.mxu0 %v5994
    %6249 = vmatpush.bf16.msra.mxu0 %v5992
    %6250 = vmatmul.bf16.gmra.mxu0 %v5421
    %v6251 = vpop.f32.mrf.mxu0
    %v6252 = vadd.f32 %v6238, %v6251
    %v6253 = vpop.f32.mrf.mxu0
    %v6254 = vadd.f32 %v6240, %v6253
    %6255 = vdwg.mxu0
    %6256 = vmatpush.bf16.msra.mxu0 %v6022
    %6257 = vmatpush.bf16.msra.mxu0 %v6020
    %6258 = vmatpush.bf16.msra.mxu0 %v6018
    %6259 = vmatpush.bf16.msra.mxu0 %v6016
    %6260 = vmatpush.bf16.msra.mxu0 %v6014
    %6261 = vmatpush.bf16.msra.mxu0 %v6012
    %6262 = vmatpush.bf16.msra.mxu0 %v6010
    %6263 = vmatpush.bf16.msra.mxu0 %v6008
    %6264 = vmatmul.bf16.gmra.mxu0 %v5422
    %v6265 = vpop.f32.mrf.mxu0
    %v6266 = vadd.f32 %v6252, %v6265
    %v6267 = vpop.f32.mrf.mxu0
    %v6268 = vadd.f32 %v6254, %v6267
    %6269 = vdwg.mxu0
    %6270 = vmatpush.bf16.msra.mxu0 %v6038
    %6271 = vmatpush.bf16.msra.mxu0 %v6036
    %6272 = vmatpush.bf16.msra.mxu0 %v6034
    %6273 = vmatpush.bf16.msra.mxu0 %v6032
    %6274 = vmatpush.bf16.msra.mxu0 %v6030
    %6275 = vmatpush.bf16.msra.mxu0 %v6028
    %6276 = vmatpush.bf16.msra.mxu0 %v6026
    %6277 = vmatpush.bf16.msra.mxu0 %v6024
    %6278 = vmatmul.bf16.gmra.mxu0 %v5423
    %v6279 = vpop.f32.mrf.mxu0
    %v6280 = vadd.f32 %v6266, %v6279
    %v6281 = vpop.f32.mrf.mxu0
    %v6282 = vadd.f32 %v6268, %v6281
    %6283 = vdwg.mxu0
    %6284 = vmatpush.bf16.msra.mxu0 %v6054
    %6285 = vmatpush.bf16.msra.mxu0 %v6052
    %6286 = vmatpush.bf16.msra.mxu0 %v6050
    %6287 = vmatpush.bf16.msra.mxu0 %v6048
    %6288 = vmatpush.bf16.msra.mxu0 %v6046
    %6289 = vmatpush.bf16.msra.mxu0 %v6044
    %6290 = vmatpush.bf16.msra.mxu0 %v6042
    %6291 = vmatpush.bf16.msra.mxu0 %v6040
    %6292 = vmatmul.bf16.gmra.mxu0 %v5424
    %v6293 = vpop.f32.mrf.mxu0
    %v6294 = vadd.f32 %v6280, %v6293
    %v6295 = vpop.f32.mrf.mxu0
    %v6296 = vadd.f32 %v6282, %v6295
    %6297 = vdwg.mxu0
    %6298 = vmatpush.bf16.msra.mxu0 %v6070
    %6299 = vmatpush.bf16.msra.mxu0 %v6068
    %6300 = vmatpush.bf16.msra.mxu0 %v6066
    %6301 = vmatpush.bf16.msra.mxu0 %v6064
    %6302 = vmatpush.bf16.msra.mxu0 %v6062
    %6303 = vmatpush.bf16.msra.mxu0 %v6060
    %6304 = vmatpush.bf16.msra.mxu0 %v6058
    %6305 = vmatpush.bf16.msra.mxu0 %v6056
    %6306 = vmatmul.bf16.gmra.mxu0 %v5425
    %v6307 = vpop.f32.mrf.mxu0
    %v6308 = vadd.f32 %v6294, %v6307
    %v6309 = vpop.f32.mrf.mxu0
    %v6310 = vadd.f32 %v6296, %v6309
    %6311 = vdwg.mxu0
    %6312 = vmatpush.bf16.msra.mxu0 %v5959
    %6313 = vmatpush.bf16.msra.mxu0 %v5957
    %6314 = vmatpush.bf16.msra.mxu0 %v5955
    %6315 = vmatpush.bf16.msra.mxu0 %v5953
    %6316 = vmatpush.bf16.msra.mxu0 %v5951
    %6317 = vmatpush.bf16.msra.mxu0 %v5949
    %6318 = vmatpush.bf16.msra.mxu0 %v5947
    %6319 = vmatpush.bf16.msra.mxu0 %v5945
    %6320 = vmatmul.bf16.gmra.mxu0 %v5418
    %v6321 = vpop.f32.mrf.mxu0
    %v6322 = vadd.f32 %v5557, %v6321
    %v6323 = vpop.f32.mrf.mxu0
    %v6324 = vadd.f32 %v5557, %v6323
    %6325 = vdwg.mxu0
    %6326 = vmatpush.bf16.msra.mxu0 %v5975
    %6327 = vmatpush.bf16.msra.mxu0 %v5973
    %6328 = vmatpush.bf16.msra.mxu0 %v5971
    %6329 = vmatpush.bf16.msra.mxu0 %v5969
    %6330 = vmatpush.bf16.msra.mxu0 %v5967
    %6331 = vmatpush.bf16.msra.mxu0 %v5965
    %6332 = vmatpush.bf16.msra.mxu0 %v5963
    %6333 = vmatpush.bf16.msra.mxu0 %v5961
    %6334 = vmatmul.bf16.gmra.mxu0 %v5419
    %v6335 = vpop.f32.mrf.mxu0
    %v6336 = vadd.f32 %v6322, %v6335
    %v6337 = vpop.f32.mrf.mxu0
    %v6338 = vadd.f32 %v6324, %v6337
    %6339 = vdwg.mxu0
    %6340 = vmatpush.bf16.msra.mxu0 %v5991
    %6341 = vmatpush.bf16.msra.mxu0 %v5989
    %6342 = vmatpush.bf16.msra.mxu0 %v5987
    %6343 = vmatpush.bf16.msra.mxu0 %v5985
    %6344 = vmatpush.bf16.msra.mxu0 %v5983
    %6345 = vmatpush.bf16.msra.mxu0 %v5981
    %6346 = vmatpush.bf16.msra.mxu0 %v5979
    %6347 = vmatpush.bf16.msra.mxu0 %v5977
    %6348 = vmatmul.bf16.gmra.mxu0 %v5420
    %v6349 = vpop.f32.mrf.mxu0
    %v6350 = vadd.f32 %v6336, %v6349
    %v6351 = vpop.f32.mrf.mxu0
    %v6352 = vadd.f32 %v6338, %v6351
    %6353 = vdwg.mxu0
    %6354 = vmatpush.bf16.msra.mxu0 %v6007
    %6355 = vmatpush.bf16.msra.mxu0 %v6005
    %6356 = vmatpush.bf16.msra.mxu0 %v6003
    %6357 = vmatpush.bf16.msra.mxu0 %v6001
    %6358 = vmatpush.bf16.msra.mxu0 %v5999
    %6359 = vmatpush.bf16.msra.mxu0 %v5997
    %6360 = vmatpush.bf16.msra.mxu0 %v5995
    %6361 = vmatpush.bf16.msra.mxu0 %v5993
    %6362 = vmatmul.bf16.gmra.mxu0 %v5421
    %v6363 = vpop.f32.mrf.mxu0
    %v6364 = vadd.f32 %v6350, %v6363
    %v6365 = vpop.f32.mrf.mxu0
    %v6366 = vadd.f32 %v6352, %v6365
    %6367 = vdwg.mxu0
    %6368 = vmatpush.bf16.msra.mxu0 %v6023
    %6369 = vmatpush.bf16.msra.mxu0 %v6021
    %6370 = vmatpush.bf16.msra.mxu0 %v6019
    %6371 = vmatpush.bf16.msra.mxu0 %v6017
    %6372 = vmatpush.bf16.msra.mxu0 %v6015
    %6373 = vmatpush.bf16.msra.mxu0 %v6013
    %6374 = vmatpush.bf16.msra.mxu0 %v6011
    %6375 = vmatpush.bf16.msra.mxu0 %v6009
    %6376 = vmatmul.bf16.gmra.mxu0 %v5422
    %v6377 = vpop.f32.mrf.mxu0
    %v6378 = vadd.f32 %v6364, %v6377
    %v6379 = vpop.f32.mrf.mxu0
    %v6380 = vadd.f32 %v6366, %v6379
    %6381 = vdwg.mxu0
    %6382 = vmatpush.bf16.msra.mxu0 %v6039
    %6383 = vmatpush.bf16.msra.mxu0 %v6037
    %6384 = vmatpush.bf16.msra.mxu0 %v6035
    %6385 = vmatpush.bf16.msra.mxu0 %v6033
    %6386 = vmatpush.bf16.msra.mxu0 %v6031
    %6387 = vmatpush.bf16.msra.mxu0 %v6029
    %6388 = vmatpush.bf16.msra.mxu0 %v6027
    %6389 = vmatpush.bf16.msra.mxu0 %v6025
    %6390 = vmatmul.bf16.gmra.mxu0 %v5423
    %v6391 = vpop.f32.mrf.mxu0
    %v6392 = vadd.f32 %v6378, %v6391
    %v6393 = vpop.f32.mrf.mxu0
    %v6394 = vadd.f32 %v6380, %v6393
    %6395 = vdwg.mxu0
    %6396 = vmatpush.bf16.msra.mxu0 %v6055
    %6397 = vmatpush.bf16.msra.mxu0 %v6053
    %6398 = vmatpush.bf16.msra.mxu0 %v6051
    %6399 = vmatpush.bf16.msra.mxu0 %v6049
    %6400 = vmatpush.bf16.msra.mxu0 %v6047
    %6401 = vmatpush.bf16.msra.mxu0 %v6045
    %6402 = vmatpush.bf16.msra.mxu0 %v6043
    %6403 = vmatpush.bf16.msra.mxu0 %v6041
    %6404 = vmatmul.bf16.gmra.mxu0 %v5424
    %v6405 = vpop.f32.mrf.mxu0
    %v6406 = vadd.f32 %v6392, %v6405
    %v6407 = vpop.f32.mrf.mxu0
    %v6408 = vadd.f32 %v6394, %v6407
    %6409 = vdwg.mxu0
    %6410 = vmatpush.bf16.msra.mxu0 %v6071
    %6411 = vmatpush.bf16.msra.mxu0 %v6069
    %6412 = vmatpush.bf16.msra.mxu0 %v6067
    %6413 = vmatpush.bf16.msra.mxu0 %v6065
    %6414 = vmatpush.bf16.msra.mxu0 %v6063
    %6415 = vmatpush.bf16.msra.mxu0 %v6061
    %6416 = vmatpush.bf16.msra.mxu0 %v6059
    %6417 = vmatpush.bf16.msra.mxu0 %v6057
    %6418 = vmatmul.bf16.gmra.mxu0 %v5425
    %v6419 = vpop.f32.mrf.mxu0
    %v6420 = vadd.f32 %v6406, %v6419
    %v6421 = vpop.f32.mrf.mxu0
    %v6422 = vadd.f32 %v6408, %v6421
    %6423 = vdwg.mxu0
    %6424 = vmax.xlane.f32.xlu0 %v6308
    %v6425 = vpop.xlane.xlu0 %6424
    %6426 = vmax.xlane.f32.xlu0 %v6310
    %v6427 = vpop.xlane.xlu0 %6426
    %v6428 = vsub.f32 %v6308, %v6425
    %v6429 = vsub.f32 %v6310, %v6427
    %v6430 = vmul.f32 %v6428, 1.442695
    %v6431 = vpow.pop %v6430
    %v6432 = vmul.f32 %v6429, 1.442695
    %v6433 = vpow.pop %v6432
    %6434 = vadd.xlane.f32.xlu0 %v6431
    %v6435 = vpop.xlane.xlu0 %6434
    %6436 = vadd.xlane.f32.xlu0 %v6433
    %v6437 = vpop.xlane.xlu0 %6436
    %v6438 = vrcp.pop %v6435
    %v6439 = vrcp.pop %v6437
    %v6440 = vmul.f32 %v6431, %v6438
    %v6441 = vmul.f32 %v6433, %v6439
    %6442 = vst [vmem:[%s7] sm:$0xff] %v6440
    %6443 = vst [vmem:[%s7 + $0x10] sm:$0xff] %v6441
    %6444 = vst [vmem:[%s7 + $0x8] sm:$0xff] %v6420
    %6445 = vst [vmem:[%s7 + $0x18] sm:$0xff] %v6422
    // Predicated region
    $region54: #{_roi_head_forward.1} parent=1 // pred_check
      _
    $region55: #{_roi_head_forward.1} parent=1 // pred_check_branch
      %6447 = sbr.rel (0) target = $region57
    $region56: #{_roi_head_forward.1} parent=1 // pred_region
      _
    $region57: #{_roi_head_forward.1} parent=1 // pred_fallthru
      _
    // Predicated region
    $region58: #{_roi_head_forward.1} parent=1 // pred_check
      _
    $region59: #{_roi_head_forward.1} parent=1 // pred_check_branch
      %6449 = sbr.rel (0) target = $region61
    $region60: #{_roi_head_forward.1} parent=1 // pred_region
      _
    $region61: #{_roi_head_forward.1} parent=1 // pred_fallthru
      _
    %6450 = vsyncpa [#allocation3], 1
    %6451 = vsyncpa [#allocation5], 1
    %6452 = vsyncpa [#allocation8], 1
    %6453 = vsyncpa [#allocation11], 1

</llo_original>
